<compile_context>
chip_gen: v6e
topology: v6e:2x2x1
jax: 0.10.0
libtpu: 0.0.40
codegen_flags: <defaults>
</compile_context>

<pallas_src>
import jax
import jax.numpy as jnp
from jax.experimental import pallas as pl
from jax.experimental.pallas import tpu as pltpu

# ------------------------- problem sizes (small demo) -------------------------
N = 2          # batch
C_IN = 256     # EdgeDecoder is hard-coded to in_channels=256 in the module
C_MID = C_IN // 2
H = 16
W = 16
EPS = 1e-5


# ------------------------------ Pallas kernel --------------------------------
def _edge_decoder_kernel(p_ref, w1_ref, bias_ref, w2_ref, b2_ref, o_ref):
    """Fused EdgeDecoder over one tile of M = N*H*W spatial positions.

    p_ref    : (9*C_IN, m_tile) bf16   flattened im2col patches (tap-major K)
    w1_ref   : (C_MID, 9*C_IN)  bf16   conv1 weights with BN scale folded in
    bias_ref : (C_MID, 1) f32          folded bias = beta + scale*(b1 - mean)
    w2_ref   : (C_MID, 1) f32          1x1 conv weight
    b2_ref   : (1,)       f32 (SMEM)   1x1 conv bias
    o_ref    : (1, m_tile) f32         edge map tile (lane-dense)
    """
    # Single flattened-K matmul: accumulation stays inside the MXU.
    acc = jnp.dot(w1_ref[...], p_ref[...], preferred_element_type=jnp.float32)
    # conv1 bias + eval-mode BN (scale already folded into w1) + ReLU.
    hmid = jnp.maximum(acc + bias_ref[...], 0.0)
    # 1x1 conv to a single channel: VPU multiply + cross-sublane reduction,
    # producing a lane-dense (1, m_tile) row directly.
    edge = jnp.sum(hmid * w2_ref[...], axis=0, keepdims=True) + b2_ref[0]
    o_ref[...] = edge.astype(o_ref.dtype)


def _choose_m_tile(m_total: int) -> int:
    """Largest lane-dense tile that divides M, fits VMEM, and gives >=4 steps."""
    if m_total % 128 != 0:
        # Demo-safe fallback (masked stores); production shapes are multiples
        # of 128 after flattening N*H*W.
        return m_total
    max_lanes = 2048  # 9*C_IN*2048*2 B ~= 9.4 MiB per patches buffer (v7x-safe)
    best_pipelined = 0
    best_any = 128
    t = 128
    while t <= min(max_lanes, m_total):
        if m_total % t == 0:
            best_any = t
            if m_total // t >= 4:   # >= 4 grid steps so the DMA pipeline fills
                best_pipelined = t
        t += 128
    return best_pipelined if best_pipelined else best_any


@jax.jit
def edge_decoder_pallas(x_nchw, params):
    """EdgeDecoder forward. x_nchw: (N, C_IN, H, W) float32 -> (N, 1, H, W)."""
    w1, b1, gamma, beta, rmean, rvar, w2, b2 = (
        params["w1"], params["b1"], params["gamma"], params["beta"],
        params["rmean"], params["rvar"], params["w2"], params["b2"])

    n, c_in, h, w = x_nchw.shape
    c_mid = w1.shape[0]
    m_total = n * h * w
    k_flat = 9 * c_in

    # --- wrapper glue: bf16-early, Cin-major-once im2col, single concat ---
    x_cm = jnp.transpose(x_nchw.astype(jnp.bfloat16), (1, 0, 2, 3))   # (Cin,N,H,W)
    x_pad = jnp.pad(x_cm, ((0, 0), (0, 0), (1, 1), (1, 1)))           # (Cin,N,H+2,W+2)
    taps = [x_pad[:, :, kh:kh + h, kw:kw + w].reshape(c_in, m_total)
            for kh in range(3) for kw in range(3)]
    patches = jnp.concatenate(taps, axis=0)                           # (9*Cin, M) bf16

    # --- fold eval-mode BN: scale into conv1 weights (f32 mul, one bf16 cast),
    #     remaining affine into a per-channel bias ---
    scale = gamma / jnp.sqrt(rvar + EPS)                               # (C_MID,)
    w1_scaled = w1.astype(jnp.float32) * scale[:, None, None, None]
    # OIHW -> (Cout, kh, kw, Cin) -> (Cout, 9*Cin); tap-major to match patches.
    w1_flat = jnp.transpose(w1_scaled, (0, 2, 3, 1)).reshape(c_mid, k_flat)
    w1_flat = w1_flat.astype(jnp.bfloat16)
    bias2d = (beta + scale * (b1 - rmean)).astype(jnp.float32).reshape(c_mid, 1)
    w2_col = w2[:, :, 0, 0].T.astype(jnp.float32)                      # (C_MID, 1)
    b2_s = b2.reshape(1).astype(jnp.float32)

    # --- tiling: lane-dense M tiles, >=4 pipelined grid steps when possible ---
    m_tile = _choose_m_tile(m_total)
    grid_m = m_total // m_tile

    # Explicit VMEM budget (double-buffered patches/out + weight buffers).
    patch_block = k_flat * m_tile * 2
    w1_block = c_mid * k_flat * 2
    out_block = m_tile * 4
    vmem_limit = min(
        max(2 * (patch_block + out_block) + 2 * w1_block + (8 << 20), 32 << 20),
        64 << 20)

    out = pl.pallas_call(
        _edge_decoder_kernel,
        out_shape=jax.ShapeDtypeStruct((1, m_total), jnp.float32),
        grid=(grid_m,),
        in_specs=[
            pl.BlockSpec((k_flat, m_tile), lambda g: (0, g)),
            pl.BlockSpec((c_mid, k_flat), lambda g: (0, 0)),
            pl.BlockSpec((c_mid, 1), lambda g: (0, 0)),
            pl.BlockSpec((c_mid, 1), lambda g: (0, 0)),
            pl.BlockSpec(memory_space=pltpu.MemorySpace.SMEM),
        ],
        out_specs=pl.BlockSpec((1, m_tile), lambda g: (0, g)),
        compiler_params=pltpu.CompilerParams(
            dimension_semantics=("parallel",),
            vmem_limit_bytes=vmem_limit),
    )(patches, w1_flat, bias2d, w2_col, b2_s)

    return out.reshape(n, h, w)[:, None]                               # (N, 1, H, W)


# --------------------------- MaskFormerHead wrapper ---------------------------
class MaskFormerHeadPallas:
    """Mirrors MaskFormerHead.forward / .layers.

    pixel_decoder and transformer_predictor are externally-built modules in the
    original code (detectron2 registries); they are injected callables here.
    """

    def __init__(self, *, num_classes, pixel_decoder, transformer_predictor,
                 transformer_in_feature, edge_params,
                 loss_weight=1.0, ignore_value=-1, edge_loss_weight=1.0):
        self.ignore_value = ignore_value
        self.common_stride = 4
        self.loss_weight = loss_weight
        self.edge_loss_weight = edge_loss_weight
        self.pixel_decoder = pixel_decoder
        self.predictor = transformer_predictor
        self.transformer_in_feature = transformer_in_feature
        self.num_classes = num_classes
        self.edge_params = edge_params

    def forward(self, features, mask=None):
        return self.layers(features, mask)

    def layers(self, features, mask=None):
        mask_features, transformer_encoder_features, multi_scale_features = \
            self.pixel_decoder(features)
        predictions = self.predictor(multi_scale_features, mask_features, mask)
        edge_map = edge_decoder_pallas(mask_features, self.edge_params)
        predictions["pred_edges"] = edge_map
        return predictions


# ------------------------------- reference -----------------------------------
def _reference_edge_decoder(x_nchw, params):
    """Pure-JAX reference (lax conv, f32) for correctness checking only."""
    w1, b1, gamma, beta, rmean, rvar, w2, b2 = (
        params["w1"], params["b1"], params["gamma"], params["beta"],
        params["rmean"], params["rvar"], params["w2"], params["b2"])
    dn = ("NCHW", "OIHW", "NCHW")
    y = jax.lax.conv_general_dilated(x_nchw, w1, (1, 1), "SAME",
                                     dimension_numbers=dn)
    y = y + b1[None, :, None, None]
    y = (gamma[None, :, None, None] * (y - rmean[None, :, None, None])
         / jnp.sqrt(rvar[None, :, None, None] + EPS)
         + beta[None, :, None, None])
    y = jnp.maximum(y, 0.0)
    y = jax.lax.conv_general_dilated(y, w2, (1, 1), "VALID",
                                     dimension_numbers=dn)
    return y + b2[None, :, None, None]


# ---------------------------------- main --------------------------------------
if __name__ == "__main__":
    key = jax.random.PRNGKey(0)
    ks = jax.random.split(key, 10)

    # Deterministic synthetic parameters (shapes from EdgeDecoder.__init__).
    edge_params = {
        "w1":    jax.random.normal(ks[0], (C_MID, C_IN, 3, 3), jnp.float32) * 0.02,
        "b1":    jax.random.normal(ks[1], (C_MID,), jnp.float32) * 0.02,
        "gamma": 1.0 + 0.1 * jax.random.normal(ks[2], (C_MID,), jnp.float32),
        "beta":  0.1 * jax.random.normal(ks[3], (C_MID,), jnp.float32),
        "rmean": 0.1 * jax.random.normal(ks[4], (C_MID,), jnp.float32),
        "rvar":  0.5 + jax.random.uniform(ks[5], (C_MID,), jnp.float32),
        "w2":    jax.random.normal(ks[6], (1, C_MID, 1, 1), jnp.float32) * 0.02,
        "b2":    jax.random.normal(ks[7], (1,), jnp.float32) * 0.02,
    }

    # Synthetic backbone features (NCHW, as in PyTorch).
    mask_feat = jax.random.normal(ks[8], (N, C_IN, H, W), jnp.float32)
    features = {"res2": mask_feat}

    # TODO(synk): PEM_Pixel_Decoder (FPN-style pixel decoder) is an externally
    # built module not defined in the snippet; stubbed as a pass-through.
    def pixel_decoder_stub(feats):
        mf = feats["res2"]
        return mf, mf, [mf]

    # TODO(synk): PEM transformer decoder (build_transformer_decoder) is an
    # externally built module not defined in the snippet; stubbed.
    def predictor_stub(multi_scale_features, mask_features, mask):
        return {}

    head = MaskFormerHeadPallas(
        num_classes=8,
        pixel_decoder=pixel_decoder_stub,
        transformer_predictor=predictor_stub,
        transformer_in_feature="multi_scale_pixel_decoder",
        edge_params=edge_params,
    )

    predictions = head.forward(features)
    pred_edges = jax.block_until_ready(predictions["pred_edges"])

    # Validate the Pallas kernel against the pure-JAX f32 reference.
    # (bf16 MXU operands with f32 accumulation -> loosened tolerance.)
    ref = jax.block_until_ready(_reference_edge_decoder(mask_feat, edge_params))
    assert pred_edges.shape == (N, 1, H, W), pred_edges.shape
    assert jnp.allclose(pred_edges, ref, rtol=2e-2, atol=2e-2), (
        float(jnp.max(jnp.abs(pred_edges - ref))))

    print("KERNEL_OK")
</pallas_src>

<mosaic_0001>
module attributes {stable_mosaic.version = 11 : i64} {
  func.func @_edge_decoder_kernel(%arg0: i32, %arg1: memref<2304x128xbf16, #tpu.memory_space<vmem>>, %arg2: memref<128x2304xbf16, #tpu.memory_space<vmem>>, %arg3: memref<128x1xf32, #tpu.memory_space<vmem>>, %arg4: memref<128x1xf32, #tpu.memory_space<vmem>>, %arg5: memref<1xf32, #tpu.memory_space<smem>>, %arg6: memref<1x128xf32, #tpu.memory_space<vmem>>) attributes {dimension_semantics = [#tpu.dimension_semantics<parallel>], iteration_bounds = array<i64: 4>, scalar_prefetch = 0 : i64, scratch_operands = 0 : i64, tpu.core_type = #tpu.core_type<tc>, window_params = [{transform_indices = @transform_0, window_bounds = array<i64: 2304, 128>}, {pipeline_mode = #tpu.pipeline_mode<synchronous>, transform_indices = @transform_1, window_bounds = array<i64: 128, 2304>}, {pipeline_mode = #tpu.pipeline_mode<synchronous>, transform_indices = @transform_2, window_bounds = array<i64: 128, 1>}, {pipeline_mode = #tpu.pipeline_mode<synchronous>, transform_indices = @transform_3, window_bounds = array<i64: 128, 1>}, {transform_indices = @transform_4, window_bounds = array<i64: 1>}, {transform_indices = @transform_5, window_bounds = array<i64: 1, 128>}]} {
    %c0 = arith.constant 0 : index
    %c0_0 = arith.constant 0 : index
    %0 = vector.load %arg2[%c0, %c0_0] : memref<128x2304xbf16, #tpu.memory_space<vmem>>, vector<128x2304xbf16>
    %c0_1 = arith.constant 0 : index
    %c0_2 = arith.constant 0 : index
    %1 = vector.load %arg1[%c0_1, %c0_2] : memref<2304x128xbf16, #tpu.memory_space<vmem>>, vector<2304x128xbf16>
    %cst = arith.constant dense<0.000000e+00> : vector<128x128xf32>
    %2 = tpu.matmul %0, %1, %cst {dimension_numbers = #tpu.dot_dimension_numbers<[1], [0], [0], [1], [0, 0, 1, 1], [], []>} : vector<128x2304xbf16>, vector<2304x128xbf16>, vector<128x128xf32> -> vector<128x128xf32>
    %c0_3 = arith.constant 0 : index
    %c0_4 = arith.constant 0 : index
    %3 = vector.load %arg3[%c0_3, %c0_4] : memref<128x1xf32, #tpu.memory_space<vmem>>, vector<128x1xf32>
    %4 = vector.broadcast %3 : vector<128x1xf32> to vector<128x128xf32>
    %5 = arith.addf %2, %4 : vector<128x128xf32>
    %cst_5 = arith.constant 0.000000e+00 : f32
    %6 = vector.broadcast %cst_5 : f32 to vector<128x128xf32>
    %7 = arith.maximumf %5, %6 : vector<128x128xf32>
    %c0_6 = arith.constant 0 : index
    %c0_7 = arith.constant 0 : index
    %8 = vector.load %arg4[%c0_6, %c0_7] : memref<128x1xf32, #tpu.memory_space<vmem>>, vector<128x1xf32>
    %9 = vector.broadcast %8 : vector<128x1xf32> to vector<128x128xf32>
    %10 = arith.mulf %7, %9 : vector<128x128xf32>
    %cst_8 = arith.constant dense<0.000000e+00> : vector<128xf32>
    %11 = vector.multi_reduction <add>, %10, %cst_8 [0] : vector<128x128xf32> to vector<128xf32>
    %12 = vector.shape_cast %11 : vector<128xf32> to vector<1x128xf32>
    %c0_9 = arith.constant 0 : index
    %13 = memref.load %arg5[%c0_9] : memref<1xf32, #tpu.memory_space<smem>>
    %14 = vector.broadcast %13 : f32 to vector<1x128xf32>
    %15 = arith.addf %12, %14 : vector<1x128xf32>
    %c0_10 = arith.constant 0 : index
    %c0_11 = arith.constant 0 : index
    %16 = vector.load %arg6[%c0_10, %c0_11] : memref<1x128xf32, #tpu.memory_space<vmem>>, vector<1x128xf32>
    tpu.vector_store %arg6[%c0_10, %c0_11], %15 {strides = array<i32>} : memref<1x128xf32, #tpu.memory_space<vmem>>, vector<1x128xf32>,
    return
  }
  func.func @transform_0(%arg0: i32) -> (i32, i32) {
    %c0_i32 = arith.constant 0 : i32
    %c0_i32_0 = arith.constant 0 : i32
    return %c0_i32, %arg0 : i32, i32
  }
  func.func @transform_1(%arg0: i32) -> (i32, i32) {
    %c0_i32 = arith.constant 0 : i32
    %c0_i32_0 = arith.constant 0 : i32
    %c0_i32_1 = arith.constant 0 : i32
    return %c0_i32, %c0_i32_0 : i32, i32
  }
  func.func @transform_2(%arg0: i32) -> (i32, i32) {
    %c0_i32 = arith.constant 0 : i32
    %c0_i32_0 = arith.constant 0 : i32
    %c0_i32_1 = arith.constant 0 : i32
    return %c0_i32, %c0_i32_0 : i32, i32
  }
  func.func @transform_3(%arg0: i32) -> (i32, i32) {
    %c0_i32 = arith.constant 0 : i32
    %c0_i32_0 = arith.constant 0 : i32
    %c0_i32_1 = arith.constant 0 : i32
    return %c0_i32, %c0_i32_0 : i32, i32
  }
  func.func @transform_4(%arg0: i32) -> i32 {
    %c0_i32 = arith.constant 0 : i32
    %c0_i32_0 = arith.constant 0 : i32
    return %c0_i32 : i32
  }
  func.func @transform_5(%arg0: i32) -> (i32, i32) {
    %c0_i32 = arith.constant 0 : i32
    %c0_i32_0 = arith.constant 0 : i32
    return %c0_i32, %arg0 : i32, i32
  }
}

</mosaic_0001>

<llo_original>
// kernel: edge_decoder_pallas.1
$region0: #{edge_decoder_pallas.1}
  #allocation0 [shape = 'u32[]', space=smem, size = 0x4, offset = 0x4, fixed_abs, tag = 'smem constant byte address 0x4 - core index']
  #allocation1 [shape = 'u32[144,128]{1,0:T(1,128)}', space=vmem, size = 0x12000, scoped, tag = 'internal scratch']
  #allocation2 [shape = 'f32[1]{0:T(128)S(6)}', space=smem, size = 0x200, scoped, tag = 'scoped memory for edge_decoder_pallas.1']
  %s0 = inlined_call_operand.vmem [shape: bf16[2304,512], index: 0, kind: input, shape index: {}]
  %s1 = inlined_call_operand.vmem [shape: bf16[128,2304], index: 1, kind: input, shape index: {}]
  %s2 = inlined_call_operand.vmem [shape: f32[128,1], index: 2, kind: input, shape index: {}]
  %s3 = inlined_call_operand.vmem [shape: f32[128,1], index: 3, kind: input, shape index: {}]
  %s4 = inlined_call_operand.<no memory space> [shape: f32[1], index: 4, kind: input, shape index: {}]
  %s5 = inlined_call_operand.vmem [shape: f32[1,512], index: 5, kind: output, shape index: {}]
  %s6 = sld [smem:[#allocation0]]
  $region94: #{edge_decoder_pallas.1} parent=0
    _
  %s8 = ssub.s32 1, %s6
  %s9 = scalar_select 0, %s8, %s6
  %10 = sst [smem:[#allocation2]] %s4
  $region1: #{edge_decoder_pallas.1} parent=0
    #allocation3 [shape = 'u8[1179648]{0}', space=vmem, size = 0x120000, scoped, tag = 'input window, operand 0']
    loop: start=0, step=1, limit=6
    $region2: #{edge_decoder_pallas.1} parent=1 // loop_pre_header
      _
    $region3: #{edge_decoder_pallas.1} parent=1 // loop_header
      %s12 = sphi 0, %s16
      %p13 = scmp.ge.s32.totalorder %s12, 6
      %s22 = sphi 0, %s24
      %s25 = sphi 0, %s22
      %s26 = sphi 0, %s25
      %s42 = sphi 0, %s26
      %s46 = sphi 0, %s46
      %s48 = sphi 0, %s46
      %s49 = sphi 0, %s48
      %s63 = sphi 0, %s49
      %s67 = sphi 0, %s67
      %s69 = sphi 0, %s67
      %s70 = sphi 0, %s69
      %s84 = sphi 0, %s70
      %s88 = sphi 0, %s88
      %s90 = sphi 0, %s88
      %s91 = sphi 0, %s90
      %s105 = sphi 0, %s91
      %s109 = sphi 0, %s109
      %s111 = sphi 0, %s109
      %s112 = sphi 0, %s111
      %s126 = sphi 0, %s112
      %s132 = sphi 0, %s134
      %s135 = sphi 0, %s132
      %s136 = sphi 0, %s135
      %s152 = sphi 0, %s136
    $region4: #{edge_decoder_pallas.1} parent=1 // loop_header_branch
      %15 = sbr.rel (%p13) target = $region8
    $region5: #{edge_decoder_pallas.1} parent=1 // loop_body
      %s17 = ssub.s32 %s12, 1
      %s18 = ssub.s32 %s12, 2
      %s19 = sadd.s32 %s12, 1
      %s20 = ssub.s32 %s12, %s19
      %p21 = scmp.eq.s32.totalorder %s20, 0
      %s23 = sadd.s32 %s22, 1
      %s24 = scalar_select %p21, %s22, %s23
      %p27 = pneg %p21
      %p28 = scmp.eq.s32.totalorder %s12, 3
      %p29 = por %p27, %p28
      %p30 = scmp.ne.s32.totalorder %s22, %s25
      %p31 = scmp.eq.s32.totalorder %s12, 0
      %p32 = por %p30, %p31
      %p33 = scmp.ne.s32.totalorder %s22, %s25
      %p34 = scmp.eq.s32.totalorder %s17, 3
      %p35 = por %p33, %p34
      %p36 = scmp.ne.s32.totalorder %s25, %s26
      %p37 = scmp.eq.s32.totalorder %s17, 0
      %p38 = por %p36, %p37
      %p39 = scmp.ne.s32.totalorder %s25, %s26
      %p40 = scmp.eq.s32.totalorder %s18, 3
      %p41 = por %p39, %p40
      %p43 = scmp.ne.s32.totalorder %s26, %s42
      %p44 = scmp.eq.s32.totalorder %s18, 0
      %p45 = por %p43, %p44
      %s47 = sadd.s32 %s46, 1
      %p50 = scmp.eq.s32.totalorder %s12, 3
      %p51 = scmp.ne.s32.totalorder %s46, %s48
      %p52 = scmp.eq.s32.totalorder %s12, 0
      %p53 = por %p51, %p52
      %p54 = scmp.ne.s32.totalorder %s46, %s48
      %p55 = scmp.eq.s32.totalorder %s17, 3
      %p56 = por %p54, %p55
      %p57 = scmp.ne.s32.totalorder %s48, %s49
      %p58 = scmp.eq.s32.totalorder %s17, 0
      %p59 = por %p57, %p58
      %p60 = scmp.ne.s32.totalorder %s48, %s49
      %p61 = scmp.eq.s32.totalorder %s18, 3
      %p62 = por %p60, %p61
      %p64 = scmp.ne.s32.totalorder %s49, %s63
      %p65 = scmp.eq.s32.totalorder %s18, 0
      %p66 = por %p64, %p65
      %s68 = sadd.s32 %s67, 1
      %p71 = scmp.eq.s32.totalorder %s12, 3
      %p72 = scmp.ne.s32.totalorder %s67, %s69
      %p73 = scmp.eq.s32.totalorder %s12, 0
      %p74 = por %p72, %p73
      %p75 = scmp.ne.s32.totalorder %s67, %s69
      %p76 = scmp.eq.s32.totalorder %s17, 3
      %p77 = por %p75, %p76
      %p78 = scmp.ne.s32.totalorder %s69, %s70
      %p79 = scmp.eq.s32.totalorder %s17, 0
      %p80 = por %p78, %p79
      %p81 = scmp.ne.s32.totalorder %s69, %s70
      %p82 = scmp.eq.s32.totalorder %s18, 3
      %p83 = por %p81, %p82
      %p85 = scmp.ne.s32.totalorder %s70, %s84
      %p86 = scmp.eq.s32.totalorder %s18, 0
      %p87 = por %p85, %p86
      %s89 = sadd.s32 %s88, 1
      %p92 = scmp.eq.s32.totalorder %s12, 3
      %p93 = scmp.ne.s32.totalorder %s88, %s90
      %p94 = scmp.eq.s32.totalorder %s12, 0
      %p95 = por %p93, %p94
      %p96 = scmp.ne.s32.totalorder %s88, %s90
      %p97 = scmp.eq.s32.totalorder %s17, 3
      %p98 = por %p96, %p97
      %p99 = scmp.ne.s32.totalorder %s90, %s91
      %p100 = scmp.eq.s32.totalorder %s17, 0
      %p101 = por %p99, %p100
      %p102 = scmp.ne.s32.totalorder %s90, %s91
      %p103 = scmp.eq.s32.totalorder %s18, 3
      %p104 = por %p102, %p103
      %p106 = scmp.ne.s32.totalorder %s91, %s105
      %p107 = scmp.eq.s32.totalorder %s18, 0
      %p108 = por %p106, %p107
      %s110 = sadd.s32 %s109, 1
      %p113 = scmp.eq.s32.totalorder %s12, 3
      %p114 = scmp.ne.s32.totalorder %s109, %s111
      %p115 = scmp.eq.s32.totalorder %s12, 0
      %p116 = por %p114, %p115
      %p117 = scmp.ne.s32.totalorder %s109, %s111
      %p118 = scmp.eq.s32.totalorder %s17, 3
      %p119 = por %p117, %p118
      %p120 = scmp.ne.s32.totalorder %s111, %s112
      %p121 = scmp.eq.s32.totalorder %s17, 0
      %p122 = por %p120, %p121
      %p123 = scmp.ne.s32.totalorder %s111, %s112
      %p124 = scmp.eq.s32.totalorder %s18, 3
      %p125 = por %p123, %p124
      %p127 = scmp.ne.s32.totalorder %s112, %s126
      %p128 = scmp.eq.s32.totalorder %s18, 0
      %p129 = por %p127, %p128
      %s130 = ssub.s32 %s12, %s19
      %p131 = scmp.eq.s32.totalorder %s130, 0
      %s133 = sadd.s32 %s132, 1
      %s134 = scalar_select %p131, %s132, %s133
      %p137 = pneg %p131
      %p138 = scmp.eq.s32.totalorder %s12, 3
      %p139 = por %p137, %p138
      %p140 = scmp.ne.s32.totalorder %s132, %s135
      %p141 = scmp.eq.s32.totalorder %s12, 0
      %p142 = por %p140, %p141
      %p143 = scmp.ne.s32.totalorder %s132, %s135
      %p144 = scmp.eq.s32.totalorder %s17, 3
      %p145 = por %p143, %p144
      %p146 = scmp.ne.s32.totalorder %s135, %s136
      %p147 = scmp.eq.s32.totalorder %s17, 0
      %p148 = por %p146, %p147
      %p149 = scmp.ne.s32.totalorder %s135, %s136
      %p150 = scmp.eq.s32.totalorder %s18, 3
      %p151 = por %p149, %p150
      %p153 = scmp.ne.s32.totalorder %s136, %s152
      %p154 = scmp.eq.s32.totalorder %s18, 0
      %p155 = por %p153, %p154
      %p156 = scmp.le.s32.totalorder 1, %s12
      %p157 = scmp.lt.s32.totalorder %s12, 5
      %p158 = pnand %p156, %p157
      %p159 = pneg %p158
      // Predicated region
      $region9: #{edge_decoder_pallas.1} parent=5 // pred_check
        _
      $region10: #{edge_decoder_pallas.1} parent=5 // pred_check_branch
        %161 = sbr.rel (%p158) target = $region12
      $region11: #{edge_decoder_pallas.1} parent=5 // pred_region
        %s162 = ssub.s32 %s12, 1
        // Predicated region
        $region13: #{edge_decoder_pallas.1} parent=11 // pred_check
          %p163 = pneg %p59
        $region14: #{edge_decoder_pallas.1} parent=11 // pred_check_branch
          %165 = sbr.rel (%p163) target = $region16
        $region15: #{edge_decoder_pallas.1} parent=11 // pred_region
          _
        $region16: #{edge_decoder_pallas.1} parent=11 // pred_fallthru
          _
        // Predicated region
        $region17: #{edge_decoder_pallas.1} parent=11 // pred_check
          %p166 = pneg %p80
        $region18: #{edge_decoder_pallas.1} parent=11 // pred_check_branch
          %168 = sbr.rel (%p166) target = $region20
        $region19: #{edge_decoder_pallas.1} parent=11 // pred_region
          _
        $region20: #{edge_decoder_pallas.1} parent=11 // pred_fallthru
          _
        // Predicated region
        $region21: #{edge_decoder_pallas.1} parent=11 // pred_check
          %p169 = pneg %p101
        $region22: #{edge_decoder_pallas.1} parent=11 // pred_check_branch
          %171 = sbr.rel (%p169) target = $region24
        $region23: #{edge_decoder_pallas.1} parent=11 // pred_region
          _
        $region24: #{edge_decoder_pallas.1} parent=11 // pred_fallthru
          _
        // Predicated region
        $region25: #{edge_decoder_pallas.1} parent=11 // pred_check
          %p172 = pneg %p122
        $region26: #{edge_decoder_pallas.1} parent=11 // pred_check_branch
          %174 = sbr.rel (%p172) target = $region28
        $region27: #{edge_decoder_pallas.1} parent=11 // pred_region
          _
        $region28: #{edge_decoder_pallas.1} parent=11 // pred_fallthru
          _
      $region12: #{edge_decoder_pallas.1} parent=5 // pred_fallthru
        _
      %p175 = scmp.lt.s32.totalorder %s12, 4
      // Predicated region
      $region29: #{edge_decoder_pallas.1} parent=5 // pred_check
        %p176 = pneg %p175
      $region30: #{edge_decoder_pallas.1} parent=5 // pred_check_branch
        %178 = sbr.rel (%p176) target = $region32
      $region31: #{edge_decoder_pallas.1} parent=5 // pred_region
        // Predicated region
        $region33: #{edge_decoder_pallas.1} parent=31 // pred_check
          %p179 = pneg %p32
        $region34: #{edge_decoder_pallas.1} parent=31 // pred_check_branch
          %181 = sbr.rel (%p179) target = $region36
        $region35: #{edge_decoder_pallas.1} parent=31 // pred_region
          %s182 = sand.u32 %s22, 1
          %s183 = sand.u32 %s22, 1
          %s184 = smul.addr %s183, 1152
          %s185 = scalar_lea.vmem [#allocation3], %s184
          %s186 = smul.addr %s12, 4
          %s187 = scalar_lea.vmem %s0, %s186
          // Predicated region
          $region37: #{edge_decoder_pallas.1} parent=35 // pred_check
            _
          $region38: #{edge_decoder_pallas.1} parent=35 // pred_check_branch
            %189 = sbr.rel (0) target = $region40
          $region39: #{edge_decoder_pallas.1} parent=35 // pred_region
            // Predicated region
            $region41: #{edge_decoder_pallas.1} parent=39 // pred_check
              _
            $region42: #{edge_decoder_pallas.1} parent=39 // pred_check_branch
              %191 = sbr.rel target = $region44
            $region43: #{edge_decoder_pallas.1} parent=39 // pred_region
              // Predicated region
              $region56: #{edge_decoder_pallas.1} parent=43 // pred_check
                _
              $region57: #{edge_decoder_pallas.1} parent=43 // pred_check_branch
                %781 = sbr.rel (0) target = $region59
              $region58: #{edge_decoder_pallas.1} parent=43 // pred_region
                loop: start=0, step=1, limit=1
                $region60: #{edge_decoder_pallas.1} parent=58 // loop_pre_header
                  _
                $region61: #{edge_decoder_pallas.1} parent=58 // loop_header
                  %s783 = sphi 0, %s787
                  %p784 = scmp.ge.s32.totalorder %s783, 1
                  %s788 = sphi %s187, %s187
                  %s789 = sphi %s185, %s185
                $region62: #{edge_decoder_pallas.1} parent=58 // loop_header_branch
                  %786 = sbr.rel (%p784) target = $region66
                $region63: #{edge_decoder_pallas.1} parent=58 // loop_body
                  _
                $region64: #{edge_decoder_pallas.1} parent=58 // loop_footer
                  %s787 = sadd.s32 1, %s783
                $region65: #{edge_decoder_pallas.1} parent=58 // loop_footer_branch
                  %782 = sbr.rel target = $region61
                $region66: #{edge_decoder_pallas.1} parent=58 // loop_exit
                  _
                %s791 = ssub.s32 16, 1
                loop: start=0, step=1, limit=1
                $region67: #{edge_decoder_pallas.1} parent=58 // loop_pre_header
                  _
                $region68: #{edge_decoder_pallas.1} parent=58 // loop_header
                  %s793 = sphi 0, %s797
                  %p794 = scmp.ge.s32.totalorder %s793, 1
                  %s798 = sphi %s187, %s187
                  %s799 = sphi %s185, %s185
                $region69: #{edge_decoder_pallas.1} parent=58 // loop_header_branch
                  %796 = sbr.rel (%p794) target = $region73
                $region70: #{edge_decoder_pallas.1} parent=58 // loop_body
                  %v800 = vld [vmem:[%s798] sm:%s791]
                  %801 = vst [vmem:[%s799] sm:%s791] %v800
                  %v802 = vld [vmem:[%s798 + $0x10] sm:%s791]
                  %803 = vst [vmem:[%s799 + $0x4] sm:%s791] %v802
                  %v804 = vld [vmem:[%s798 + $0x20] sm:%s791]
                  %805 = vst [vmem:[%s799 + $0x8] sm:%s791] %v804
                  %v806 = vld [vmem:[%s798 + $0x30] sm:%s791]
                  %807 = vst [vmem:[%s799 + $0xc] sm:%s791] %v806
                  %v808 = vld [vmem:[%s798 + $0x40] sm:%s791]
                  %809 = vst [vmem:[%s799 + $0x10] sm:%s791] %v808
                  %v810 = vld [vmem:[%s798 + $0x50] sm:%s791]
                  %811 = vst [vmem:[%s799 + $0x14] sm:%s791] %v810
                  %v812 = vld [vmem:[%s798 + $0x60] sm:%s791]
                  %813 = vst [vmem:[%s799 + $0x18] sm:%s791] %v812
                  %v814 = vld [vmem:[%s798 + $0x70] sm:%s791]
                  %815 = vst [vmem:[%s799 + $0x1c] sm:%s791] %v814
                  %v816 = vld [vmem:[%s798 + $0x80] sm:%s791]
                  %817 = vst [vmem:[%s799 + $0x20] sm:%s791] %v816
                  %v818 = vld [vmem:[%s798 + $0x90] sm:%s791]
                  %819 = vst [vmem:[%s799 + $0x24] sm:%s791] %v818
                  %v820 = vld [vmem:[%s798 + $0xa0] sm:%s791]
                  %821 = vst [vmem:[%s799 + $0x28] sm:%s791] %v820
                  %v822 = vld [vmem:[%s798 + $0xb0] sm:%s791]
                  %823 = vst [vmem:[%s799 + $0x2c] sm:%s791] %v822
                  %v824 = vld [vmem:[%s798 + $0xc0] sm:%s791]
                  %825 = vst [vmem:[%s799 + $0x30] sm:%s791] %v824
                  %v826 = vld [vmem:[%s798 + $0xd0] sm:%s791]
                  %827 = vst [vmem:[%s799 + $0x34] sm:%s791] %v826
                  %v828 = vld [vmem:[%s798 + $0xe0] sm:%s791]
                  %829 = vst [vmem:[%s799 + $0x38] sm:%s791] %v828
                  %v830 = vld [vmem:[%s798 + $0xf0] sm:%s791]
                  %831 = vst [vmem:[%s799 + $0x3c] sm:%s791] %v830
                  %v832 = vld [vmem:[%s798 + $0x100] sm:%s791]
                  %833 = vst [vmem:[%s799 + $0x40] sm:%s791] %v832
                  %v834 = vld [vmem:[%s798 + $0x110] sm:%s791]
                  %835 = vst [vmem:[%s799 + $0x44] sm:%s791] %v834
                  %v836 = vld [vmem:[%s798 + $0x120] sm:%s791]
                  %837 = vst [vmem:[%s799 + $0x48] sm:%s791] %v836
                  %v838 = vld [vmem:[%s798 + $0x130] sm:%s791]
                  %839 = vst [vmem:[%s799 + $0x4c] sm:%s791] %v838
                  %v840 = vld [vmem:[%s798 + $0x140] sm:%s791]
                  %841 = vst [vmem:[%s799 + $0x50] sm:%s791] %v840
                  %v842 = vld [vmem:[%s798 + $0x150] sm:%s791]
                  %843 = vst [vmem:[%s799 + $0x54] sm:%s791] %v842
                  %v844 = vld [vmem:[%s798 + $0x160] sm:%s791]
                  %845 = vst [vmem:[%s799 + $0x58] sm:%s791] %v844
                  %v846 = vld [vmem:[%s798 + $0x170] sm:%s791]
                  %847 = vst [vmem:[%s799 + $0x5c] sm:%s791] %v846
                  %v848 = vld [vmem:[%s798 + $0x180] sm:%s791]
                  %849 = vst [vmem:[%s799 + $0x60] sm:%s791] %v848
                  %v850 = vld [vmem:[%s798 + $0x190] sm:%s791]
                  %851 = vst [vmem:[%s799 + $0x64] sm:%s791] %v850
                  %v852 = vld [vmem:[%s798 + $0x1a0] sm:%s791]
                  %853 = vst [vmem:[%s799 + $0x68] sm:%s791] %v852
                  %v854 = vld [vmem:[%s798 + $0x1b0] sm:%s791]
                  %855 = vst [vmem:[%s799 + $0x6c] sm:%s791] %v854
                  %v856 = vld [vmem:[%s798 + $0x1c0] sm:%s791]
                  %857 = vst [vmem:[%s799 + $0x70] sm:%s791] %v856
                  %v858 = vld [vmem:[%s798 + $0x1d0] sm:%s791]
                  %859 = vst [vmem:[%s799 + $0x74] sm:%s791] %v858
                  %v860 = vld [vmem:[%s798 + $0x1e0] sm:%s791]
                  %861 = vst [vmem:[%s799 + $0x78] sm:%s791] %v860
                  %v862 = vld [vmem:[%s798 + $0x1f0] sm:%s791]
                  %863 = vst [vmem:[%s799 + $0x7c] sm:%s791] %v862
                  %v864 = vld [vmem:[%s798 + $0x200] sm:%s791]
                  %865 = vst [vmem:[%s799 + $0x80] sm:%s791] %v864
                  %v866 = vld [vmem:[%s798 + $0x210] sm:%s791]
                  %867 = vst [vmem:[%s799 + $0x84] sm:%s791] %v866
                  %v868 = vld [vmem:[%s798 + $0x220] sm:%s791]
                  %869 = vst [vmem:[%s799 + $0x88] sm:%s791] %v868
                  %v870 = vld [vmem:[%s798 + $0x230] sm:%s791]
                  %871 = vst [vmem:[%s799 + $0x8c] sm:%s791] %v870
                  %v872 = vld [vmem:[%s798 + $0x240] sm:%s791]
                  %873 = vst [vmem:[%s799 + $0x90] sm:%s791] %v872
                  %v874 = vld [vmem:[%s798 + $0x250] sm:%s791]
                  %875 = vst [vmem:[%s799 + $0x94] sm:%s791] %v874
                  %v876 = vld [vmem:[%s798 + $0x260] sm:%s791]
                  %877 = vst [vmem:[%s799 + $0x98] sm:%s791] %v876
                  %v878 = vld [vmem:[%s798 + $0x270] sm:%s791]
                  %879 = vst [vmem:[%s799 + $0x9c] sm:%s791] %v878
                  %v880 = vld [vmem:[%s798 + $0x280] sm:%s791]
                  %881 = vst [vmem:[%s799 + $0xa0] sm:%s791] %v880
                  %v882 = vld [vmem:[%s798 + $0x290] sm:%s791]
                  %883 = vst [vmem:[%s799 + $0xa4] sm:%s791] %v882
                  %v884 = vld [vmem:[%s798 + $0x2a0] sm:%s791]
                  %885 = vst [vmem:[%s799 + $0xa8] sm:%s791] %v884
                  %v886 = vld [vmem:[%s798 + $0x2b0] sm:%s791]
                  %887 = vst [vmem:[%s799 + $0xac] sm:%s791] %v886
                  %v888 = vld [vmem:[%s798 + $0x2c0] sm:%s791]
                  %889 = vst [vmem:[%s799 + $0xb0] sm:%s791] %v888
                  %v890 = vld [vmem:[%s798 + $0x2d0] sm:%s791]
                  %891 = vst [vmem:[%s799 + $0xb4] sm:%s791] %v890
                  %v892 = vld [vmem:[%s798 + $0x2e0] sm:%s791]
                  %893 = vst [vmem:[%s799 + $0xb8] sm:%s791] %v892
                  %v894 = vld [vmem:[%s798 + $0x2f0] sm:%s791]
                  %895 = vst [vmem:[%s799 + $0xbc] sm:%s791] %v894
                  %v896 = vld [vmem:[%s798 + $0x300] sm:%s791]
                  %897 = vst [vmem:[%s799 + $0xc0] sm:%s791] %v896
                  %v898 = vld [vmem:[%s798 + $0x310] sm:%s791]
                  %899 = vst [vmem:[%s799 + $0xc4] sm:%s791] %v898
                  %v900 = vld [vmem:[%s798 + $0x320] sm:%s791]
                  %901 = vst [vmem:[%s799 + $0xc8] sm:%s791] %v900
                  %v902 = vld [vmem:[%s798 + $0x330] sm:%s791]
                  %903 = vst [vmem:[%s799 + $0xcc] sm:%s791] %v902
                  %v904 = vld [vmem:[%s798 + $0x340] sm:%s791]
                  %905 = vst [vmem:[%s799 + $0xd0] sm:%s791] %v904
                  %v906 = vld [vmem:[%s798 + $0x350] sm:%s791]
                  %907 = vst [vmem:[%s799 + $0xd4] sm:%s791] %v906
                  %v908 = vld [vmem:[%s798 + $0x360] sm:%s791]
                  %909 = vst [vmem:[%s799 + $0xd8] sm:%s791] %v908
                  %v910 = vld [vmem:[%s798 + $0x370] sm:%s791]
                  %911 = vst [vmem:[%s799 + $0xdc] sm:%s791] %v910
                  %v912 = vld [vmem:[%s798 + $0x380] sm:%s791]
                  %913 = vst [vmem:[%s799 + $0xe0] sm:%s791] %v912
                  %v914 = vld [vmem:[%s798 + $0x390] sm:%s791]
                  %915 = vst [vmem:[%s799 + $0xe4] sm:%s791] %v914
                  %v916 = vld [vmem:[%s798 + $0x3a0] sm:%s791]
                  %917 = vst [vmem:[%s799 + $0xe8] sm:%s791] %v916
                  %v918 = vld [vmem:[%s798 + $0x3b0] sm:%s791]
                  %919 = vst [vmem:[%s799 + $0xec] sm:%s791] %v918
                  %v920 = vld [vmem:[%s798 + $0x3c0] sm:%s791]
                  %921 = vst [vmem:[%s799 + $0xf0] sm:%s791] %v920
                  %v922 = vld [vmem:[%s798 + $0x3d0] sm:%s791]
                  %923 = vst [vmem:[%s799 + $0xf4] sm:%s791] %v922
                  %v924 = vld [vmem:[%s798 + $0x3e0] sm:%s791]
                  %925 = vst [vmem:[%s799 + $0xf8] sm:%s791] %v924
                  %v926 = vld [vmem:[%s798 + $0x3f0] sm:%s791]
                  %927 = vst [vmem:[%s799 + $0xfc] sm:%s791] %v926
                  %v928 = vld [vmem:[%s798 + $0x400] sm:%s791]
                  %929 = vst [vmem:[%s799 + $0x100] sm:%s791] %v928
                  %v930 = vld [vmem:[%s798 + $0x410] sm:%s791]
                  %931 = vst [vmem:[%s799 + $0x104] sm:%s791] %v930
                  %v932 = vld [vmem:[%s798 + $0x420] sm:%s791]
                  %933 = vst [vmem:[%s799 + $0x108] sm:%s791] %v932
                  %v934 = vld [vmem:[%s798 + $0x430] sm:%s791]
                  %935 = vst [vmem:[%s799 + $0x10c] sm:%s791] %v934
                  %v936 = vld [vmem:[%s798 + $0x440] sm:%s791]
                  %937 = vst [vmem:[%s799 + $0x110] sm:%s791] %v936
                  %v938 = vld [vmem:[%s798 + $0x450] sm:%s791]
                  %939 = vst [vmem:[%s799 + $0x114] sm:%s791] %v938
                  %v940 = vld [vmem:[%s798 + $0x460] sm:%s791]
                  %941 = vst [vmem:[%s799 + $0x118] sm:%s791] %v940
                  %v942 = vld [vmem:[%s798 + $0x470] sm:%s791]
                  %943 = vst [vmem:[%s799 + $0x11c] sm:%s791] %v942
                  %v944 = vld [vmem:[%s798 + $0x480] sm:%s791]
                  %945 = vst [vmem:[%s799 + $0x120] sm:%s791] %v944
                  %v946 = vld [vmem:[%s798 + $0x490] sm:%s791]
                  %947 = vst [vmem:[%s799 + $0x124] sm:%s791] %v946
                  %v948 = vld [vmem:[%s798 + $0x4a0] sm:%s791]
                  %949 = vst [vmem:[%s799 + $0x128] sm:%s791] %v948
                  %v950 = vld [vmem:[%s798 + $0x4b0] sm:%s791]
                  %951 = vst [vmem:[%s799 + $0x12c] sm:%s791] %v950
                  %v952 = vld [vmem:[%s798 + $0x4c0] sm:%s791]
                  %953 = vst [vmem:[%s799 + $0x130] sm:%s791] %v952
                  %v954 = vld [vmem:[%s798 + $0x4d0] sm:%s791]
                  %955 = vst [vmem:[%s799 + $0x134] sm:%s791] %v954
                  %v956 = vld [vmem:[%s798 + $0x4e0] sm:%s791]
                  %957 = vst [vmem:[%s799 + $0x138] sm:%s791] %v956
                  %v958 = vld [vmem:[%s798 + $0x4f0] sm:%s791]
                  %959 = vst [vmem:[%s799 + $0x13c] sm:%s791] %v958
                  %v960 = vld [vmem:[%s798 + $0x500] sm:%s791]
                  %961 = vst [vmem:[%s799 + $0x140] sm:%s791] %v960
                  %v962 = vld [vmem:[%s798 + $0x510] sm:%s791]
                  %963 = vst [vmem:[%s799 + $0x144] sm:%s791] %v962
                  %v964 = vld [vmem:[%s798 + $0x520] sm:%s791]
                  %965 = vst [vmem:[%s799 + $0x148] sm:%s791] %v964
                  %v966 = vld [vmem:[%s798 + $0x530] sm:%s791]
                  %967 = vst [vmem:[%s799 + $0x14c] sm:%s791] %v966
                  %v968 = vld [vmem:[%s798 + $0x540] sm:%s791]
                  %969 = vst [vmem:[%s799 + $0x150] sm:%s791] %v968
                  %v970 = vld [vmem:[%s798 + $0x550] sm:%s791]
                  %971 = vst [vmem:[%s799 + $0x154] sm:%s791] %v970
                  %v972 = vld [vmem:[%s798 + $0x560] sm:%s791]
                  %973 = vst [vmem:[%s799 + $0x158] sm:%s791] %v972
                  %v974 = vld [vmem:[%s798 + $0x570] sm:%s791]
                  %975 = vst [vmem:[%s799 + $0x15c] sm:%s791] %v974
                  %v976 = vld [vmem:[%s798 + $0x580] sm:%s791]
                  %977 = vst [vmem:[%s799 + $0x160] sm:%s791] %v976
                  %v978 = vld [vmem:[%s798 + $0x590] sm:%s791]
                  %979 = vst [vmem:[%s799 + $0x164] sm:%s791] %v978
                  %v980 = vld [vmem:[%s798 + $0x5a0] sm:%s791]
                  %981 = vst [vmem:[%s799 + $0x168] sm:%s791] %v980
                  %v982 = vld [vmem:[%s798 + $0x5b0] sm:%s791]
                  %983 = vst [vmem:[%s799 + $0x16c] sm:%s791] %v982
                  %v984 = vld [vmem:[%s798 + $0x5c0] sm:%s791]
                  %985 = vst [vmem:[%s799 + $0x170] sm:%s791] %v984
                  %v986 = vld [vmem:[%s798 + $0x5d0] sm:%s791]
                  %987 = vst [vmem:[%s799 + $0x174] sm:%s791] %v986
                  %v988 = vld [vmem:[%s798 + $0x5e0] sm:%s791]
                  %989 = vst [vmem:[%s799 + $0x178] sm:%s791] %v988
                  %v990 = vld [vmem:[%s798 + $0x5f0] sm:%s791]
                  %991 = vst [vmem:[%s799 + $0x17c] sm:%s791] %v990
                  %v992 = vld [vmem:[%s798 + $0x600] sm:%s791]
                  %993 = vst [vmem:[%s799 + $0x180] sm:%s791] %v992
                  %v994 = vld [vmem:[%s798 + $0x610] sm:%s791]
                  %995 = vst [vmem:[%s799 + $0x184] sm:%s791] %v994
                  %v996 = vld [vmem:[%s798 + $0x620] sm:%s791]
                  %997 = vst [vmem:[%s799 + $0x188] sm:%s791] %v996
                  %v998 = vld [vmem:[%s798 + $0x630] sm:%s791]
                  %999 = vst [vmem:[%s799 + $0x18c] sm:%s791] %v998
                  %v1000 = vld [vmem:[%s798 + $0x640] sm:%s791]
                  %1001 = vst [vmem:[%s799 + $0x190] sm:%s791] %v1000
                  %v1002 = vld [vmem:[%s798 + $0x650] sm:%s791]
                  %1003 = vst [vmem:[%s799 + $0x194] sm:%s791] %v1002
                  %v1004 = vld [vmem:[%s798 + $0x660] sm:%s791]
                  %1005 = vst [vmem:[%s799 + $0x198] sm:%s791] %v1004
                  %v1006 = vld [vmem:[%s798 + $0x670] sm:%s791]
                  %1007 = vst [vmem:[%s799 + $0x19c] sm:%s791] %v1006
                  %v1008 = vld [vmem:[%s798 + $0x680] sm:%s791]
                  %1009 = vst [vmem:[%s799 + $0x1a0] sm:%s791] %v1008
                  %v1010 = vld [vmem:[%s798 + $0x690] sm:%s791]
                  %1011 = vst [vmem:[%s799 + $0x1a4] sm:%s791] %v1010
                  %v1012 = vld [vmem:[%s798 + $0x6a0] sm:%s791]
                  %1013 = vst [vmem:[%s799 + $0x1a8] sm:%s791] %v1012
                  %v1014 = vld [vmem:[%s798 + $0x6b0] sm:%s791]
                  %1015 = vst [vmem:[%s799 + $0x1ac] sm:%s791] %v1014
                  %v1016 = vld [vmem:[%s798 + $0x6c0] sm:%s791]
                  %1017 = vst [vmem:[%s799 + $0x1b0] sm:%s791] %v1016
                  %v1018 = vld [vmem:[%s798 + $0x6d0] sm:%s791]
                  %1019 = vst [vmem:[%s799 + $0x1b4] sm:%s791] %v1018
                  %v1020 = vld [vmem:[%s798 + $0x6e0] sm:%s791]
                  %1021 = vst [vmem:[%s799 + $0x1b8] sm:%s791] %v1020
                  %v1022 = vld [vmem:[%s798 + $0x6f0] sm:%s791]
                  %1023 = vst [vmem:[%s799 + $0x1bc] sm:%s791] %v1022
                  %v1024 = vld [vmem:[%s798 + $0x700] sm:%s791]
                  %1025 = vst [vmem:[%s799 + $0x1c0] sm:%s791] %v1024
                  %v1026 = vld [vmem:[%s798 + $0x710] sm:%s791]
                  %1027 = vst [vmem:[%s799 + $0x1c4] sm:%s791] %v1026
                  %v1028 = vld [vmem:[%s798 + $0x720] sm:%s791]
                  %1029 = vst [vmem:[%s799 + $0x1c8] sm:%s791] %v1028
                  %v1030 = vld [vmem:[%s798 + $0x730] sm:%s791]
                  %1031 = vst [vmem:[%s799 + $0x1cc] sm:%s791] %v1030
                  %v1032 = vld [vmem:[%s798 + $0x740] sm:%s791]
                  %1033 = vst [vmem:[%s799 + $0x1d0] sm:%s791] %v1032
                  %v1034 = vld [vmem:[%s798 + $0x750] sm:%s791]
                  %1035 = vst [vmem:[%s799 + $0x1d4] sm:%s791] %v1034
                  %v1036 = vld [vmem:[%s798 + $0x760] sm:%s791]
                  %1037 = vst [vmem:[%s799 + $0x1d8] sm:%s791] %v1036
                  %v1038 = vld [vmem:[%s798 + $0x770] sm:%s791]
                  %1039 = vst [vmem:[%s799 + $0x1dc] sm:%s791] %v1038
                  %v1040 = vld [vmem:[%s798 + $0x780] sm:%s791]
                  %1041 = vst [vmem:[%s799 + $0x1e0] sm:%s791] %v1040
                  %v1042 = vld [vmem:[%s798 + $0x790] sm:%s791]
                  %1043 = vst [vmem:[%s799 + $0x1e4] sm:%s791] %v1042
                  %v1044 = vld [vmem:[%s798 + $0x7a0] sm:%s791]
                  %1045 = vst [vmem:[%s799 + $0x1e8] sm:%s791] %v1044
                  %v1046 = vld [vmem:[%s798 + $0x7b0] sm:%s791]
                  %1047 = vst [vmem:[%s799 + $0x1ec] sm:%s791] %v1046
                  %v1048 = vld [vmem:[%s798 + $0x7c0] sm:%s791]
                  %1049 = vst [vmem:[%s799 + $0x1f0] sm:%s791] %v1048
                  %v1050 = vld [vmem:[%s798 + $0x7d0] sm:%s791]
                  %1051 = vst [vmem:[%s799 + $0x1f4] sm:%s791] %v1050
                  %v1052 = vld [vmem:[%s798 + $0x7e0] sm:%s791]
                  %1053 = vst [vmem:[%s799 + $0x1f8] sm:%s791] %v1052
                  %v1054 = vld [vmem:[%s798 + $0x7f0] sm:%s791]
                  %1055 = vst [vmem:[%s799 + $0x1fc] sm:%s791] %v1054
                  %v1056 = vld [vmem:[%s798 + $0x800] sm:%s791]
                  %1057 = vst [vmem:[%s799 + $0x200] sm:%s791] %v1056
                  %v1058 = vld [vmem:[%s798 + $0x810] sm:%s791]
                  %1059 = vst [vmem:[%s799 + $0x204] sm:%s791] %v1058
                  %v1060 = vld [vmem:[%s798 + $0x820] sm:%s791]
                  %1061 = vst [vmem:[%s799 + $0x208] sm:%s791] %v1060
                  %v1062 = vld [vmem:[%s798 + $0x830] sm:%s791]
                  %1063 = vst [vmem:[%s799 + $0x20c] sm:%s791] %v1062
                  %v1064 = vld [vmem:[%s798 + $0x840] sm:%s791]
                  %1065 = vst [vmem:[%s799 + $0x210] sm:%s791] %v1064
                  %v1066 = vld [vmem:[%s798 + $0x850] sm:%s791]
                  %1067 = vst [vmem:[%s799 + $0x214] sm:%s791] %v1066
                  %v1068 = vld [vmem:[%s798 + $0x860] sm:%s791]
                  %1069 = vst [vmem:[%s799 + $0x218] sm:%s791] %v1068
                  %v1070 = vld [vmem:[%s798 + $0x870] sm:%s791]
                  %1071 = vst [vmem:[%s799 + $0x21c] sm:%s791] %v1070
                  %v1072 = vld [vmem:[%s798 + $0x880] sm:%s791]
                  %1073 = vst [vmem:[%s799 + $0x220] sm:%s791] %v1072
                  %v1074 = vld [vmem:[%s798 + $0x890] sm:%s791]
                  %1075 = vst [vmem:[%s799 + $0x224] sm:%s791] %v1074
                  %v1076 = vld [vmem:[%s798 + $0x8a0] sm:%s791]
                  %1077 = vst [vmem:[%s799 + $0x228] sm:%s791] %v1076
                  %v1078 = vld [vmem:[%s798 + $0x8b0] sm:%s791]
                  %1079 = vst [vmem:[%s799 + $0x22c] sm:%s791] %v1078
                  %v1080 = vld [vmem:[%s798 + $0x8c0] sm:%s791]
                  %1081 = vst [vmem:[%s799 + $0x230] sm:%s791] %v1080
                  %v1082 = vld [vmem:[%s798 + $0x8d0] sm:%s791]
                  %1083 = vst [vmem:[%s799 + $0x234] sm:%s791] %v1082
                  %v1084 = vld [vmem:[%s798 + $0x8e0] sm:%s791]
                  %1085 = vst [vmem:[%s799 + $0x238] sm:%s791] %v1084
                  %v1086 = vld [vmem:[%s798 + $0x8f0] sm:%s791]
                  %1087 = vst [vmem:[%s799 + $0x23c] sm:%s791] %v1086
                  %v1088 = vld [vmem:[%s798 + $0x900] sm:%s791]
                  %1089 = vst [vmem:[%s799 + $0x240] sm:%s791] %v1088
                  %v1090 = vld [vmem:[%s798 + $0x910] sm:%s791]
                  %1091 = vst [vmem:[%s799 + $0x244] sm:%s791] %v1090
                  %v1092 = vld [vmem:[%s798 + $0x920] sm:%s791]
                  %1093 = vst [vmem:[%s799 + $0x248] sm:%s791] %v1092
                  %v1094 = vld [vmem:[%s798 + $0x930] sm:%s791]
                  %1095 = vst [vmem:[%s799 + $0x24c] sm:%s791] %v1094
                  %v1096 = vld [vmem:[%s798 + $0x940] sm:%s791]
                  %1097 = vst [vmem:[%s799 + $0x250] sm:%s791] %v1096
                  %v1098 = vld [vmem:[%s798 + $0x950] sm:%s791]
                  %1099 = vst [vmem:[%s799 + $0x254] sm:%s791] %v1098
                  %v1100 = vld [vmem:[%s798 + $0x960] sm:%s791]
                  %1101 = vst [vmem:[%s799 + $0x258] sm:%s791] %v1100
                  %v1102 = vld [vmem:[%s798 + $0x970] sm:%s791]
                  %1103 = vst [vmem:[%s799 + $0x25c] sm:%s791] %v1102
                  %v1104 = vld [vmem:[%s798 + $0x980] sm:%s791]
                  %1105 = vst [vmem:[%s799 + $0x260] sm:%s791] %v1104
                  %v1106 = vld [vmem:[%s798 + $0x990] sm:%s791]
                  %1107 = vst [vmem:[%s799 + $0x264] sm:%s791] %v1106
                  %v1108 = vld [vmem:[%s798 + $0x9a0] sm:%s791]
                  %1109 = vst [vmem:[%s799 + $0x268] sm:%s791] %v1108
                  %v1110 = vld [vmem:[%s798 + $0x9b0] sm:%s791]
                  %1111 = vst [vmem:[%s799 + $0x26c] sm:%s791] %v1110
                  %v1112 = vld [vmem:[%s798 + $0x9c0] sm:%s791]
                  %1113 = vst [vmem:[%s799 + $0x270] sm:%s791] %v1112
                  %v1114 = vld [vmem:[%s798 + $0x9d0] sm:%s791]
                  %1115 = vst [vmem:[%s799 + $0x274] sm:%s791] %v1114
                  %v1116 = vld [vmem:[%s798 + $0x9e0] sm:%s791]
                  %1117 = vst [vmem:[%s799 + $0x278] sm:%s791] %v1116
                  %v1118 = vld [vmem:[%s798 + $0x9f0] sm:%s791]
                  %1119 = vst [vmem:[%s799 + $0x27c] sm:%s791] %v1118
                  %v1120 = vld [vmem:[%s798 + $0xa00] sm:%s791]
                  %1121 = vst [vmem:[%s799 + $0x280] sm:%s791] %v1120
                  %v1122 = vld [vmem:[%s798 + $0xa10] sm:%s791]
                  %1123 = vst [vmem:[%s799 + $0x284] sm:%s791] %v1122
                  %v1124 = vld [vmem:[%s798 + $0xa20] sm:%s791]
                  %1125 = vst [vmem:[%s799 + $0x288] sm:%s791] %v1124
                  %v1126 = vld [vmem:[%s798 + $0xa30] sm:%s791]
                  %1127 = vst [vmem:[%s799 + $0x28c] sm:%s791] %v1126
                  %v1128 = vld [vmem:[%s798 + $0xa40] sm:%s791]
                  %1129 = vst [vmem:[%s799 + $0x290] sm:%s791] %v1128
                  %v1130 = vld [vmem:[%s798 + $0xa50] sm:%s791]
                  %1131 = vst [vmem:[%s799 + $0x294] sm:%s791] %v1130
                  %v1132 = vld [vmem:[%s798 + $0xa60] sm:%s791]
                  %1133 = vst [vmem:[%s799 + $0x298] sm:%s791] %v1132
                  %v1134 = vld [vmem:[%s798 + $0xa70] sm:%s791]
                  %1135 = vst [vmem:[%s799 + $0x29c] sm:%s791] %v1134
                  %v1136 = vld [vmem:[%s798 + $0xa80] sm:%s791]
                  %1137 = vst [vmem:[%s799 + $0x2a0] sm:%s791] %v1136
                  %v1138 = vld [vmem:[%s798 + $0xa90] sm:%s791]
                  %1139 = vst [vmem:[%s799 + $0x2a4] sm:%s791] %v1138
                  %v1140 = vld [vmem:[%s798 + $0xaa0] sm:%s791]
                  %1141 = vst [vmem:[%s799 + $0x2a8] sm:%s791] %v1140
                  %v1142 = vld [vmem:[%s798 + $0xab0] sm:%s791]
                  %1143 = vst [vmem:[%s799 + $0x2ac] sm:%s791] %v1142
                  %v1144 = vld [vmem:[%s798 + $0xac0] sm:%s791]
                  %1145 = vst [vmem:[%s799 + $0x2b0] sm:%s791] %v1144
                  %v1146 = vld [vmem:[%s798 + $0xad0] sm:%s791]
                  %1147 = vst [vmem:[%s799 + $0x2b4] sm:%s791] %v1146
                  %v1148 = vld [vmem:[%s798 + $0xae0] sm:%s791]
                  %1149 = vst [vmem:[%s799 + $0x2b8] sm:%s791] %v1148
                  %v1150 = vld [vmem:[%s798 + $0xaf0] sm:%s791]
                  %1151 = vst [vmem:[%s799 + $0x2bc] sm:%s791] %v1150
                  %v1152 = vld [vmem:[%s798 + $0xb00] sm:%s791]
                  %1153 = vst [vmem:[%s799 + $0x2c0] sm:%s791] %v1152
                  %v1154 = vld [vmem:[%s798 + $0xb10] sm:%s791]
                  %1155 = vst [vmem:[%s799 + $0x2c4] sm:%s791] %v1154
                  %v1156 = vld [vmem:[%s798 + $0xb20] sm:%s791]
                  %1157 = vst [vmem:[%s799 + $0x2c8] sm:%s791] %v1156
                  %v1158 = vld [vmem:[%s798 + $0xb30] sm:%s791]
                  %1159 = vst [vmem:[%s799 + $0x2cc] sm:%s791] %v1158
                  %v1160 = vld [vmem:[%s798 + $0xb40] sm:%s791]
                  %1161 = vst [vmem:[%s799 + $0x2d0] sm:%s791] %v1160
                  %v1162 = vld [vmem:[%s798 + $0xb50] sm:%s791]
                  %1163 = vst [vmem:[%s799 + $0x2d4] sm:%s791] %v1162
                  %v1164 = vld [vmem:[%s798 + $0xb60] sm:%s791]
                  %1165 = vst [vmem:[%s799 + $0x2d8] sm:%s791] %v1164
                  %v1166 = vld [vmem:[%s798 + $0xb70] sm:%s791]
                  %1167 = vst [vmem:[%s799 + $0x2dc] sm:%s791] %v1166
                  %v1168 = vld [vmem:[%s798 + $0xb80] sm:%s791]
                  %1169 = vst [vmem:[%s799 + $0x2e0] sm:%s791] %v1168
                  %v1170 = vld [vmem:[%s798 + $0xb90] sm:%s791]
                  %1171 = vst [vmem:[%s799 + $0x2e4] sm:%s791] %v1170
                  %v1172 = vld [vmem:[%s798 + $0xba0] sm:%s791]
                  %1173 = vst [vmem:[%s799 + $0x2e8] sm:%s791] %v1172
                  %v1174 = vld [vmem:[%s798 + $0xbb0] sm:%s791]
                  %1175 = vst [vmem:[%s799 + $0x2ec] sm:%s791] %v1174
                  %v1176 = vld [vmem:[%s798 + $0xbc0] sm:%s791]
                  %1177 = vst [vmem:[%s799 + $0x2f0] sm:%s791] %v1176
                  %v1178 = vld [vmem:[%s798 + $0xbd0] sm:%s791]
                  %1179 = vst [vmem:[%s799 + $0x2f4] sm:%s791] %v1178
                  %v1180 = vld [vmem:[%s798 + $0xbe0] sm:%s791]
                  %1181 = vst [vmem:[%s799 + $0x2f8] sm:%s791] %v1180
                  %v1182 = vld [vmem:[%s798 + $0xbf0] sm:%s791]
                  %1183 = vst [vmem:[%s799 + $0x2fc] sm:%s791] %v1182
                  %v1184 = vld [vmem:[%s798 + $0xc00] sm:%s791]
                  %1185 = vst [vmem:[%s799 + $0x300] sm:%s791] %v1184
                  %v1186 = vld [vmem:[%s798 + $0xc10] sm:%s791]
                  %1187 = vst [vmem:[%s799 + $0x304] sm:%s791] %v1186
                  %v1188 = vld [vmem:[%s798 + $0xc20] sm:%s791]
                  %1189 = vst [vmem:[%s799 + $0x308] sm:%s791] %v1188
                  %v1190 = vld [vmem:[%s798 + $0xc30] sm:%s791]
                  %1191 = vst [vmem:[%s799 + $0x30c] sm:%s791] %v1190
                  %v1192 = vld [vmem:[%s798 + $0xc40] sm:%s791]
                  %1193 = vst [vmem:[%s799 + $0x310] sm:%s791] %v1192
                  %v1194 = vld [vmem:[%s798 + $0xc50] sm:%s791]
                  %1195 = vst [vmem:[%s799 + $0x314] sm:%s791] %v1194
                  %v1196 = vld [vmem:[%s798 + $0xc60] sm:%s791]
                  %1197 = vst [vmem:[%s799 + $0x318] sm:%s791] %v1196
                  %v1198 = vld [vmem:[%s798 + $0xc70] sm:%s791]
                  %1199 = vst [vmem:[%s799 + $0x31c] sm:%s791] %v1198
                  %v1200 = vld [vmem:[%s798 + $0xc80] sm:%s791]
                  %1201 = vst [vmem:[%s799 + $0x320] sm:%s791] %v1200
                  %v1202 = vld [vmem:[%s798 + $0xc90] sm:%s791]
                  %1203 = vst [vmem:[%s799 + $0x324] sm:%s791] %v1202
                  %v1204 = vld [vmem:[%s798 + $0xca0] sm:%s791]
                  %1205 = vst [vmem:[%s799 + $0x328] sm:%s791] %v1204
                  %v1206 = vld [vmem:[%s798 + $0xcb0] sm:%s791]
                  %1207 = vst [vmem:[%s799 + $0x32c] sm:%s791] %v1206
                  %v1208 = vld [vmem:[%s798 + $0xcc0] sm:%s791]
                  %1209 = vst [vmem:[%s799 + $0x330] sm:%s791] %v1208
                  %v1210 = vld [vmem:[%s798 + $0xcd0] sm:%s791]
                  %1211 = vst [vmem:[%s799 + $0x334] sm:%s791] %v1210
                  %v1212 = vld [vmem:[%s798 + $0xce0] sm:%s791]
                  %1213 = vst [vmem:[%s799 + $0x338] sm:%s791] %v1212
                  %v1214 = vld [vmem:[%s798 + $0xcf0] sm:%s791]
                  %1215 = vst [vmem:[%s799 + $0x33c] sm:%s791] %v1214
                  %v1216 = vld [vmem:[%s798 + $0xd00] sm:%s791]
                  %1217 = vst [vmem:[%s799 + $0x340] sm:%s791] %v1216
                  %v1218 = vld [vmem:[%s798 + $0xd10] sm:%s791]
                  %1219 = vst [vmem:[%s799 + $0x344] sm:%s791] %v1218
                  %v1220 = vld [vmem:[%s798 + $0xd20] sm:%s791]
                  %1221 = vst [vmem:[%s799 + $0x348] sm:%s791] %v1220
                  %v1222 = vld [vmem:[%s798 + $0xd30] sm:%s791]
                  %1223 = vst [vmem:[%s799 + $0x34c] sm:%s791] %v1222
                  %v1224 = vld [vmem:[%s798 + $0xd40] sm:%s791]
                  %1225 = vst [vmem:[%s799 + $0x350] sm:%s791] %v1224
                  %v1226 = vld [vmem:[%s798 + $0xd50] sm:%s791]
                  %1227 = vst [vmem:[%s799 + $0x354] sm:%s791] %v1226
                  %v1228 = vld [vmem:[%s798 + $0xd60] sm:%s791]
                  %1229 = vst [vmem:[%s799 + $0x358] sm:%s791] %v1228
                  %v1230 = vld [vmem:[%s798 + $0xd70] sm:%s791]
                  %1231 = vst [vmem:[%s799 + $0x35c] sm:%s791] %v1230
                  %v1232 = vld [vmem:[%s798 + $0xd80] sm:%s791]
                  %1233 = vst [vmem:[%s799 + $0x360] sm:%s791] %v1232
                  %v1234 = vld [vmem:[%s798 + $0xd90] sm:%s791]
                  %1235 = vst [vmem:[%s799 + $0x364] sm:%s791] %v1234
                  %v1236 = vld [vmem:[%s798 + $0xda0] sm:%s791]
                  %1237 = vst [vmem:[%s799 + $0x368] sm:%s791] %v1236
                  %v1238 = vld [vmem:[%s798 + $0xdb0] sm:%s791]
                  %1239 = vst [vmem:[%s799 + $0x36c] sm:%s791] %v1238
                  %v1240 = vld [vmem:[%s798 + $0xdc0] sm:%s791]
                  %1241 = vst [vmem:[%s799 + $0x370] sm:%s791] %v1240
                  %v1242 = vld [vmem:[%s798 + $0xdd0] sm:%s791]
                  %1243 = vst [vmem:[%s799 + $0x374] sm:%s791] %v1242
                  %v1244 = vld [vmem:[%s798 + $0xde0] sm:%s791]
                  %1245 = vst [vmem:[%s799 + $0x378] sm:%s791] %v1244
                  %v1246 = vld [vmem:[%s798 + $0xdf0] sm:%s791]
                  %1247 = vst [vmem:[%s799 + $0x37c] sm:%s791] %v1246
                  %v1248 = vld [vmem:[%s798 + $0xe00] sm:%s791]
                  %1249 = vst [vmem:[%s799 + $0x380] sm:%s791] %v1248
                  %v1250 = vld [vmem:[%s798 + $0xe10] sm:%s791]
                  %1251 = vst [vmem:[%s799 + $0x384] sm:%s791] %v1250
                  %v1252 = vld [vmem:[%s798 + $0xe20] sm:%s791]
                  %1253 = vst [vmem:[%s799 + $0x388] sm:%s791] %v1252
                  %v1254 = vld [vmem:[%s798 + $0xe30] sm:%s791]
                  %1255 = vst [vmem:[%s799 + $0x38c] sm:%s791] %v1254
                  %v1256 = vld [vmem:[%s798 + $0xe40] sm:%s791]
                  %1257 = vst [vmem:[%s799 + $0x390] sm:%s791] %v1256
                  %v1258 = vld [vmem:[%s798 + $0xe50] sm:%s791]
                  %1259 = vst [vmem:[%s799 + $0x394] sm:%s791] %v1258
                  %v1260 = vld [vmem:[%s798 + $0xe60] sm:%s791]
                  %1261 = vst [vmem:[%s799 + $0x398] sm:%s791] %v1260
                  %v1262 = vld [vmem:[%s798 + $0xe70] sm:%s791]
                  %1263 = vst [vmem:[%s799 + $0x39c] sm:%s791] %v1262
                  %v1264 = vld [vmem:[%s798 + $0xe80] sm:%s791]
                  %1265 = vst [vmem:[%s799 + $0x3a0] sm:%s791] %v1264
                  %v1266 = vld [vmem:[%s798 + $0xe90] sm:%s791]
                  %1267 = vst [vmem:[%s799 + $0x3a4] sm:%s791] %v1266
                  %v1268 = vld [vmem:[%s798 + $0xea0] sm:%s791]
                  %1269 = vst [vmem:[%s799 + $0x3a8] sm:%s791] %v1268
                  %v1270 = vld [vmem:[%s798 + $0xeb0] sm:%s791]
                  %1271 = vst [vmem:[%s799 + $0x3ac] sm:%s791] %v1270
                  %v1272 = vld [vmem:[%s798 + $0xec0] sm:%s791]
                  %1273 = vst [vmem:[%s799 + $0x3b0] sm:%s791] %v1272
                  %v1274 = vld [vmem:[%s798 + $0xed0] sm:%s791]
                  %1275 = vst [vmem:[%s799 + $0x3b4] sm:%s791] %v1274
                  %v1276 = vld [vmem:[%s798 + $0xee0] sm:%s791]
                  %1277 = vst [vmem:[%s799 + $0x3b8] sm:%s791] %v1276
                  %v1278 = vld [vmem:[%s798 + $0xef0] sm:%s791]
                  %1279 = vst [vmem:[%s799 + $0x3bc] sm:%s791] %v1278
                  %v1280 = vld [vmem:[%s798 + $0xf00] sm:%s791]
                  %1281 = vst [vmem:[%s799 + $0x3c0] sm:%s791] %v1280
                  %v1282 = vld [vmem:[%s798 + $0xf10] sm:%s791]
                  %1283 = vst [vmem:[%s799 + $0x3c4] sm:%s791] %v1282
                  %v1284 = vld [vmem:[%s798 + $0xf20] sm:%s791]
                  %1285 = vst [vmem:[%s799 + $0x3c8] sm:%s791] %v1284
                  %v1286 = vld [vmem:[%s798 + $0xf30] sm:%s791]
                  %1287 = vst [vmem:[%s799 + $0x3cc] sm:%s791] %v1286
                  %v1288 = vld [vmem:[%s798 + $0xf40] sm:%s791]
                  %1289 = vst [vmem:[%s799 + $0x3d0] sm:%s791] %v1288
                  %v1290 = vld [vmem:[%s798 + $0xf50] sm:%s791]
                  %1291 = vst [vmem:[%s799 + $0x3d4] sm:%s791] %v1290
                  %v1292 = vld [vmem:[%s798 + $0xf60] sm:%s791]
                  %1293 = vst [vmem:[%s799 + $0x3d8] sm:%s791] %v1292
                  %v1294 = vld [vmem:[%s798 + $0xf70] sm:%s791]
                  %1295 = vst [vmem:[%s799 + $0x3dc] sm:%s791] %v1294
                  %v1296 = vld [vmem:[%s798 + $0xf80] sm:%s791]
                  %1297 = vst [vmem:[%s799 + $0x3e0] sm:%s791] %v1296
                  %v1298 = vld [vmem:[%s798 + $0xf90] sm:%s791]
                  %1299 = vst [vmem:[%s799 + $0x3e4] sm:%s791] %v1298
                  %v1300 = vld [vmem:[%s798 + $0xfa0] sm:%s791]
                  %1301 = vst [vmem:[%s799 + $0x3e8] sm:%s791] %v1300
                  %v1302 = vld [vmem:[%s798 + $0xfb0] sm:%s791]
                  %1303 = vst [vmem:[%s799 + $0x3ec] sm:%s791] %v1302
                  %v1304 = vld [vmem:[%s798 + $0xfc0] sm:%s791]
                  %1305 = vst [vmem:[%s799 + $0x3f0] sm:%s791] %v1304
                  %v1306 = vld [vmem:[%s798 + $0xfd0] sm:%s791]
                  %1307 = vst [vmem:[%s799 + $0x3f4] sm:%s791] %v1306
                  %v1308 = vld [vmem:[%s798 + $0xfe0] sm:%s791]
                  %1309 = vst [vmem:[%s799 + $0x3f8] sm:%s791] %v1308
                  %v1310 = vld [vmem:[%s798 + $0xff0] sm:%s791]
                  %1311 = vst [vmem:[%s799 + $0x3fc] sm:%s791] %v1310
                  %v1312 = vld [vmem:[%s798 + $0x1000] sm:%s791]
                  %1313 = vst [vmem:[%s799 + $0x400] sm:%s791] %v1312
                  %v1314 = vld [vmem:[%s798 + $0x1010] sm:%s791]
                  %1315 = vst [vmem:[%s799 + $0x404] sm:%s791] %v1314
                  %v1316 = vld [vmem:[%s798 + $0x1020] sm:%s791]
                  %1317 = vst [vmem:[%s799 + $0x408] sm:%s791] %v1316
                  %v1318 = vld [vmem:[%s798 + $0x1030] sm:%s791]
                  %1319 = vst [vmem:[%s799 + $0x40c] sm:%s791] %v1318
                  %v1320 = vld [vmem:[%s798 + $0x1040] sm:%s791]
                  %1321 = vst [vmem:[%s799 + $0x410] sm:%s791] %v1320
                  %v1322 = vld [vmem:[%s798 + $0x1050] sm:%s791]
                  %1323 = vst [vmem:[%s799 + $0x414] sm:%s791] %v1322
                  %v1324 = vld [vmem:[%s798 + $0x1060] sm:%s791]
                  %1325 = vst [vmem:[%s799 + $0x418] sm:%s791] %v1324
                  %v1326 = vld [vmem:[%s798 + $0x1070] sm:%s791]
                  %1327 = vst [vmem:[%s799 + $0x41c] sm:%s791] %v1326
                  %v1328 = vld [vmem:[%s798 + $0x1080] sm:%s791]
                  %1329 = vst [vmem:[%s799 + $0x420] sm:%s791] %v1328
                  %v1330 = vld [vmem:[%s798 + $0x1090] sm:%s791]
                  %1331 = vst [vmem:[%s799 + $0x424] sm:%s791] %v1330
                  %v1332 = vld [vmem:[%s798 + $0x10a0] sm:%s791]
                  %1333 = vst [vmem:[%s799 + $0x428] sm:%s791] %v1332
                  %v1334 = vld [vmem:[%s798 + $0x10b0] sm:%s791]
                  %1335 = vst [vmem:[%s799 + $0x42c] sm:%s791] %v1334
                  %v1336 = vld [vmem:[%s798 + $0x10c0] sm:%s791]
                  %1337 = vst [vmem:[%s799 + $0x430] sm:%s791] %v1336
                  %v1338 = vld [vmem:[%s798 + $0x10d0] sm:%s791]
                  %1339 = vst [vmem:[%s799 + $0x434] sm:%s791] %v1338
                  %v1340 = vld [vmem:[%s798 + $0x10e0] sm:%s791]
                  %1341 = vst [vmem:[%s799 + $0x438] sm:%s791] %v1340
                  %v1342 = vld [vmem:[%s798 + $0x10f0] sm:%s791]
                  %1343 = vst [vmem:[%s799 + $0x43c] sm:%s791] %v1342
                  %v1344 = vld [vmem:[%s798 + $0x1100] sm:%s791]
                  %1345 = vst [vmem:[%s799 + $0x440] sm:%s791] %v1344
                  %v1346 = vld [vmem:[%s798 + $0x1110] sm:%s791]
                  %1347 = vst [vmem:[%s799 + $0x444] sm:%s791] %v1346
                  %v1348 = vld [vmem:[%s798 + $0x1120] sm:%s791]
                  %1349 = vst [vmem:[%s799 + $0x448] sm:%s791] %v1348
                  %v1350 = vld [vmem:[%s798 + $0x1130] sm:%s791]
                  %1351 = vst [vmem:[%s799 + $0x44c] sm:%s791] %v1350
                  %v1352 = vld [vmem:[%s798 + $0x1140] sm:%s791]
                  %1353 = vst [vmem:[%s799 + $0x450] sm:%s791] %v1352
                  %v1354 = vld [vmem:[%s798 + $0x1150] sm:%s791]
                  %1355 = vst [vmem:[%s799 + $0x454] sm:%s791] %v1354
                  %v1356 = vld [vmem:[%s798 + $0x1160] sm:%s791]
                  %1357 = vst [vmem:[%s799 + $0x458] sm:%s791] %v1356
                  %v1358 = vld [vmem:[%s798 + $0x1170] sm:%s791]
                  %1359 = vst [vmem:[%s799 + $0x45c] sm:%s791] %v1358
                  %v1360 = vld [vmem:[%s798 + $0x1180] sm:%s791]
                  %1361 = vst [vmem:[%s799 + $0x460] sm:%s791] %v1360
                  %v1362 = vld [vmem:[%s798 + $0x1190] sm:%s791]
                  %1363 = vst [vmem:[%s799 + $0x464] sm:%s791] %v1362
                  %v1364 = vld [vmem:[%s798 + $0x11a0] sm:%s791]
                  %1365 = vst [vmem:[%s799 + $0x468] sm:%s791] %v1364
                  %v1366 = vld [vmem:[%s798 + $0x11b0] sm:%s791]
                  %1367 = vst [vmem:[%s799 + $0x46c] sm:%s791] %v1366
                  %v1368 = vld [vmem:[%s798 + $0x11c0] sm:%s791]
                  %1369 = vst [vmem:[%s799 + $0x470] sm:%s791] %v1368
                  %v1370 = vld [vmem:[%s798 + $0x11d0] sm:%s791]
                  %1371 = vst [vmem:[%s799 + $0x474] sm:%s791] %v1370
                  %v1372 = vld [vmem:[%s798 + $0x11e0] sm:%s791]
                  %1373 = vst [vmem:[%s799 + $0x478] sm:%s791] %v1372
                  %v1374 = vld [vmem:[%s798 + $0x11f0] sm:%s791]
                  %1375 = vst [vmem:[%s799 + $0x47c] sm:%s791] %v1374
                $region71: #{edge_decoder_pallas.1} parent=58 // loop_footer
                  %s797 = sadd.s32 1, %s793
                $region72: #{edge_decoder_pallas.1} parent=58 // loop_footer_branch
                  %792 = sbr.rel target = $region68
                $region73: #{edge_decoder_pallas.1} parent=58 // loop_exit
                  _
              $region59: #{edge_decoder_pallas.1} parent=43 // pred_fallthru
                _
            $region44: #{edge_decoder_pallas.1} parent=39 // pred_fallthru
              _
            // Predicated region
            $region45: #{edge_decoder_pallas.1} parent=39 // pred_check
              _
            $region46: #{edge_decoder_pallas.1} parent=39 // pred_check_branch
              %193 = sbr.rel (0) target = $region48
            $region47: #{edge_decoder_pallas.1} parent=39 // pred_region
              %s195 = ssub.s32 16, 1
              loop: start=0, step=1, limit=1
              $region49: #{edge_decoder_pallas.1} parent=47 // loop_pre_header
                _
              $region50: #{edge_decoder_pallas.1} parent=47 // loop_header
                %s197 = sphi 0, %s201
                %p198 = scmp.ge.s32.totalorder %s197, 1
                %s202 = sphi %s187, %s187
                %s203 = sphi %s185, %s185
              $region51: #{edge_decoder_pallas.1} parent=47 // loop_header_branch
                %200 = sbr.rel (%p198) target = $region55
              $region52: #{edge_decoder_pallas.1} parent=47 // loop_body
                %v204 = vld [vmem:[%s202] sm:%s195]
                %205 = vst [vmem:[%s203] sm:%s195] %v204
                %v206 = vld [vmem:[%s202 + $0x10] sm:%s195]
                %207 = vst [vmem:[%s203 + $0x4] sm:%s195] %v206
                %v208 = vld [vmem:[%s202 + $0x20] sm:%s195]
                %209 = vst [vmem:[%s203 + $0x8] sm:%s195] %v208
                %v210 = vld [vmem:[%s202 + $0x30] sm:%s195]
                %211 = vst [vmem:[%s203 + $0xc] sm:%s195] %v210
                %v212 = vld [vmem:[%s202 + $0x40] sm:%s195]
                %213 = vst [vmem:[%s203 + $0x10] sm:%s195] %v212
                %v214 = vld [vmem:[%s202 + $0x50] sm:%s195]
                %215 = vst [vmem:[%s203 + $0x14] sm:%s195] %v214
                %v216 = vld [vmem:[%s202 + $0x60] sm:%s195]
                %217 = vst [vmem:[%s203 + $0x18] sm:%s195] %v216
                %v218 = vld [vmem:[%s202 + $0x70] sm:%s195]
                %219 = vst [vmem:[%s203 + $0x1c] sm:%s195] %v218
                %v220 = vld [vmem:[%s202 + $0x80] sm:%s195]
                %221 = vst [vmem:[%s203 + $0x20] sm:%s195] %v220
                %v222 = vld [vmem:[%s202 + $0x90] sm:%s195]
                %223 = vst [vmem:[%s203 + $0x24] sm:%s195] %v222
                %v224 = vld [vmem:[%s202 + $0xa0] sm:%s195]
                %225 = vst [vmem:[%s203 + $0x28] sm:%s195] %v224
                %v226 = vld [vmem:[%s202 + $0xb0] sm:%s195]
                %227 = vst [vmem:[%s203 + $0x2c] sm:%s195] %v226
                %v228 = vld [vmem:[%s202 + $0xc0] sm:%s195]
                %229 = vst [vmem:[%s203 + $0x30] sm:%s195] %v228
                %v230 = vld [vmem:[%s202 + $0xd0] sm:%s195]
                %231 = vst [vmem:[%s203 + $0x34] sm:%s195] %v230
                %v232 = vld [vmem:[%s202 + $0xe0] sm:%s195]
                %233 = vst [vmem:[%s203 + $0x38] sm:%s195] %v232
                %v234 = vld [vmem:[%s202 + $0xf0] sm:%s195]
                %235 = vst [vmem:[%s203 + $0x3c] sm:%s195] %v234
                %v236 = vld [vmem:[%s202 + $0x100] sm:%s195]
                %237 = vst [vmem:[%s203 + $0x40] sm:%s195] %v236
                %v238 = vld [vmem:[%s202 + $0x110] sm:%s195]
                %239 = vst [vmem:[%s203 + $0x44] sm:%s195] %v238
                %v240 = vld [vmem:[%s202 + $0x120] sm:%s195]
                %241 = vst [vmem:[%s203 + $0x48] sm:%s195] %v240
                %v242 = vld [vmem:[%s202 + $0x130] sm:%s195]
                %243 = vst [vmem:[%s203 + $0x4c] sm:%s195] %v242
                %v244 = vld [vmem:[%s202 + $0x140] sm:%s195]
                %245 = vst [vmem:[%s203 + $0x50] sm:%s195] %v244
                %v246 = vld [vmem:[%s202 + $0x150] sm:%s195]
                %247 = vst [vmem:[%s203 + $0x54] sm:%s195] %v246
                %v248 = vld [vmem:[%s202 + $0x160] sm:%s195]
                %249 = vst [vmem:[%s203 + $0x58] sm:%s195] %v248
                %v250 = vld [vmem:[%s202 + $0x170] sm:%s195]
                %251 = vst [vmem:[%s203 + $0x5c] sm:%s195] %v250
                %v252 = vld [vmem:[%s202 + $0x180] sm:%s195]
                %253 = vst [vmem:[%s203 + $0x60] sm:%s195] %v252
                %v254 = vld [vmem:[%s202 + $0x190] sm:%s195]
                %255 = vst [vmem:[%s203 + $0x64] sm:%s195] %v254
                %v256 = vld [vmem:[%s202 + $0x1a0] sm:%s195]
                %257 = vst [vmem:[%s203 + $0x68] sm:%s195] %v256
                %v258 = vld [vmem:[%s202 + $0x1b0] sm:%s195]
                %259 = vst [vmem:[%s203 + $0x6c] sm:%s195] %v258
                %v260 = vld [vmem:[%s202 + $0x1c0] sm:%s195]
                %261 = vst [vmem:[%s203 + $0x70] sm:%s195] %v260
                %v262 = vld [vmem:[%s202 + $0x1d0] sm:%s195]
                %263 = vst [vmem:[%s203 + $0x74] sm:%s195] %v262
                %v264 = vld [vmem:[%s202 + $0x1e0] sm:%s195]
                %265 = vst [vmem:[%s203 + $0x78] sm:%s195] %v264
                %v266 = vld [vmem:[%s202 + $0x1f0] sm:%s195]
                %267 = vst [vmem:[%s203 + $0x7c] sm:%s195] %v266
                %v268 = vld [vmem:[%s202 + $0x200] sm:%s195]
                %269 = vst [vmem:[%s203 + $0x80] sm:%s195] %v268
                %v270 = vld [vmem:[%s202 + $0x210] sm:%s195]
                %271 = vst [vmem:[%s203 + $0x84] sm:%s195] %v270
                %v272 = vld [vmem:[%s202 + $0x220] sm:%s195]
                %273 = vst [vmem:[%s203 + $0x88] sm:%s195] %v272
                %v274 = vld [vmem:[%s202 + $0x230] sm:%s195]
                %275 = vst [vmem:[%s203 + $0x8c] sm:%s195] %v274
                %v276 = vld [vmem:[%s202 + $0x240] sm:%s195]
                %277 = vst [vmem:[%s203 + $0x90] sm:%s195] %v276
                %v278 = vld [vmem:[%s202 + $0x250] sm:%s195]
                %279 = vst [vmem:[%s203 + $0x94] sm:%s195] %v278
                %v280 = vld [vmem:[%s202 + $0x260] sm:%s195]
                %281 = vst [vmem:[%s203 + $0x98] sm:%s195] %v280
                %v282 = vld [vmem:[%s202 + $0x270] sm:%s195]
                %283 = vst [vmem:[%s203 + $0x9c] sm:%s195] %v282
                %v284 = vld [vmem:[%s202 + $0x280] sm:%s195]
                %285 = vst [vmem:[%s203 + $0xa0] sm:%s195] %v284
                %v286 = vld [vmem:[%s202 + $0x290] sm:%s195]
                %287 = vst [vmem:[%s203 + $0xa4] sm:%s195] %v286
                %v288 = vld [vmem:[%s202 + $0x2a0] sm:%s195]
                %289 = vst [vmem:[%s203 + $0xa8] sm:%s195] %v288
                %v290 = vld [vmem:[%s202 + $0x2b0] sm:%s195]
                %291 = vst [vmem:[%s203 + $0xac] sm:%s195] %v290
                %v292 = vld [vmem:[%s202 + $0x2c0] sm:%s195]
                %293 = vst [vmem:[%s203 + $0xb0] sm:%s195] %v292
                %v294 = vld [vmem:[%s202 + $0x2d0] sm:%s195]
                %295 = vst [vmem:[%s203 + $0xb4] sm:%s195] %v294
                %v296 = vld [vmem:[%s202 + $0x2e0] sm:%s195]
                %297 = vst [vmem:[%s203 + $0xb8] sm:%s195] %v296
                %v298 = vld [vmem:[%s202 + $0x2f0] sm:%s195]
                %299 = vst [vmem:[%s203 + $0xbc] sm:%s195] %v298
                %v300 = vld [vmem:[%s202 + $0x300] sm:%s195]
                %301 = vst [vmem:[%s203 + $0xc0] sm:%s195] %v300
                %v302 = vld [vmem:[%s202 + $0x310] sm:%s195]
                %303 = vst [vmem:[%s203 + $0xc4] sm:%s195] %v302
                %v304 = vld [vmem:[%s202 + $0x320] sm:%s195]
                %305 = vst [vmem:[%s203 + $0xc8] sm:%s195] %v304
                %v306 = vld [vmem:[%s202 + $0x330] sm:%s195]
                %307 = vst [vmem:[%s203 + $0xcc] sm:%s195] %v306
                %v308 = vld [vmem:[%s202 + $0x340] sm:%s195]
                %309 = vst [vmem:[%s203 + $0xd0] sm:%s195] %v308
                %v310 = vld [vmem:[%s202 + $0x350] sm:%s195]
                %311 = vst [vmem:[%s203 + $0xd4] sm:%s195] %v310
                %v312 = vld [vmem:[%s202 + $0x360] sm:%s195]
                %313 = vst [vmem:[%s203 + $0xd8] sm:%s195] %v312
                %v314 = vld [vmem:[%s202 + $0x370] sm:%s195]
                %315 = vst [vmem:[%s203 + $0xdc] sm:%s195] %v314
                %v316 = vld [vmem:[%s202 + $0x380] sm:%s195]
                %317 = vst [vmem:[%s203 + $0xe0] sm:%s195] %v316
                %v318 = vld [vmem:[%s202 + $0x390] sm:%s195]
                %319 = vst [vmem:[%s203 + $0xe4] sm:%s195] %v318
                %v320 = vld [vmem:[%s202 + $0x3a0] sm:%s195]
                %321 = vst [vmem:[%s203 + $0xe8] sm:%s195] %v320
                %v322 = vld [vmem:[%s202 + $0x3b0] sm:%s195]
                %323 = vst [vmem:[%s203 + $0xec] sm:%s195] %v322
                %v324 = vld [vmem:[%s202 + $0x3c0] sm:%s195]
                %325 = vst [vmem:[%s203 + $0xf0] sm:%s195] %v324
                %v326 = vld [vmem:[%s202 + $0x3d0] sm:%s195]
                %327 = vst [vmem:[%s203 + $0xf4] sm:%s195] %v326
                %v328 = vld [vmem:[%s202 + $0x3e0] sm:%s195]
                %329 = vst [vmem:[%s203 + $0xf8] sm:%s195] %v328
                %v330 = vld [vmem:[%s202 + $0x3f0] sm:%s195]
                %331 = vst [vmem:[%s203 + $0xfc] sm:%s195] %v330
                %v332 = vld [vmem:[%s202 + $0x400] sm:%s195]
                %333 = vst [vmem:[%s203 + $0x100] sm:%s195] %v332
                %v334 = vld [vmem:[%s202 + $0x410] sm:%s195]
                %335 = vst [vmem:[%s203 + $0x104] sm:%s195] %v334
                %v336 = vld [vmem:[%s202 + $0x420] sm:%s195]
                %337 = vst [vmem:[%s203 + $0x108] sm:%s195] %v336
                %v338 = vld [vmem:[%s202 + $0x430] sm:%s195]
                %339 = vst [vmem:[%s203 + $0x10c] sm:%s195] %v338
                %v340 = vld [vmem:[%s202 + $0x440] sm:%s195]
                %341 = vst [vmem:[%s203 + $0x110] sm:%s195] %v340
                %v342 = vld [vmem:[%s202 + $0x450] sm:%s195]
                %343 = vst [vmem:[%s203 + $0x114] sm:%s195] %v342
                %v344 = vld [vmem:[%s202 + $0x460] sm:%s195]
                %345 = vst [vmem:[%s203 + $0x118] sm:%s195] %v344
                %v346 = vld [vmem:[%s202 + $0x470] sm:%s195]
                %347 = vst [vmem:[%s203 + $0x11c] sm:%s195] %v346
                %v348 = vld [vmem:[%s202 + $0x480] sm:%s195]
                %349 = vst [vmem:[%s203 + $0x120] sm:%s195] %v348
                %v350 = vld [vmem:[%s202 + $0x490] sm:%s195]
                %351 = vst [vmem:[%s203 + $0x124] sm:%s195] %v350
                %v352 = vld [vmem:[%s202 + $0x4a0] sm:%s195]
                %353 = vst [vmem:[%s203 + $0x128] sm:%s195] %v352
                %v354 = vld [vmem:[%s202 + $0x4b0] sm:%s195]
                %355 = vst [vmem:[%s203 + $0x12c] sm:%s195] %v354
                %v356 = vld [vmem:[%s202 + $0x4c0] sm:%s195]
                %357 = vst [vmem:[%s203 + $0x130] sm:%s195] %v356
                %v358 = vld [vmem:[%s202 + $0x4d0] sm:%s195]
                %359 = vst [vmem:[%s203 + $0x134] sm:%s195] %v358
                %v360 = vld [vmem:[%s202 + $0x4e0] sm:%s195]
                %361 = vst [vmem:[%s203 + $0x138] sm:%s195] %v360
                %v362 = vld [vmem:[%s202 + $0x4f0] sm:%s195]
                %363 = vst [vmem:[%s203 + $0x13c] sm:%s195] %v362
                %v364 = vld [vmem:[%s202 + $0x500] sm:%s195]
                %365 = vst [vmem:[%s203 + $0x140] sm:%s195] %v364
                %v366 = vld [vmem:[%s202 + $0x510] sm:%s195]
                %367 = vst [vmem:[%s203 + $0x144] sm:%s195] %v366
                %v368 = vld [vmem:[%s202 + $0x520] sm:%s195]
                %369 = vst [vmem:[%s203 + $0x148] sm:%s195] %v368
                %v370 = vld [vmem:[%s202 + $0x530] sm:%s195]
                %371 = vst [vmem:[%s203 + $0x14c] sm:%s195] %v370
                %v372 = vld [vmem:[%s202 + $0x540] sm:%s195]
                %373 = vst [vmem:[%s203 + $0x150] sm:%s195] %v372
                %v374 = vld [vmem:[%s202 + $0x550] sm:%s195]
                %375 = vst [vmem:[%s203 + $0x154] sm:%s195] %v374
                %v376 = vld [vmem:[%s202 + $0x560] sm:%s195]
                %377 = vst [vmem:[%s203 + $0x158] sm:%s195] %v376
                %v378 = vld [vmem:[%s202 + $0x570] sm:%s195]
                %379 = vst [vmem:[%s203 + $0x15c] sm:%s195] %v378
                %v380 = vld [vmem:[%s202 + $0x580] sm:%s195]
                %381 = vst [vmem:[%s203 + $0x160] sm:%s195] %v380
                %v382 = vld [vmem:[%s202 + $0x590] sm:%s195]
                %383 = vst [vmem:[%s203 + $0x164] sm:%s195] %v382
                %v384 = vld [vmem:[%s202 + $0x5a0] sm:%s195]
                %385 = vst [vmem:[%s203 + $0x168] sm:%s195] %v384
                %v386 = vld [vmem:[%s202 + $0x5b0] sm:%s195]
                %387 = vst [vmem:[%s203 + $0x16c] sm:%s195] %v386
                %v388 = vld [vmem:[%s202 + $0x5c0] sm:%s195]
                %389 = vst [vmem:[%s203 + $0x170] sm:%s195] %v388
                %v390 = vld [vmem:[%s202 + $0x5d0] sm:%s195]
                %391 = vst [vmem:[%s203 + $0x174] sm:%s195] %v390
                %v392 = vld [vmem:[%s202 + $0x5e0] sm:%s195]
                %393 = vst [vmem:[%s203 + $0x178] sm:%s195] %v392
                %v394 = vld [vmem:[%s202 + $0x5f0] sm:%s195]
                %395 = vst [vmem:[%s203 + $0x17c] sm:%s195] %v394
                %v396 = vld [vmem:[%s202 + $0x600] sm:%s195]
                %397 = vst [vmem:[%s203 + $0x180] sm:%s195] %v396
                %v398 = vld [vmem:[%s202 + $0x610] sm:%s195]
                %399 = vst [vmem:[%s203 + $0x184] sm:%s195] %v398
                %v400 = vld [vmem:[%s202 + $0x620] sm:%s195]
                %401 = vst [vmem:[%s203 + $0x188] sm:%s195] %v400
                %v402 = vld [vmem:[%s202 + $0x630] sm:%s195]
                %403 = vst [vmem:[%s203 + $0x18c] sm:%s195] %v402
                %v404 = vld [vmem:[%s202 + $0x640] sm:%s195]
                %405 = vst [vmem:[%s203 + $0x190] sm:%s195] %v404
                %v406 = vld [vmem:[%s202 + $0x650] sm:%s195]
                %407 = vst [vmem:[%s203 + $0x194] sm:%s195] %v406
                %v408 = vld [vmem:[%s202 + $0x660] sm:%s195]
                %409 = vst [vmem:[%s203 + $0x198] sm:%s195] %v408
                %v410 = vld [vmem:[%s202 + $0x670] sm:%s195]
                %411 = vst [vmem:[%s203 + $0x19c] sm:%s195] %v410
                %v412 = vld [vmem:[%s202 + $0x680] sm:%s195]
                %413 = vst [vmem:[%s203 + $0x1a0] sm:%s195] %v412
                %v414 = vld [vmem:[%s202 + $0x690] sm:%s195]
                %415 = vst [vmem:[%s203 + $0x1a4] sm:%s195] %v414
                %v416 = vld [vmem:[%s202 + $0x6a0] sm:%s195]
                %417 = vst [vmem:[%s203 + $0x1a8] sm:%s195] %v416
                %v418 = vld [vmem:[%s202 + $0x6b0] sm:%s195]
                %419 = vst [vmem:[%s203 + $0x1ac] sm:%s195] %v418
                %v420 = vld [vmem:[%s202 + $0x6c0] sm:%s195]
                %421 = vst [vmem:[%s203 + $0x1b0] sm:%s195] %v420
                %v422 = vld [vmem:[%s202 + $0x6d0] sm:%s195]
                %423 = vst [vmem:[%s203 + $0x1b4] sm:%s195] %v422
                %v424 = vld [vmem:[%s202 + $0x6e0] sm:%s195]
                %425 = vst [vmem:[%s203 + $0x1b8] sm:%s195] %v424
                %v426 = vld [vmem:[%s202 + $0x6f0] sm:%s195]
                %427 = vst [vmem:[%s203 + $0x1bc] sm:%s195] %v426
                %v428 = vld [vmem:[%s202 + $0x700] sm:%s195]
                %429 = vst [vmem:[%s203 + $0x1c0] sm:%s195] %v428
                %v430 = vld [vmem:[%s202 + $0x710] sm:%s195]
                %431 = vst [vmem:[%s203 + $0x1c4] sm:%s195] %v430
                %v432 = vld [vmem:[%s202 + $0x720] sm:%s195]
                %433 = vst [vmem:[%s203 + $0x1c8] sm:%s195] %v432
                %v434 = vld [vmem:[%s202 + $0x730] sm:%s195]
                %435 = vst [vmem:[%s203 + $0x1cc] sm:%s195] %v434
                %v436 = vld [vmem:[%s202 + $0x740] sm:%s195]
                %437 = vst [vmem:[%s203 + $0x1d0] sm:%s195] %v436
                %v438 = vld [vmem:[%s202 + $0x750] sm:%s195]
                %439 = vst [vmem:[%s203 + $0x1d4] sm:%s195] %v438
                %v440 = vld [vmem:[%s202 + $0x760] sm:%s195]
                %441 = vst [vmem:[%s203 + $0x1d8] sm:%s195] %v440
                %v442 = vld [vmem:[%s202 + $0x770] sm:%s195]
                %443 = vst [vmem:[%s203 + $0x1dc] sm:%s195] %v442
                %v444 = vld [vmem:[%s202 + $0x780] sm:%s195]
                %445 = vst [vmem:[%s203 + $0x1e0] sm:%s195] %v444
                %v446 = vld [vmem:[%s202 + $0x790] sm:%s195]
                %447 = vst [vmem:[%s203 + $0x1e4] sm:%s195] %v446
                %v448 = vld [vmem:[%s202 + $0x7a0] sm:%s195]
                %449 = vst [vmem:[%s203 + $0x1e8] sm:%s195] %v448
                %v450 = vld [vmem:[%s202 + $0x7b0] sm:%s195]
                %451 = vst [vmem:[%s203 + $0x1ec] sm:%s195] %v450
                %v452 = vld [vmem:[%s202 + $0x7c0] sm:%s195]
                %453 = vst [vmem:[%s203 + $0x1f0] sm:%s195] %v452
                %v454 = vld [vmem:[%s202 + $0x7d0] sm:%s195]
                %455 = vst [vmem:[%s203 + $0x1f4] sm:%s195] %v454
                %v456 = vld [vmem:[%s202 + $0x7e0] sm:%s195]
                %457 = vst [vmem:[%s203 + $0x1f8] sm:%s195] %v456
                %v458 = vld [vmem:[%s202 + $0x7f0] sm:%s195]
                %459 = vst [vmem:[%s203 + $0x1fc] sm:%s195] %v458
                %v460 = vld [vmem:[%s202 + $0x800] sm:%s195]
                %461 = vst [vmem:[%s203 + $0x200] sm:%s195] %v460
                %v462 = vld [vmem:[%s202 + $0x810] sm:%s195]
                %463 = vst [vmem:[%s203 + $0x204] sm:%s195] %v462
                %v464 = vld [vmem:[%s202 + $0x820] sm:%s195]
                %465 = vst [vmem:[%s203 + $0x208] sm:%s195] %v464
                %v466 = vld [vmem:[%s202 + $0x830] sm:%s195]
                %467 = vst [vmem:[%s203 + $0x20c] sm:%s195] %v466
                %v468 = vld [vmem:[%s202 + $0x840] sm:%s195]
                %469 = vst [vmem:[%s203 + $0x210] sm:%s195] %v468
                %v470 = vld [vmem:[%s202 + $0x850] sm:%s195]
                %471 = vst [vmem:[%s203 + $0x214] sm:%s195] %v470
                %v472 = vld [vmem:[%s202 + $0x860] sm:%s195]
                %473 = vst [vmem:[%s203 + $0x218] sm:%s195] %v472
                %v474 = vld [vmem:[%s202 + $0x870] sm:%s195]
                %475 = vst [vmem:[%s203 + $0x21c] sm:%s195] %v474
                %v476 = vld [vmem:[%s202 + $0x880] sm:%s195]
                %477 = vst [vmem:[%s203 + $0x220] sm:%s195] %v476
                %v478 = vld [vmem:[%s202 + $0x890] sm:%s195]
                %479 = vst [vmem:[%s203 + $0x224] sm:%s195] %v478
                %v480 = vld [vmem:[%s202 + $0x8a0] sm:%s195]
                %481 = vst [vmem:[%s203 + $0x228] sm:%s195] %v480
                %v482 = vld [vmem:[%s202 + $0x8b0] sm:%s195]
                %483 = vst [vmem:[%s203 + $0x22c] sm:%s195] %v482
                %v484 = vld [vmem:[%s202 + $0x8c0] sm:%s195]
                %485 = vst [vmem:[%s203 + $0x230] sm:%s195] %v484
                %v486 = vld [vmem:[%s202 + $0x8d0] sm:%s195]
                %487 = vst [vmem:[%s203 + $0x234] sm:%s195] %v486
                %v488 = vld [vmem:[%s202 + $0x8e0] sm:%s195]
                %489 = vst [vmem:[%s203 + $0x238] sm:%s195] %v488
                %v490 = vld [vmem:[%s202 + $0x8f0] sm:%s195]
                %491 = vst [vmem:[%s203 + $0x23c] sm:%s195] %v490
                %v492 = vld [vmem:[%s202 + $0x900] sm:%s195]
                %493 = vst [vmem:[%s203 + $0x240] sm:%s195] %v492
                %v494 = vld [vmem:[%s202 + $0x910] sm:%s195]
                %495 = vst [vmem:[%s203 + $0x244] sm:%s195] %v494
                %v496 = vld [vmem:[%s202 + $0x920] sm:%s195]
                %497 = vst [vmem:[%s203 + $0x248] sm:%s195] %v496
                %v498 = vld [vmem:[%s202 + $0x930] sm:%s195]
                %499 = vst [vmem:[%s203 + $0x24c] sm:%s195] %v498
                %v500 = vld [vmem:[%s202 + $0x940] sm:%s195]
                %501 = vst [vmem:[%s203 + $0x250] sm:%s195] %v500
                %v502 = vld [vmem:[%s202 + $0x950] sm:%s195]
                %503 = vst [vmem:[%s203 + $0x254] sm:%s195] %v502
                %v504 = vld [vmem:[%s202 + $0x960] sm:%s195]
                %505 = vst [vmem:[%s203 + $0x258] sm:%s195] %v504
                %v506 = vld [vmem:[%s202 + $0x970] sm:%s195]
                %507 = vst [vmem:[%s203 + $0x25c] sm:%s195] %v506
                %v508 = vld [vmem:[%s202 + $0x980] sm:%s195]
                %509 = vst [vmem:[%s203 + $0x260] sm:%s195] %v508
                %v510 = vld [vmem:[%s202 + $0x990] sm:%s195]
                %511 = vst [vmem:[%s203 + $0x264] sm:%s195] %v510
                %v512 = vld [vmem:[%s202 + $0x9a0] sm:%s195]
                %513 = vst [vmem:[%s203 + $0x268] sm:%s195] %v512
                %v514 = vld [vmem:[%s202 + $0x9b0] sm:%s195]
                %515 = vst [vmem:[%s203 + $0x26c] sm:%s195] %v514
                %v516 = vld [vmem:[%s202 + $0x9c0] sm:%s195]
                %517 = vst [vmem:[%s203 + $0x270] sm:%s195] %v516
                %v518 = vld [vmem:[%s202 + $0x9d0] sm:%s195]
                %519 = vst [vmem:[%s203 + $0x274] sm:%s195] %v518
                %v520 = vld [vmem:[%s202 + $0x9e0] sm:%s195]
                %521 = vst [vmem:[%s203 + $0x278] sm:%s195] %v520
                %v522 = vld [vmem:[%s202 + $0x9f0] sm:%s195]
                %523 = vst [vmem:[%s203 + $0x27c] sm:%s195] %v522
                %v524 = vld [vmem:[%s202 + $0xa00] sm:%s195]
                %525 = vst [vmem:[%s203 + $0x280] sm:%s195] %v524
                %v526 = vld [vmem:[%s202 + $0xa10] sm:%s195]
                %527 = vst [vmem:[%s203 + $0x284] sm:%s195] %v526
                %v528 = vld [vmem:[%s202 + $0xa20] sm:%s195]
                %529 = vst [vmem:[%s203 + $0x288] sm:%s195] %v528
                %v530 = vld [vmem:[%s202 + $0xa30] sm:%s195]
                %531 = vst [vmem:[%s203 + $0x28c] sm:%s195] %v530
                %v532 = vld [vmem:[%s202 + $0xa40] sm:%s195]
                %533 = vst [vmem:[%s203 + $0x290] sm:%s195] %v532
                %v534 = vld [vmem:[%s202 + $0xa50] sm:%s195]
                %535 = vst [vmem:[%s203 + $0x294] sm:%s195] %v534
                %v536 = vld [vmem:[%s202 + $0xa60] sm:%s195]
                %537 = vst [vmem:[%s203 + $0x298] sm:%s195] %v536
                %v538 = vld [vmem:[%s202 + $0xa70] sm:%s195]
                %539 = vst [vmem:[%s203 + $0x29c] sm:%s195] %v538
                %v540 = vld [vmem:[%s202 + $0xa80] sm:%s195]
                %541 = vst [vmem:[%s203 + $0x2a0] sm:%s195] %v540
                %v542 = vld [vmem:[%s202 + $0xa90] sm:%s195]
                %543 = vst [vmem:[%s203 + $0x2a4] sm:%s195] %v542
                %v544 = vld [vmem:[%s202 + $0xaa0] sm:%s195]
                %545 = vst [vmem:[%s203 + $0x2a8] sm:%s195] %v544
                %v546 = vld [vmem:[%s202 + $0xab0] sm:%s195]
                %547 = vst [vmem:[%s203 + $0x2ac] sm:%s195] %v546
                %v548 = vld [vmem:[%s202 + $0xac0] sm:%s195]
                %549 = vst [vmem:[%s203 + $0x2b0] sm:%s195] %v548
                %v550 = vld [vmem:[%s202 + $0xad0] sm:%s195]
                %551 = vst [vmem:[%s203 + $0x2b4] sm:%s195] %v550
                %v552 = vld [vmem:[%s202 + $0xae0] sm:%s195]
                %553 = vst [vmem:[%s203 + $0x2b8] sm:%s195] %v552
                %v554 = vld [vmem:[%s202 + $0xaf0] sm:%s195]
                %555 = vst [vmem:[%s203 + $0x2bc] sm:%s195] %v554
                %v556 = vld [vmem:[%s202 + $0xb00] sm:%s195]
                %557 = vst [vmem:[%s203 + $0x2c0] sm:%s195] %v556
                %v558 = vld [vmem:[%s202 + $0xb10] sm:%s195]
                %559 = vst [vmem:[%s203 + $0x2c4] sm:%s195] %v558
                %v560 = vld [vmem:[%s202 + $0xb20] sm:%s195]
                %561 = vst [vmem:[%s203 + $0x2c8] sm:%s195] %v560
                %v562 = vld [vmem:[%s202 + $0xb30] sm:%s195]
                %563 = vst [vmem:[%s203 + $0x2cc] sm:%s195] %v562
                %v564 = vld [vmem:[%s202 + $0xb40] sm:%s195]
                %565 = vst [vmem:[%s203 + $0x2d0] sm:%s195] %v564
                %v566 = vld [vmem:[%s202 + $0xb50] sm:%s195]
                %567 = vst [vmem:[%s203 + $0x2d4] sm:%s195] %v566
                %v568 = vld [vmem:[%s202 + $0xb60] sm:%s195]
                %569 = vst [vmem:[%s203 + $0x2d8] sm:%s195] %v568
                %v570 = vld [vmem:[%s202 + $0xb70] sm:%s195]
                %571 = vst [vmem:[%s203 + $0x2dc] sm:%s195] %v570
                %v572 = vld [vmem:[%s202 + $0xb80] sm:%s195]
                %573 = vst [vmem:[%s203 + $0x2e0] sm:%s195] %v572
                %v574 = vld [vmem:[%s202 + $0xb90] sm:%s195]
                %575 = vst [vmem:[%s203 + $0x2e4] sm:%s195] %v574
                %v576 = vld [vmem:[%s202 + $0xba0] sm:%s195]
                %577 = vst [vmem:[%s203 + $0x2e8] sm:%s195] %v576
                %v578 = vld [vmem:[%s202 + $0xbb0] sm:%s195]
                %579 = vst [vmem:[%s203 + $0x2ec] sm:%s195] %v578
                %v580 = vld [vmem:[%s202 + $0xbc0] sm:%s195]
                %581 = vst [vmem:[%s203 + $0x2f0] sm:%s195] %v580
                %v582 = vld [vmem:[%s202 + $0xbd0] sm:%s195]
                %583 = vst [vmem:[%s203 + $0x2f4] sm:%s195] %v582
                %v584 = vld [vmem:[%s202 + $0xbe0] sm:%s195]
                %585 = vst [vmem:[%s203 + $0x2f8] sm:%s195] %v584
                %v586 = vld [vmem:[%s202 + $0xbf0] sm:%s195]
                %587 = vst [vmem:[%s203 + $0x2fc] sm:%s195] %v586
                %v588 = vld [vmem:[%s202 + $0xc00] sm:%s195]
                %589 = vst [vmem:[%s203 + $0x300] sm:%s195] %v588
                %v590 = vld [vmem:[%s202 + $0xc10] sm:%s195]
                %591 = vst [vmem:[%s203 + $0x304] sm:%s195] %v590
                %v592 = vld [vmem:[%s202 + $0xc20] sm:%s195]
                %593 = vst [vmem:[%s203 + $0x308] sm:%s195] %v592
                %v594 = vld [vmem:[%s202 + $0xc30] sm:%s195]
                %595 = vst [vmem:[%s203 + $0x30c] sm:%s195] %v594
                %v596 = vld [vmem:[%s202 + $0xc40] sm:%s195]
                %597 = vst [vmem:[%s203 + $0x310] sm:%s195] %v596
                %v598 = vld [vmem:[%s202 + $0xc50] sm:%s195]
                %599 = vst [vmem:[%s203 + $0x314] sm:%s195] %v598
                %v600 = vld [vmem:[%s202 + $0xc60] sm:%s195]
                %601 = vst [vmem:[%s203 + $0x318] sm:%s195] %v600
                %v602 = vld [vmem:[%s202 + $0xc70] sm:%s195]
                %603 = vst [vmem:[%s203 + $0x31c] sm:%s195] %v602
                %v604 = vld [vmem:[%s202 + $0xc80] sm:%s195]
                %605 = vst [vmem:[%s203 + $0x320] sm:%s195] %v604
                %v606 = vld [vmem:[%s202 + $0xc90] sm:%s195]
                %607 = vst [vmem:[%s203 + $0x324] sm:%s195] %v606
                %v608 = vld [vmem:[%s202 + $0xca0] sm:%s195]
                %609 = vst [vmem:[%s203 + $0x328] sm:%s195] %v608
                %v610 = vld [vmem:[%s202 + $0xcb0] sm:%s195]
                %611 = vst [vmem:[%s203 + $0x32c] sm:%s195] %v610
                %v612 = vld [vmem:[%s202 + $0xcc0] sm:%s195]
                %613 = vst [vmem:[%s203 + $0x330] sm:%s195] %v612
                %v614 = vld [vmem:[%s202 + $0xcd0] sm:%s195]
                %615 = vst [vmem:[%s203 + $0x334] sm:%s195] %v614
                %v616 = vld [vmem:[%s202 + $0xce0] sm:%s195]
                %617 = vst [vmem:[%s203 + $0x338] sm:%s195] %v616
                %v618 = vld [vmem:[%s202 + $0xcf0] sm:%s195]
                %619 = vst [vmem:[%s203 + $0x33c] sm:%s195] %v618
                %v620 = vld [vmem:[%s202 + $0xd00] sm:%s195]
                %621 = vst [vmem:[%s203 + $0x340] sm:%s195] %v620
                %v622 = vld [vmem:[%s202 + $0xd10] sm:%s195]
                %623 = vst [vmem:[%s203 + $0x344] sm:%s195] %v622
                %v624 = vld [vmem:[%s202 + $0xd20] sm:%s195]
                %625 = vst [vmem:[%s203 + $0x348] sm:%s195] %v624
                %v626 = vld [vmem:[%s202 + $0xd30] sm:%s195]
                %627 = vst [vmem:[%s203 + $0x34c] sm:%s195] %v626
                %v628 = vld [vmem:[%s202 + $0xd40] sm:%s195]
                %629 = vst [vmem:[%s203 + $0x350] sm:%s195] %v628
                %v630 = vld [vmem:[%s202 + $0xd50] sm:%s195]
                %631 = vst [vmem:[%s203 + $0x354] sm:%s195] %v630
                %v632 = vld [vmem:[%s202 + $0xd60] sm:%s195]
                %633 = vst [vmem:[%s203 + $0x358] sm:%s195] %v632
                %v634 = vld [vmem:[%s202 + $0xd70] sm:%s195]
                %635 = vst [vmem:[%s203 + $0x35c] sm:%s195] %v634
                %v636 = vld [vmem:[%s202 + $0xd80] sm:%s195]
                %637 = vst [vmem:[%s203 + $0x360] sm:%s195] %v636
                %v638 = vld [vmem:[%s202 + $0xd90] sm:%s195]
                %639 = vst [vmem:[%s203 + $0x364] sm:%s195] %v638
                %v640 = vld [vmem:[%s202 + $0xda0] sm:%s195]
                %641 = vst [vmem:[%s203 + $0x368] sm:%s195] %v640
                %v642 = vld [vmem:[%s202 + $0xdb0] sm:%s195]
                %643 = vst [vmem:[%s203 + $0x36c] sm:%s195] %v642
                %v644 = vld [vmem:[%s202 + $0xdc0] sm:%s195]
                %645 = vst [vmem:[%s203 + $0x370] sm:%s195] %v644
                %v646 = vld [vmem:[%s202 + $0xdd0] sm:%s195]
                %647 = vst [vmem:[%s203 + $0x374] sm:%s195] %v646
                %v648 = vld [vmem:[%s202 + $0xde0] sm:%s195]
                %649 = vst [vmem:[%s203 + $0x378] sm:%s195] %v648
                %v650 = vld [vmem:[%s202 + $0xdf0] sm:%s195]
                %651 = vst [vmem:[%s203 + $0x37c] sm:%s195] %v650
                %v652 = vld [vmem:[%s202 + $0xe00] sm:%s195]
                %653 = vst [vmem:[%s203 + $0x380] sm:%s195] %v652
                %v654 = vld [vmem:[%s202 + $0xe10] sm:%s195]
                %655 = vst [vmem:[%s203 + $0x384] sm:%s195] %v654
                %v656 = vld [vmem:[%s202 + $0xe20] sm:%s195]
                %657 = vst [vmem:[%s203 + $0x388] sm:%s195] %v656
                %v658 = vld [vmem:[%s202 + $0xe30] sm:%s195]
                %659 = vst [vmem:[%s203 + $0x38c] sm:%s195] %v658
                %v660 = vld [vmem:[%s202 + $0xe40] sm:%s195]
                %661 = vst [vmem:[%s203 + $0x390] sm:%s195] %v660
                %v662 = vld [vmem:[%s202 + $0xe50] sm:%s195]
                %663 = vst [vmem:[%s203 + $0x394] sm:%s195] %v662
                %v664 = vld [vmem:[%s202 + $0xe60] sm:%s195]
                %665 = vst [vmem:[%s203 + $0x398] sm:%s195] %v664
                %v666 = vld [vmem:[%s202 + $0xe70] sm:%s195]
                %667 = vst [vmem:[%s203 + $0x39c] sm:%s195] %v666
                %v668 = vld [vmem:[%s202 + $0xe80] sm:%s195]
                %669 = vst [vmem:[%s203 + $0x3a0] sm:%s195] %v668
                %v670 = vld [vmem:[%s202 + $0xe90] sm:%s195]
                %671 = vst [vmem:[%s203 + $0x3a4] sm:%s195] %v670
                %v672 = vld [vmem:[%s202 + $0xea0] sm:%s195]
                %673 = vst [vmem:[%s203 + $0x3a8] sm:%s195] %v672
                %v674 = vld [vmem:[%s202 + $0xeb0] sm:%s195]
                %675 = vst [vmem:[%s203 + $0x3ac] sm:%s195] %v674
                %v676 = vld [vmem:[%s202 + $0xec0] sm:%s195]
                %677 = vst [vmem:[%s203 + $0x3b0] sm:%s195] %v676
                %v678 = vld [vmem:[%s202 + $0xed0] sm:%s195]
                %679 = vst [vmem:[%s203 + $0x3b4] sm:%s195] %v678
                %v680 = vld [vmem:[%s202 + $0xee0] sm:%s195]
                %681 = vst [vmem:[%s203 + $0x3b8] sm:%s195] %v680
                %v682 = vld [vmem:[%s202 + $0xef0] sm:%s195]
                %683 = vst [vmem:[%s203 + $0x3bc] sm:%s195] %v682
                %v684 = vld [vmem:[%s202 + $0xf00] sm:%s195]
                %685 = vst [vmem:[%s203 + $0x3c0] sm:%s195] %v684
                %v686 = vld [vmem:[%s202 + $0xf10] sm:%s195]
                %687 = vst [vmem:[%s203 + $0x3c4] sm:%s195] %v686
                %v688 = vld [vmem:[%s202 + $0xf20] sm:%s195]
                %689 = vst [vmem:[%s203 + $0x3c8] sm:%s195] %v688
                %v690 = vld [vmem:[%s202 + $0xf30] sm:%s195]
                %691 = vst [vmem:[%s203 + $0x3cc] sm:%s195] %v690
                %v692 = vld [vmem:[%s202 + $0xf40] sm:%s195]
                %693 = vst [vmem:[%s203 + $0x3d0] sm:%s195] %v692
                %v694 = vld [vmem:[%s202 + $0xf50] sm:%s195]
                %695 = vst [vmem:[%s203 + $0x3d4] sm:%s195] %v694
                %v696 = vld [vmem:[%s202 + $0xf60] sm:%s195]
                %697 = vst [vmem:[%s203 + $0x3d8] sm:%s195] %v696
                %v698 = vld [vmem:[%s202 + $0xf70] sm:%s195]
                %699 = vst [vmem:[%s203 + $0x3dc] sm:%s195] %v698
                %v700 = vld [vmem:[%s202 + $0xf80] sm:%s195]
                %701 = vst [vmem:[%s203 + $0x3e0] sm:%s195] %v700
                %v702 = vld [vmem:[%s202 + $0xf90] sm:%s195]
                %703 = vst [vmem:[%s203 + $0x3e4] sm:%s195] %v702
                %v704 = vld [vmem:[%s202 + $0xfa0] sm:%s195]
                %705 = vst [vmem:[%s203 + $0x3e8] sm:%s195] %v704
                %v706 = vld [vmem:[%s202 + $0xfb0] sm:%s195]
                %707 = vst [vmem:[%s203 + $0x3ec] sm:%s195] %v706
                %v708 = vld [vmem:[%s202 + $0xfc0] sm:%s195]
                %709 = vst [vmem:[%s203 + $0x3f0] sm:%s195] %v708
                %v710 = vld [vmem:[%s202 + $0xfd0] sm:%s195]
                %711 = vst [vmem:[%s203 + $0x3f4] sm:%s195] %v710
                %v712 = vld [vmem:[%s202 + $0xfe0] sm:%s195]
                %713 = vst [vmem:[%s203 + $0x3f8] sm:%s195] %v712
                %v714 = vld [vmem:[%s202 + $0xff0] sm:%s195]
                %715 = vst [vmem:[%s203 + $0x3fc] sm:%s195] %v714
                %v716 = vld [vmem:[%s202 + $0x1000] sm:%s195]
                %717 = vst [vmem:[%s203 + $0x400] sm:%s195] %v716
                %v718 = vld [vmem:[%s202 + $0x1010] sm:%s195]
                %719 = vst [vmem:[%s203 + $0x404] sm:%s195] %v718
                %v720 = vld [vmem:[%s202 + $0x1020] sm:%s195]
                %721 = vst [vmem:[%s203 + $0x408] sm:%s195] %v720
                %v722 = vld [vmem:[%s202 + $0x1030] sm:%s195]
                %723 = vst [vmem:[%s203 + $0x40c] sm:%s195] %v722
                %v724 = vld [vmem:[%s202 + $0x1040] sm:%s195]
                %725 = vst [vmem:[%s203 + $0x410] sm:%s195] %v724
                %v726 = vld [vmem:[%s202 + $0x1050] sm:%s195]
                %727 = vst [vmem:[%s203 + $0x414] sm:%s195] %v726
                %v728 = vld [vmem:[%s202 + $0x1060] sm:%s195]
                %729 = vst [vmem:[%s203 + $0x418] sm:%s195] %v728
                %v730 = vld [vmem:[%s202 + $0x1070] sm:%s195]
                %731 = vst [vmem:[%s203 + $0x41c] sm:%s195] %v730
                %v732 = vld [vmem:[%s202 + $0x1080] sm:%s195]
                %733 = vst [vmem:[%s203 + $0x420] sm:%s195] %v732
                %v734 = vld [vmem:[%s202 + $0x1090] sm:%s195]
                %735 = vst [vmem:[%s203 + $0x424] sm:%s195] %v734
                %v736 = vld [vmem:[%s202 + $0x10a0] sm:%s195]
                %737 = vst [vmem:[%s203 + $0x428] sm:%s195] %v736
                %v738 = vld [vmem:[%s202 + $0x10b0] sm:%s195]
                %739 = vst [vmem:[%s203 + $0x42c] sm:%s195] %v738
                %v740 = vld [vmem:[%s202 + $0x10c0] sm:%s195]
                %741 = vst [vmem:[%s203 + $0x430] sm:%s195] %v740
                %v742 = vld [vmem:[%s202 + $0x10d0] sm:%s195]
                %743 = vst [vmem:[%s203 + $0x434] sm:%s195] %v742
                %v744 = vld [vmem:[%s202 + $0x10e0] sm:%s195]
                %745 = vst [vmem:[%s203 + $0x438] sm:%s195] %v744
                %v746 = vld [vmem:[%s202 + $0x10f0] sm:%s195]
                %747 = vst [vmem:[%s203 + $0x43c] sm:%s195] %v746
                %v748 = vld [vmem:[%s202 + $0x1100] sm:%s195]
                %749 = vst [vmem:[%s203 + $0x440] sm:%s195] %v748
                %v750 = vld [vmem:[%s202 + $0x1110] sm:%s195]
                %751 = vst [vmem:[%s203 + $0x444] sm:%s195] %v750
                %v752 = vld [vmem:[%s202 + $0x1120] sm:%s195]
                %753 = vst [vmem:[%s203 + $0x448] sm:%s195] %v752
                %v754 = vld [vmem:[%s202 + $0x1130] sm:%s195]
                %755 = vst [vmem:[%s203 + $0x44c] sm:%s195] %v754
                %v756 = vld [vmem:[%s202 + $0x1140] sm:%s195]
                %757 = vst [vmem:[%s203 + $0x450] sm:%s195] %v756
                %v758 = vld [vmem:[%s202 + $0x1150] sm:%s195]
                %759 = vst [vmem:[%s203 + $0x454] sm:%s195] %v758
                %v760 = vld [vmem:[%s202 + $0x1160] sm:%s195]
                %761 = vst [vmem:[%s203 + $0x458] sm:%s195] %v760
                %v762 = vld [vmem:[%s202 + $0x1170] sm:%s195]
                %763 = vst [vmem:[%s203 + $0x45c] sm:%s195] %v762
                %v764 = vld [vmem:[%s202 + $0x1180] sm:%s195]
                %765 = vst [vmem:[%s203 + $0x460] sm:%s195] %v764
                %v766 = vld [vmem:[%s202 + $0x1190] sm:%s195]
                %767 = vst [vmem:[%s203 + $0x464] sm:%s195] %v766
                %v768 = vld [vmem:[%s202 + $0x11a0] sm:%s195]
                %769 = vst [vmem:[%s203 + $0x468] sm:%s195] %v768
                %v770 = vld [vmem:[%s202 + $0x11b0] sm:%s195]
                %771 = vst [vmem:[%s203 + $0x46c] sm:%s195] %v770
                %v772 = vld [vmem:[%s202 + $0x11c0] sm:%s195]
                %773 = vst [vmem:[%s203 + $0x470] sm:%s195] %v772
                %v774 = vld [vmem:[%s202 + $0x11d0] sm:%s195]
                %775 = vst [vmem:[%s203 + $0x474] sm:%s195] %v774
                %v776 = vld [vmem:[%s202 + $0x11e0] sm:%s195]
                %777 = vst [vmem:[%s203 + $0x478] sm:%s195] %v776
                %v778 = vld [vmem:[%s202 + $0x11f0] sm:%s195]
                %779 = vst [vmem:[%s203 + $0x47c] sm:%s195] %v778
              $region53: #{edge_decoder_pallas.1} parent=47 // loop_footer
                %s201 = sadd.s32 1, %s197
              $region54: #{edge_decoder_pallas.1} parent=47 // loop_footer_branch
                %196 = sbr.rel target = $region50
              $region55: #{edge_decoder_pallas.1} parent=47 // loop_exit
                _
            $region48: #{edge_decoder_pallas.1} parent=39 // pred_fallthru
              _
          $region40: #{edge_decoder_pallas.1} parent=35 // pred_fallthru
            _
          %1376 = vnop
        $region36: #{edge_decoder_pallas.1} parent=31 // pred_fallthru
          _
      $region32: #{edge_decoder_pallas.1} parent=5 // pred_fallthru
        _
      %p1377 = scmp.le.s32.totalorder 1, %s12
      %p1378 = scmp.lt.s32.totalorder %s12, 5
      %p1379 = pnand %p1377, %p1378
      %p1380 = pneg %p1379
      // Predicated region
      $region74: #{edge_decoder_pallas.1} parent=5 // pred_check
        _
      $region75: #{edge_decoder_pallas.1} parent=5 // pred_check_branch
        %1382 = sbr.rel (%p1379) target = $region77
      $region76: #{edge_decoder_pallas.1} parent=5 // pred_region
        %s1383 = ssub.s32 %s12, 1
        %s1384 = sand.u32 %s25, 1
        %s1385 = sand.u32 %s25, 1
        %s1386 = smul.addr %s1385, 1152
        %s1387 = scalar_lea.vmem [#allocation3], %s1386
        // Predicated region
        $region78: #{edge_decoder_pallas.1} parent=76 // pred_check
          %p1388 = pneg %p38
        $region79: #{edge_decoder_pallas.1} parent=76 // pred_check_branch
          %1390 = sbr.rel (%p1388) target = $region81
        $region80: #{edge_decoder_pallas.1} parent=76 // pred_region
          _
        $region81: #{edge_decoder_pallas.1} parent=76 // pred_fallthru
          _
        %s1391 = sand.u32 %s25, 1
        %s1392 = sand.u32 %s25, 1
        %s1393 = smul.addr %s1392, 1152
        %s1394 = scalar_lea.vmem [#allocation3], %s1393
        %p1395 = pneg %p38
        %p1396 = pneg %p35
        %p1397 = pneg %p59
        %p1398 = pneg %p56
        %p1399 = pneg %p80
        %p1400 = pneg %p77
        %p1401 = pneg %p101
        %p1402 = pneg %p98
        %p1403 = pneg %p122
        %p1404 = pneg %p119
        %p1405 = pneg %p148
        %p1406 = pneg %p145
        %p1407 = scmp.lt.s32.totalorder %s17, 3
        %s1408 = scalar_select %p1407, %s17, 3
        %s1409 = scalar_lea.vmem %s5, %s1408
        %p1410 = scmp.lt.s32.totalorder %s17, 3
        %s1411 = scalar_select %p1410, %s17, 3
        %s1412 = scalar_lea.vmem %s5, %s1411
        %v1414 = vld [vmem:[%s1] sm:$0xff]
        %v1415 = vld [vmem:[%s1 + $0x8] sm:$0xff]
        %v1416 = vld [vmem:[%s1 + $0x10] sm:$0xff]
        %v1417 = vld [vmem:[%s1 + $0x18] sm:$0xff]
        %v1418 = vld [vmem:[%s1 + $0x20] sm:$0xff]
        %v1419 = vld [vmem:[%s1 + $0x28] sm:$0xff]
        %v1420 = vld [vmem:[%s1 + $0x30] sm:$0xff]
        %v1421 = vld [vmem:[%s1 + $0x38] sm:$0xff]
        %v1422 = vld [vmem:[%s1 + $0x40] sm:$0xff]
        %v1423 = vld [vmem:[%s1 + $0x48] sm:$0xff]
        %v1424 = vld [vmem:[%s1 + $0x50] sm:$0xff]
        %v1425 = vld [vmem:[%s1 + $0x58] sm:$0xff]
        %v1426 = vld [vmem:[%s1 + $0x60] sm:$0xff]
        %v1427 = vld [vmem:[%s1 + $0x68] sm:$0xff]
        %v1428 = vld [vmem:[%s1 + $0x70] sm:$0xff]
        %v1429 = vld [vmem:[%s1 + $0x78] sm:$0xff]
        %v1430 = vld [vmem:[%s1 + $0x80] sm:$0xff]
        %v1431 = vld [vmem:[%s1 + $0x88] sm:$0xff]
        %v1432 = vld [vmem:[%s1 + $0x90] sm:$0xff]
        %v1433 = vld [vmem:[%s1 + $0x98] sm:$0xff]
        %v1434 = vld [vmem:[%s1 + $0xa0] sm:$0xff]
        %v1435 = vld [vmem:[%s1 + $0xa8] sm:$0xff]
        %v1436 = vld [vmem:[%s1 + $0xb0] sm:$0xff]
        %v1437 = vld [vmem:[%s1 + $0xb8] sm:$0xff]
        %v1438 = vld [vmem:[%s1 + $0xc0] sm:$0xff]
        %v1439 = vld [vmem:[%s1 + $0xc8] sm:$0xff]
        %v1440 = vld [vmem:[%s1 + $0xd0] sm:$0xff]
        %v1441 = vld [vmem:[%s1 + $0xd8] sm:$0xff]
        %v1442 = vld [vmem:[%s1 + $0xe0] sm:$0xff]
        %v1443 = vld [vmem:[%s1 + $0xe8] sm:$0xff]
        %v1444 = vld [vmem:[%s1 + $0xf0] sm:$0xff]
        %v1445 = vld [vmem:[%s1 + $0xf8] sm:$0xff]
        %v1446 = vld [vmem:[%s1 + $0x100] sm:$0xff]
        %v1447 = vld [vmem:[%s1 + $0x108] sm:$0xff]
        %v1448 = vld [vmem:[%s1 + $0x110] sm:$0xff]
        %v1449 = vld [vmem:[%s1 + $0x118] sm:$0xff]
        %v1450 = vld [vmem:[%s1 + $0x120] sm:$0xff]
        %v1451 = vld [vmem:[%s1 + $0x128] sm:$0xff]
        %v1452 = vld [vmem:[%s1 + $0x130] sm:$0xff]
        %v1453 = vld [vmem:[%s1 + $0x138] sm:$0xff]
        %v1454 = vld [vmem:[%s1 + $0x140] sm:$0xff]
        %v1455 = vld [vmem:[%s1 + $0x148] sm:$0xff]
        %v1456 = vld [vmem:[%s1 + $0x150] sm:$0xff]
        %v1457 = vld [vmem:[%s1 + $0x158] sm:$0xff]
        %v1458 = vld [vmem:[%s1 + $0x160] sm:$0xff]
        %v1459 = vld [vmem:[%s1 + $0x168] sm:$0xff]
        %v1460 = vld [vmem:[%s1 + $0x170] sm:$0xff]
        %v1461 = vld [vmem:[%s1 + $0x178] sm:$0xff]
        %v1462 = vld [vmem:[%s1 + $0x180] sm:$0xff]
        %v1463 = vld [vmem:[%s1 + $0x188] sm:$0xff]
        %v1464 = vld [vmem:[%s1 + $0x190] sm:$0xff]
        %v1465 = vld [vmem:[%s1 + $0x198] sm:$0xff]
        %v1466 = vld [vmem:[%s1 + $0x1a0] sm:$0xff]
        %v1467 = vld [vmem:[%s1 + $0x1a8] sm:$0xff]
        %v1468 = vld [vmem:[%s1 + $0x1b0] sm:$0xff]
        %v1469 = vld [vmem:[%s1 + $0x1b8] sm:$0xff]
        %v1470 = vld [vmem:[%s1 + $0x1c0] sm:$0xff]
        %v1471 = vld [vmem:[%s1 + $0x1c8] sm:$0xff]
        %v1472 = vld [vmem:[%s1 + $0x1d0] sm:$0xff]
        %v1473 = vld [vmem:[%s1 + $0x1d8] sm:$0xff]
        %v1474 = vld [vmem:[%s1 + $0x1e0] sm:$0xff]
        %v1475 = vld [vmem:[%s1 + $0x1e8] sm:$0xff]
        %v1476 = vld [vmem:[%s1 + $0x1f0] sm:$0xff]
        %v1477 = vld [vmem:[%s1 + $0x1f8] sm:$0xff]
        %v1478 = vld [vmem:[%s1 + $0x200] sm:$0xff]
        %v1479 = vld [vmem:[%s1 + $0x208] sm:$0xff]
        %v1480 = vld [vmem:[%s1 + $0x210] sm:$0xff]
        %v1481 = vld [vmem:[%s1 + $0x218] sm:$0xff]
        %v1482 = vld [vmem:[%s1 + $0x220] sm:$0xff]
        %v1483 = vld [vmem:[%s1 + $0x228] sm:$0xff]
        %v1484 = vld [vmem:[%s1 + $0x230] sm:$0xff]
        %v1485 = vld [vmem:[%s1 + $0x238] sm:$0xff]
        %v1486 = vld [vmem:[%s1 + $0x240] sm:$0xff]
        %v1487 = vld [vmem:[%s1 + $0x248] sm:$0xff]
        %v1488 = vld [vmem:[%s1 + $0x250] sm:$0xff]
        %v1489 = vld [vmem:[%s1 + $0x258] sm:$0xff]
        %v1490 = vld [vmem:[%s1 + $0x260] sm:$0xff]
        %v1491 = vld [vmem:[%s1 + $0x268] sm:$0xff]
        %v1492 = vld [vmem:[%s1 + $0x270] sm:$0xff]
        %v1493 = vld [vmem:[%s1 + $0x278] sm:$0xff]
        %v1494 = vld [vmem:[%s1 + $0x280] sm:$0xff]
        %v1495 = vld [vmem:[%s1 + $0x288] sm:$0xff]
        %v1496 = vld [vmem:[%s1 + $0x290] sm:$0xff]
        %v1497 = vld [vmem:[%s1 + $0x298] sm:$0xff]
        %v1498 = vld [vmem:[%s1 + $0x2a0] sm:$0xff]
        %v1499 = vld [vmem:[%s1 + $0x2a8] sm:$0xff]
        %v1500 = vld [vmem:[%s1 + $0x2b0] sm:$0xff]
        %v1501 = vld [vmem:[%s1 + $0x2b8] sm:$0xff]
        %v1502 = vld [vmem:[%s1 + $0x2c0] sm:$0xff]
        %v1503 = vld [vmem:[%s1 + $0x2c8] sm:$0xff]
        %v1504 = vld [vmem:[%s1 + $0x2d0] sm:$0xff]
        %v1505 = vld [vmem:[%s1 + $0x2d8] sm:$0xff]
        %v1506 = vld [vmem:[%s1 + $0x2e0] sm:$0xff]
        %v1507 = vld [vmem:[%s1 + $0x2e8] sm:$0xff]
        %v1508 = vld [vmem:[%s1 + $0x2f0] sm:$0xff]
        %v1509 = vld [vmem:[%s1 + $0x2f8] sm:$0xff]
        %v1510 = vld [vmem:[%s1 + $0x300] sm:$0xff]
        %v1511 = vld [vmem:[%s1 + $0x308] sm:$0xff]
        %v1512 = vld [vmem:[%s1 + $0x310] sm:$0xff]
        %v1513 = vld [vmem:[%s1 + $0x318] sm:$0xff]
        %v1514 = vld [vmem:[%s1 + $0x320] sm:$0xff]
        %v1515 = vld [vmem:[%s1 + $0x328] sm:$0xff]
        %v1516 = vld [vmem:[%s1 + $0x330] sm:$0xff]
        %v1517 = vld [vmem:[%s1 + $0x338] sm:$0xff]
        %v1518 = vld [vmem:[%s1 + $0x340] sm:$0xff]
        %v1519 = vld [vmem:[%s1 + $0x348] sm:$0xff]
        %v1520 = vld [vmem:[%s1 + $0x350] sm:$0xff]
        %v1521 = vld [vmem:[%s1 + $0x358] sm:$0xff]
        %v1522 = vld [vmem:[%s1 + $0x360] sm:$0xff]
        %v1523 = vld [vmem:[%s1 + $0x368] sm:$0xff]
        %v1524 = vld [vmem:[%s1 + $0x370] sm:$0xff]
        %v1525 = vld [vmem:[%s1 + $0x378] sm:$0xff]
        %v1526 = vld [vmem:[%s1 + $0x380] sm:$0xff]
        %v1527 = vld [vmem:[%s1 + $0x388] sm:$0xff]
        %v1528 = vld [vmem:[%s1 + $0x390] sm:$0xff]
        %v1529 = vld [vmem:[%s1 + $0x398] sm:$0xff]
        %v1530 = vld [vmem:[%s1 + $0x3a0] sm:$0xff]
        %v1531 = vld [vmem:[%s1 + $0x3a8] sm:$0xff]
        %v1532 = vld [vmem:[%s1 + $0x3b0] sm:$0xff]
        %v1533 = vld [vmem:[%s1 + $0x3b8] sm:$0xff]
        %v1534 = vld [vmem:[%s1 + $0x3c0] sm:$0xff]
        %v1535 = vld [vmem:[%s1 + $0x3c8] sm:$0xff]
        %v1536 = vld [vmem:[%s1 + $0x3d0] sm:$0xff]
        %v1537 = vld [vmem:[%s1 + $0x3d8] sm:$0xff]
        %v1538 = vld [vmem:[%s1 + $0x3e0] sm:$0xff]
        %v1539 = vld [vmem:[%s1 + $0x3e8] sm:$0xff]
        %v1540 = vld [vmem:[%s1 + $0x3f0] sm:$0xff]
        %v1541 = vld [vmem:[%s1 + $0x3f8] sm:$0xff]
        %v1542 = vld [vmem:[%s1 + $0x400] sm:$0xff]
        %v1543 = vld [vmem:[%s1 + $0x408] sm:$0xff]
        %v1544 = vld [vmem:[%s1 + $0x410] sm:$0xff]
        %v1545 = vld [vmem:[%s1 + $0x418] sm:$0xff]
        %v1546 = vld [vmem:[%s1 + $0x420] sm:$0xff]
        %v1547 = vld [vmem:[%s1 + $0x428] sm:$0xff]
        %v1548 = vld [vmem:[%s1 + $0x430] sm:$0xff]
        %v1549 = vld [vmem:[%s1 + $0x438] sm:$0xff]
        %v1550 = vld [vmem:[%s1 + $0x440] sm:$0xff]
        %v1551 = vld [vmem:[%s1 + $0x448] sm:$0xff]
        %v1552 = vld [vmem:[%s1 + $0x450] sm:$0xff]
        %v1553 = vld [vmem:[%s1 + $0x458] sm:$0xff]
        %v1554 = vld [vmem:[%s1 + $0x460] sm:$0xff]
        %v1555 = vld [vmem:[%s1 + $0x468] sm:$0xff]
        %v1556 = vld [vmem:[%s1 + $0x470] sm:$0xff]
        %v1557 = vld [vmem:[%s1 + $0x478] sm:$0xff]
        %v1558 = vld [vmem:[%s1387] sm:$0xf]
        %v1559 = vld [vmem:[%s1387 + $0x4] sm:$0xf]
        %v1560 = vld [vmem:[%s1387 + $0x8] sm:$0xf]
        %v1561 = vld [vmem:[%s1387 + $0xc] sm:$0xf]
        %v1562 = vld [vmem:[%s1387 + $0x10] sm:$0xf]
        %v1563 = vld [vmem:[%s1387 + $0x14] sm:$0xf]
        %v1564 = vld [vmem:[%s1387 + $0x18] sm:$0xf]
        %v1565 = vld [vmem:[%s1387 + $0x1c] sm:$0xf]
        %v1566 = vld [vmem:[%s1387 + $0x20] sm:$0xf]
        %v1567 = vld [vmem:[%s1387 + $0x24] sm:$0xf]
        %v1568 = vld [vmem:[%s1387 + $0x28] sm:$0xf]
        %v1569 = vld [vmem:[%s1387 + $0x2c] sm:$0xf]
        %v1570 = vld [vmem:[%s1387 + $0x30] sm:$0xf]
        %v1571 = vld [vmem:[%s1387 + $0x34] sm:$0xf]
        %v1572 = vld [vmem:[%s1387 + $0x38] sm:$0xf]
        %v1573 = vld [vmem:[%s1387 + $0x3c] sm:$0xf]
        %v1574 = vld [vmem:[%s1387 + $0x40] sm:$0xf]
        %v1575 = vld [vmem:[%s1387 + $0x44] sm:$0xf]
        %v1576 = vld [vmem:[%s1387 + $0x48] sm:$0xf]
        %v1577 = vld [vmem:[%s1387 + $0x4c] sm:$0xf]
        %v1578 = vld [vmem:[%s1387 + $0x50] sm:$0xf]
        %v1579 = vld [vmem:[%s1387 + $0x54] sm:$0xf]
        %v1580 = vld [vmem:[%s1387 + $0x58] sm:$0xf]
        %v1581 = vld [vmem:[%s1387 + $0x5c] sm:$0xf]
        %v1582 = vld [vmem:[%s1387 + $0x60] sm:$0xf]
        %v1583 = vld [vmem:[%s1387 + $0x64] sm:$0xf]
        %v1584 = vld [vmem:[%s1387 + $0x68] sm:$0xf]
        %v1585 = vld [vmem:[%s1387 + $0x6c] sm:$0xf]
        %v1586 = vld [vmem:[%s1387 + $0x70] sm:$0xf]
        %v1587 = vld [vmem:[%s1387 + $0x74] sm:$0xf]
        %v1588 = vld [vmem:[%s1387 + $0x78] sm:$0xf]
        %v1589 = vld [vmem:[%s1387 + $0x7c] sm:$0xf]
        %v1590 = vld [vmem:[%s1387 + $0x80] sm:$0xf]
        %v1591 = vld [vmem:[%s1387 + $0x84] sm:$0xf]
        %v1592 = vld [vmem:[%s1387 + $0x88] sm:$0xf]
        %v1593 = vld [vmem:[%s1387 + $0x8c] sm:$0xf]
        %v1594 = vld [vmem:[%s1387 + $0x90] sm:$0xf]
        %v1595 = vld [vmem:[%s1387 + $0x94] sm:$0xf]
        %v1596 = vld [vmem:[%s1387 + $0x98] sm:$0xf]
        %v1597 = vld [vmem:[%s1387 + $0x9c] sm:$0xf]
        %v1598 = vld [vmem:[%s1387 + $0xa0] sm:$0xf]
        %v1599 = vld [vmem:[%s1387 + $0xa4] sm:$0xf]
        %v1600 = vld [vmem:[%s1387 + $0xa8] sm:$0xf]
        %v1601 = vld [vmem:[%s1387 + $0xac] sm:$0xf]
        %v1602 = vld [vmem:[%s1387 + $0xb0] sm:$0xf]
        %v1603 = vld [vmem:[%s1387 + $0xb4] sm:$0xf]
        %v1604 = vld [vmem:[%s1387 + $0xb8] sm:$0xf]
        %v1605 = vld [vmem:[%s1387 + $0xbc] sm:$0xf]
        %v1606 = vld [vmem:[%s1387 + $0xc0] sm:$0xf]
        %v1607 = vld [vmem:[%s1387 + $0xc4] sm:$0xf]
        %v1608 = vld [vmem:[%s1387 + $0xc8] sm:$0xf]
        %v1609 = vld [vmem:[%s1387 + $0xcc] sm:$0xf]
        %v1610 = vld [vmem:[%s1387 + $0xd0] sm:$0xf]
        %v1611 = vld [vmem:[%s1387 + $0xd4] sm:$0xf]
        %v1612 = vld [vmem:[%s1387 + $0xd8] sm:$0xf]
        %v1613 = vld [vmem:[%s1387 + $0xdc] sm:$0xf]
        %v1614 = vld [vmem:[%s1387 + $0xe0] sm:$0xf]
        %v1615 = vld [vmem:[%s1387 + $0xe4] sm:$0xf]
        %v1616 = vld [vmem:[%s1387 + $0xe8] sm:$0xf]
        %v1617 = vld [vmem:[%s1387 + $0xec] sm:$0xf]
        %v1618 = vld [vmem:[%s1387 + $0xf0] sm:$0xf]
        %v1619 = vld [vmem:[%s1387 + $0xf4] sm:$0xf]
        %v1620 = vld [vmem:[%s1387 + $0xf8] sm:$0xf]
        %v1621 = vld [vmem:[%s1387 + $0xfc] sm:$0xf]
        %v1622 = vld [vmem:[%s1387 + $0x100] sm:$0xf]
        %v1623 = vld [vmem:[%s1387 + $0x104] sm:$0xf]
        %v1624 = vld [vmem:[%s1387 + $0x108] sm:$0xf]
        %v1625 = vld [vmem:[%s1387 + $0x10c] sm:$0xf]
        %v1626 = vld [vmem:[%s1387 + $0x110] sm:$0xf]
        %v1627 = vld [vmem:[%s1387 + $0x114] sm:$0xf]
        %v1628 = vld [vmem:[%s1387 + $0x118] sm:$0xf]
        %v1629 = vld [vmem:[%s1387 + $0x11c] sm:$0xf]
        %v1630 = vld [vmem:[%s1387 + $0x120] sm:$0xf]
        %v1631 = vld [vmem:[%s1387 + $0x124] sm:$0xf]
        %v1632 = vld [vmem:[%s1387 + $0x128] sm:$0xf]
        %v1633 = vld [vmem:[%s1387 + $0x12c] sm:$0xf]
        %v1634 = vld [vmem:[%s1387 + $0x130] sm:$0xf]
        %v1635 = vld [vmem:[%s1387 + $0x134] sm:$0xf]
        %v1636 = vld [vmem:[%s1387 + $0x138] sm:$0xf]
        %v1637 = vld [vmem:[%s1387 + $0x13c] sm:$0xf]
        %v1638 = vld [vmem:[%s1387 + $0x140] sm:$0xf]
        %v1639 = vld [vmem:[%s1387 + $0x144] sm:$0xf]
        %v1640 = vld [vmem:[%s1387 + $0x148] sm:$0xf]
        %v1641 = vld [vmem:[%s1387 + $0x14c] sm:$0xf]
        %v1642 = vld [vmem:[%s1387 + $0x150] sm:$0xf]
        %v1643 = vld [vmem:[%s1387 + $0x154] sm:$0xf]
        %v1644 = vld [vmem:[%s1387 + $0x158] sm:$0xf]
        %v1645 = vld [vmem:[%s1387 + $0x15c] sm:$0xf]
        %v1646 = vld [vmem:[%s1387 + $0x160] sm:$0xf]
        %v1647 = vld [vmem:[%s1387 + $0x164] sm:$0xf]
        %v1648 = vld [vmem:[%s1387 + $0x168] sm:$0xf]
        %v1649 = vld [vmem:[%s1387 + $0x16c] sm:$0xf]
        %v1650 = vld [vmem:[%s1387 + $0x170] sm:$0xf]
        %v1651 = vld [vmem:[%s1387 + $0x174] sm:$0xf]
        %v1652 = vld [vmem:[%s1387 + $0x178] sm:$0xf]
        %v1653 = vld [vmem:[%s1387 + $0x17c] sm:$0xf]
        %v1654 = vld [vmem:[%s1387 + $0x180] sm:$0xf]
        %v1655 = vld [vmem:[%s1387 + $0x184] sm:$0xf]
        %v1656 = vld [vmem:[%s1387 + $0x188] sm:$0xf]
        %v1657 = vld [vmem:[%s1387 + $0x18c] sm:$0xf]
        %v1658 = vld [vmem:[%s1387 + $0x190] sm:$0xf]
        %v1659 = vld [vmem:[%s1387 + $0x194] sm:$0xf]
        %v1660 = vld [vmem:[%s1387 + $0x198] sm:$0xf]
        %v1661 = vld [vmem:[%s1387 + $0x19c] sm:$0xf]
        %v1662 = vld [vmem:[%s1387 + $0x1a0] sm:$0xf]
        %v1663 = vld [vmem:[%s1387 + $0x1a4] sm:$0xf]
        %v1664 = vld [vmem:[%s1387 + $0x1a8] sm:$0xf]
        %v1665 = vld [vmem:[%s1387 + $0x1ac] sm:$0xf]
        %v1666 = vld [vmem:[%s1387 + $0x1b0] sm:$0xf]
        %v1667 = vld [vmem:[%s1387 + $0x1b4] sm:$0xf]
        %v1668 = vld [vmem:[%s1387 + $0x1b8] sm:$0xf]
        %v1669 = vld [vmem:[%s1387 + $0x1bc] sm:$0xf]
        %v1670 = vld [vmem:[%s1387 + $0x1c0] sm:$0xf]
        %v1671 = vld [vmem:[%s1387 + $0x1c4] sm:$0xf]
        %v1672 = vld [vmem:[%s1387 + $0x1c8] sm:$0xf]
        %v1673 = vld [vmem:[%s1387 + $0x1cc] sm:$0xf]
        %v1674 = vld [vmem:[%s1387 + $0x1d0] sm:$0xf]
        %v1675 = vld [vmem:[%s1387 + $0x1d4] sm:$0xf]
        %v1676 = vld [vmem:[%s1387 + $0x1d8] sm:$0xf]
        %v1677 = vld [vmem:[%s1387 + $0x1dc] sm:$0xf]
        %v1678 = vld [vmem:[%s1387 + $0x1e0] sm:$0xf]
        %v1679 = vld [vmem:[%s1387 + $0x1e4] sm:$0xf]
        %v1680 = vld [vmem:[%s1387 + $0x1e8] sm:$0xf]
        %v1681 = vld [vmem:[%s1387 + $0x1ec] sm:$0xf]
        %v1682 = vld [vmem:[%s1387 + $0x1f0] sm:$0xf]
        %v1683 = vld [vmem:[%s1387 + $0x1f4] sm:$0xf]
        %v1684 = vld [vmem:[%s1387 + $0x1f8] sm:$0xf]
        %v1685 = vld [vmem:[%s1387 + $0x1fc] sm:$0xf]
        %v1686 = vld [vmem:[%s1387 + $0x200] sm:$0xf]
        %v1687 = vld [vmem:[%s1387 + $0x204] sm:$0xf]
        %v1688 = vld [vmem:[%s1387 + $0x208] sm:$0xf]
        %v1689 = vld [vmem:[%s1387 + $0x20c] sm:$0xf]
        %v1690 = vld [vmem:[%s1387 + $0x210] sm:$0xf]
        %v1691 = vld [vmem:[%s1387 + $0x214] sm:$0xf]
        %v1692 = vld [vmem:[%s1387 + $0x218] sm:$0xf]
        %v1693 = vld [vmem:[%s1387 + $0x21c] sm:$0xf]
        %v1694 = vld [vmem:[%s1387 + $0x220] sm:$0xf]
        %v1695 = vld [vmem:[%s1387 + $0x224] sm:$0xf]
        %v1696 = vld [vmem:[%s1387 + $0x228] sm:$0xf]
        %v1697 = vld [vmem:[%s1387 + $0x22c] sm:$0xf]
        %v1698 = vld [vmem:[%s1387 + $0x230] sm:$0xf]
        %v1699 = vld [vmem:[%s1387 + $0x234] sm:$0xf]
        %v1700 = vld [vmem:[%s1387 + $0x238] sm:$0xf]
        %v1701 = vld [vmem:[%s1387 + $0x23c] sm:$0xf]
        %v1702 = vld [vmem:[%s1387 + $0x240] sm:$0xf]
        %v1703 = vld [vmem:[%s1387 + $0x244] sm:$0xf]
        %v1704 = vld [vmem:[%s1387 + $0x248] sm:$0xf]
        %v1705 = vld [vmem:[%s1387 + $0x24c] sm:$0xf]
        %v1706 = vld [vmem:[%s1387 + $0x250] sm:$0xf]
        %v1707 = vld [vmem:[%s1387 + $0x254] sm:$0xf]
        %v1708 = vld [vmem:[%s1387 + $0x258] sm:$0xf]
        %v1709 = vld [vmem:[%s1387 + $0x25c] sm:$0xf]
        %v1710 = vld [vmem:[%s1387 + $0x260] sm:$0xf]
        %v1711 = vld [vmem:[%s1387 + $0x264] sm:$0xf]
        %v1712 = vld [vmem:[%s1387 + $0x268] sm:$0xf]
        %v1713 = vld [vmem:[%s1387 + $0x26c] sm:$0xf]
        %v1714 = vld [vmem:[%s1387 + $0x270] sm:$0xf]
        %v1715 = vld [vmem:[%s1387 + $0x274] sm:$0xf]
        %v1716 = vld [vmem:[%s1387 + $0x278] sm:$0xf]
        %v1717 = vld [vmem:[%s1387 + $0x27c] sm:$0xf]
        %v1718 = vld [vmem:[%s1387 + $0x280] sm:$0xf]
        %v1719 = vld [vmem:[%s1387 + $0x284] sm:$0xf]
        %v1720 = vld [vmem:[%s1387 + $0x288] sm:$0xf]
        %v1721 = vld [vmem:[%s1387 + $0x28c] sm:$0xf]
        %v1722 = vld [vmem:[%s1387 + $0x290] sm:$0xf]
        %v1723 = vld [vmem:[%s1387 + $0x294] sm:$0xf]
        %v1724 = vld [vmem:[%s1387 + $0x298] sm:$0xf]
        %v1725 = vld [vmem:[%s1387 + $0x29c] sm:$0xf]
        %v1726 = vld [vmem:[%s1387 + $0x2a0] sm:$0xf]
        %v1727 = vld [vmem:[%s1387 + $0x2a4] sm:$0xf]
        %v1728 = vld [vmem:[%s1387 + $0x2a8] sm:$0xf]
        %v1729 = vld [vmem:[%s1387 + $0x2ac] sm:$0xf]
        %v1730 = vld [vmem:[%s1387 + $0x2b0] sm:$0xf]
        %v1731 = vld [vmem:[%s1387 + $0x2b4] sm:$0xf]
        %v1732 = vld [vmem:[%s1387 + $0x2b8] sm:$0xf]
        %v1733 = vld [vmem:[%s1387 + $0x2bc] sm:$0xf]
        %v1734 = vld [vmem:[%s1387 + $0x2c0] sm:$0xf]
        %v1735 = vld [vmem:[%s1387 + $0x2c4] sm:$0xf]
        %v1736 = vld [vmem:[%s1387 + $0x2c8] sm:$0xf]
        %v1737 = vld [vmem:[%s1387 + $0x2cc] sm:$0xf]
        %v1738 = vld [vmem:[%s1387 + $0x2d0] sm:$0xf]
        %v1739 = vld [vmem:[%s1387 + $0x2d4] sm:$0xf]
        %v1740 = vld [vmem:[%s1387 + $0x2d8] sm:$0xf]
        %v1741 = vld [vmem:[%s1387 + $0x2dc] sm:$0xf]
        %v1742 = vld [vmem:[%s1387 + $0x2e0] sm:$0xf]
        %v1743 = vld [vmem:[%s1387 + $0x2e4] sm:$0xf]
        %v1744 = vld [vmem:[%s1387 + $0x2e8] sm:$0xf]
        %v1745 = vld [vmem:[%s1387 + $0x2ec] sm:$0xf]
        %v1746 = vld [vmem:[%s1387 + $0x2f0] sm:$0xf]
        %v1747 = vld [vmem:[%s1387 + $0x2f4] sm:$0xf]
        %v1748 = vld [vmem:[%s1387 + $0x2f8] sm:$0xf]
        %v1749 = vld [vmem:[%s1387 + $0x2fc] sm:$0xf]
        %v1750 = vld [vmem:[%s1387 + $0x300] sm:$0xf]
        %v1751 = vld [vmem:[%s1387 + $0x304] sm:$0xf]
        %v1752 = vld [vmem:[%s1387 + $0x308] sm:$0xf]
        %v1753 = vld [vmem:[%s1387 + $0x30c] sm:$0xf]
        %v1754 = vld [vmem:[%s1387 + $0x310] sm:$0xf]
        %v1755 = vld [vmem:[%s1387 + $0x314] sm:$0xf]
        %v1756 = vld [vmem:[%s1387 + $0x318] sm:$0xf]
        %v1757 = vld [vmem:[%s1387 + $0x31c] sm:$0xf]
        %v1758 = vld [vmem:[%s1387 + $0x320] sm:$0xf]
        %v1759 = vld [vmem:[%s1387 + $0x324] sm:$0xf]
        %v1760 = vld [vmem:[%s1387 + $0x328] sm:$0xf]
        %v1761 = vld [vmem:[%s1387 + $0x32c] sm:$0xf]
        %v1762 = vld [vmem:[%s1387 + $0x330] sm:$0xf]
        %v1763 = vld [vmem:[%s1387 + $0x334] sm:$0xf]
        %v1764 = vld [vmem:[%s1387 + $0x338] sm:$0xf]
        %v1765 = vld [vmem:[%s1387 + $0x33c] sm:$0xf]
        %v1766 = vld [vmem:[%s1387 + $0x340] sm:$0xf]
        %v1767 = vld [vmem:[%s1387 + $0x344] sm:$0xf]
        %v1768 = vld [vmem:[%s1387 + $0x348] sm:$0xf]
        %v1769 = vld [vmem:[%s1387 + $0x34c] sm:$0xf]
        %v1770 = vld [vmem:[%s1387 + $0x350] sm:$0xf]
        %v1771 = vld [vmem:[%s1387 + $0x354] sm:$0xf]
        %v1772 = vld [vmem:[%s1387 + $0x358] sm:$0xf]
        %v1773 = vld [vmem:[%s1387 + $0x35c] sm:$0xf]
        %v1774 = vld [vmem:[%s1387 + $0x360] sm:$0xf]
        %v1775 = vld [vmem:[%s1387 + $0x364] sm:$0xf]
        %v1776 = vld [vmem:[%s1387 + $0x368] sm:$0xf]
        %v1777 = vld [vmem:[%s1387 + $0x36c] sm:$0xf]
        %v1778 = vld [vmem:[%s1387 + $0x370] sm:$0xf]
        %v1779 = vld [vmem:[%s1387 + $0x374] sm:$0xf]
        %v1780 = vld [vmem:[%s1387 + $0x378] sm:$0xf]
        %v1781 = vld [vmem:[%s1387 + $0x37c] sm:$0xf]
        %v1782 = vld [vmem:[%s1387 + $0x380] sm:$0xf]
        %v1783 = vld [vmem:[%s1387 + $0x384] sm:$0xf]
        %v1784 = vld [vmem:[%s1387 + $0x388] sm:$0xf]
        %v1785 = vld [vmem:[%s1387 + $0x38c] sm:$0xf]
        %v1786 = vld [vmem:[%s1387 + $0x390] sm:$0xf]
        %v1787 = vld [vmem:[%s1387 + $0x394] sm:$0xf]
        %v1788 = vld [vmem:[%s1387 + $0x398] sm:$0xf]
        %v1789 = vld [vmem:[%s1387 + $0x39c] sm:$0xf]
        %v1790 = vld [vmem:[%s1387 + $0x3a0] sm:$0xf]
        %v1791 = vld [vmem:[%s1387 + $0x3a4] sm:$0xf]
        %v1792 = vld [vmem:[%s1387 + $0x3a8] sm:$0xf]
        %v1793 = vld [vmem:[%s1387 + $0x3ac] sm:$0xf]
        %v1794 = vld [vmem:[%s1387 + $0x3b0] sm:$0xf]
        %v1795 = vld [vmem:[%s1387 + $0x3b4] sm:$0xf]
        %v1796 = vld [vmem:[%s1387 + $0x3b8] sm:$0xf]
        %v1797 = vld [vmem:[%s1387 + $0x3bc] sm:$0xf]
        %v1798 = vld [vmem:[%s1387 + $0x3c0] sm:$0xf]
        %v1799 = vld [vmem:[%s1387 + $0x3c4] sm:$0xf]
        %v1800 = vld [vmem:[%s1387 + $0x3c8] sm:$0xf]
        %v1801 = vld [vmem:[%s1387 + $0x3cc] sm:$0xf]
        %v1802 = vld [vmem:[%s1387 + $0x3d0] sm:$0xf]
        %v1803 = vld [vmem:[%s1387 + $0x3d4] sm:$0xf]
        %v1804 = vld [vmem:[%s1387 + $0x3d8] sm:$0xf]
        %v1805 = vld [vmem:[%s1387 + $0x3dc] sm:$0xf]
        %v1806 = vld [vmem:[%s1387 + $0x3e0] sm:$0xf]
        %v1807 = vld [vmem:[%s1387 + $0x3e4] sm:$0xf]
        %v1808 = vld [vmem:[%s1387 + $0x3e8] sm:$0xf]
        %v1809 = vld [vmem:[%s1387 + $0x3ec] sm:$0xf]
        %v1810 = vld [vmem:[%s1387 + $0x3f0] sm:$0xf]
        %v1811 = vld [vmem:[%s1387 + $0x3f4] sm:$0xf]
        %v1812 = vld [vmem:[%s1387 + $0x3f8] sm:$0xf]
        %v1813 = vld [vmem:[%s1387 + $0x3fc] sm:$0xf]
        %v1814 = vld [vmem:[%s1387 + $0x400] sm:$0xf]
        %v1815 = vld [vmem:[%s1387 + $0x404] sm:$0xf]
        %v1816 = vld [vmem:[%s1387 + $0x408] sm:$0xf]
        %v1817 = vld [vmem:[%s1387 + $0x40c] sm:$0xf]
        %v1818 = vld [vmem:[%s1387 + $0x410] sm:$0xf]
        %v1819 = vld [vmem:[%s1387 + $0x414] sm:$0xf]
        %v1820 = vld [vmem:[%s1387 + $0x418] sm:$0xf]
        %v1821 = vld [vmem:[%s1387 + $0x41c] sm:$0xf]
        %v1822 = vld [vmem:[%s1387 + $0x420] sm:$0xf]
        %v1823 = vld [vmem:[%s1387 + $0x424] sm:$0xf]
        %v1824 = vld [vmem:[%s1387 + $0x428] sm:$0xf]
        %v1825 = vld [vmem:[%s1387 + $0x42c] sm:$0xf]
        %v1826 = vld [vmem:[%s1387 + $0x430] sm:$0xf]
        %v1827 = vld [vmem:[%s1387 + $0x434] sm:$0xf]
        %v1828 = vld [vmem:[%s1387 + $0x438] sm:$0xf]
        %v1829 = vld [vmem:[%s1387 + $0x43c] sm:$0xf]
        %v1830 = vld [vmem:[%s1387 + $0x440] sm:$0xf]
        %v1831 = vld [vmem:[%s1387 + $0x444] sm:$0xf]
        %v1832 = vld [vmem:[%s1387 + $0x448] sm:$0xf]
        %v1833 = vld [vmem:[%s1387 + $0x44c] sm:$0xf]
        %v1834 = vld [vmem:[%s1387 + $0x450] sm:$0xf]
        %v1835 = vld [vmem:[%s1387 + $0x454] sm:$0xf]
        %v1836 = vld [vmem:[%s1387 + $0x458] sm:$0xf]
        %v1837 = vld [vmem:[%s1387 + $0x45c] sm:$0xf]
        %v1838 = vld [vmem:[%s1387 + $0x460] sm:$0xf]
        %v1839 = vld [vmem:[%s1387 + $0x464] sm:$0xf]
        %v1840 = vld [vmem:[%s1387 + $0x468] sm:$0xf]
        %v1841 = vld [vmem:[%s1387 + $0x46c] sm:$0xf]
        %v1842 = vld [vmem:[%s1387 + $0x470] sm:$0xf]
        %v1843 = vld [vmem:[%s1387 + $0x474] sm:$0xf]
        %v1844 = vld [vmem:[%s1387 + $0x478] sm:$0xf]
        %v1845 = vld [vmem:[%s1387 + $0x47c] sm:$0xf]
        %v1846 = vld [vmem:[%s2] sm:$0xff]
        %v1847 = vld [vmem:[%s2 + $0x8] sm:$0xff]
        %v1848 = vld [vmem:[%s2 + $0x10] sm:$0xff]
        %v1849 = vld [vmem:[%s2 + $0x18] sm:$0xff]
        %v1850 = vld [vmem:[%s2 + $0x20] sm:$0xff]
        %v1851 = vld [vmem:[%s2 + $0x28] sm:$0xff]
        %v1852 = vld [vmem:[%s2 + $0x30] sm:$0xff]
        %v1853 = vld [vmem:[%s2 + $0x38] sm:$0xff]
        %v1854 = vld [vmem:[%s2 + $0x40] sm:$0xff]
        %v1855 = vld [vmem:[%s2 + $0x48] sm:$0xff]
        %v1856 = vld [vmem:[%s2 + $0x50] sm:$0xff]
        %v1857 = vld [vmem:[%s2 + $0x58] sm:$0xff]
        %v1858 = vld [vmem:[%s2 + $0x60] sm:$0xff]
        %v1859 = vld [vmem:[%s2 + $0x68] sm:$0xff]
        %v1860 = vld [vmem:[%s2 + $0x70] sm:$0xff]
        %v1861 = vld [vmem:[%s2 + $0x78] sm:$0xff]
        %1863 = vset.pattern.permute.xlu0 0
        %1864 = vperm.xlu0 %1863, %v1846
        %v1865 = vpop.permute.xlu0 %1864
        %1868 = vset.pattern.permute.xlu0 0
        %1869 = vperm.xlu0 %1868, %v1847
        %v1870 = vpop.permute.xlu0 %1869
        %1873 = vset.pattern.permute.xlu0 0
        %1874 = vperm.xlu0 %1873, %v1848
        %v1875 = vpop.permute.xlu0 %1874
        %1878 = vset.pattern.permute.xlu0 0
        %1879 = vperm.xlu0 %1878, %v1849
        %v1880 = vpop.permute.xlu0 %1879
        %1883 = vset.pattern.permute.xlu0 0
        %1884 = vperm.xlu0 %1883, %v1850
        %v1885 = vpop.permute.xlu0 %1884
        %1888 = vset.pattern.permute.xlu0 0
        %1889 = vperm.xlu0 %1888, %v1851
        %v1890 = vpop.permute.xlu0 %1889
        %1893 = vset.pattern.permute.xlu0 0
        %1894 = vperm.xlu0 %1893, %v1852
        %v1895 = vpop.permute.xlu0 %1894
        %1898 = vset.pattern.permute.xlu0 0
        %1899 = vperm.xlu0 %1898, %v1853
        %v1900 = vpop.permute.xlu0 %1899
        %1903 = vset.pattern.permute.xlu0 0
        %1904 = vperm.xlu0 %1903, %v1854
        %v1905 = vpop.permute.xlu0 %1904
        %1908 = vset.pattern.permute.xlu0 0
        %1909 = vperm.xlu0 %1908, %v1855
        %v1910 = vpop.permute.xlu0 %1909
        %1913 = vset.pattern.permute.xlu0 0
        %1914 = vperm.xlu0 %1913, %v1856
        %v1915 = vpop.permute.xlu0 %1914
        %1918 = vset.pattern.permute.xlu0 0
        %1919 = vperm.xlu0 %1918, %v1857
        %v1920 = vpop.permute.xlu0 %1919
        %1923 = vset.pattern.permute.xlu0 0
        %1924 = vperm.xlu0 %1923, %v1858
        %v1925 = vpop.permute.xlu0 %1924
        %1928 = vset.pattern.permute.xlu0 0
        %1929 = vperm.xlu0 %1928, %v1859
        %v1930 = vpop.permute.xlu0 %1929
        %1933 = vset.pattern.permute.xlu0 0
        %1934 = vperm.xlu0 %1933, %v1860
        %v1935 = vpop.permute.xlu0 %1934
        %1938 = vset.pattern.permute.xlu0 0
        %1939 = vperm.xlu0 %1938, %v1861
        %v1940 = vpop.permute.xlu0 %1939
        %v2086 = vunpack.c.l.b16 %v1414
        %v2087 = vunpack.c.h.b16 %v1414
        %v2088 = vunpack.c.l.b16 %v1415
        %v2089 = vunpack.c.h.b16 %v1415
        %v2090 = vunpack.c.l.b16 %v1416
        %v2091 = vunpack.c.h.b16 %v1416
        %v2092 = vunpack.c.l.b16 %v1417
        %v2093 = vunpack.c.h.b16 %v1417
        %v2094 = vunpack.c.l.b16 %v1418
        %v2095 = vunpack.c.h.b16 %v1418
        %v2096 = vunpack.c.l.b16 %v1419
        %v2097 = vunpack.c.h.b16 %v1419
        %v2098 = vunpack.c.l.b16 %v1420
        %v2099 = vunpack.c.h.b16 %v1420
        %v2100 = vunpack.c.l.b16 %v1421
        %v2101 = vunpack.c.h.b16 %v1421
        %v2102 = vunpack.c.l.b16 %v1422
        %v2103 = vunpack.c.h.b16 %v1422
        %v2104 = vunpack.c.l.b16 %v1423
        %v2105 = vunpack.c.h.b16 %v1423
        %v2106 = vunpack.c.l.b16 %v1424
        %v2107 = vunpack.c.h.b16 %v1424
        %v2108 = vunpack.c.l.b16 %v1425
        %v2109 = vunpack.c.h.b16 %v1425
        %v2110 = vunpack.c.l.b16 %v1426
        %v2111 = vunpack.c.h.b16 %v1426
        %v2112 = vunpack.c.l.b16 %v1427
        %v2113 = vunpack.c.h.b16 %v1427
        %v2114 = vunpack.c.l.b16 %v1428
        %v2115 = vunpack.c.h.b16 %v1428
        %v2116 = vunpack.c.l.b16 %v1429
        %v2117 = vunpack.c.h.b16 %v1429
        %v2118 = vunpack.c.l.b16 %v1430
        %v2119 = vunpack.c.h.b16 %v1430
        %v2120 = vunpack.c.l.b16 %v1431
        %v2121 = vunpack.c.h.b16 %v1431
        %v2122 = vunpack.c.l.b16 %v1432
        %v2123 = vunpack.c.h.b16 %v1432
        %v2124 = vunpack.c.l.b16 %v1433
        %v2125 = vunpack.c.h.b16 %v1433
        %v2126 = vunpack.c.l.b16 %v1434
        %v2127 = vunpack.c.h.b16 %v1434
        %v2128 = vunpack.c.l.b16 %v1435
        %v2129 = vunpack.c.h.b16 %v1435
        %v2130 = vunpack.c.l.b16 %v1436
        %v2131 = vunpack.c.h.b16 %v1436
        %v2132 = vunpack.c.l.b16 %v1437
        %v2133 = vunpack.c.h.b16 %v1437
        %v2134 = vunpack.c.l.b16 %v1438
        %v2135 = vunpack.c.h.b16 %v1438
        %v2136 = vunpack.c.l.b16 %v1439
        %v2137 = vunpack.c.h.b16 %v1439
        %v2138 = vunpack.c.l.b16 %v1440
        %v2139 = vunpack.c.h.b16 %v1440
        %v2140 = vunpack.c.l.b16 %v1441
        %v2141 = vunpack.c.h.b16 %v1441
        %v2142 = vunpack.c.l.b16 %v1442
        %v2143 = vunpack.c.h.b16 %v1442
        %v2144 = vunpack.c.l.b16 %v1443
        %v2145 = vunpack.c.h.b16 %v1443
        %v2146 = vunpack.c.l.b16 %v1444
        %v2147 = vunpack.c.h.b16 %v1444
        %v2148 = vunpack.c.l.b16 %v1445
        %v2149 = vunpack.c.h.b16 %v1445
        %v2150 = vunpack.c.l.b16 %v1446
        %v2151 = vunpack.c.h.b16 %v1446
        %v2152 = vunpack.c.l.b16 %v1447
        %v2153 = vunpack.c.h.b16 %v1447
        %v2154 = vunpack.c.l.b16 %v1448
        %v2155 = vunpack.c.h.b16 %v1448
        %v2156 = vunpack.c.l.b16 %v1449
        %v2157 = vunpack.c.h.b16 %v1449
        %v2158 = vunpack.c.l.b16 %v1450
        %v2159 = vunpack.c.h.b16 %v1450
        %v2160 = vunpack.c.l.b16 %v1451
        %v2161 = vunpack.c.h.b16 %v1451
        %v2162 = vunpack.c.l.b16 %v1452
        %v2163 = vunpack.c.h.b16 %v1452
        %v2164 = vunpack.c.l.b16 %v1453
        %v2165 = vunpack.c.h.b16 %v1453
        %v2166 = vunpack.c.l.b16 %v1454
        %v2167 = vunpack.c.h.b16 %v1454
        %v2168 = vunpack.c.l.b16 %v1455
        %v2169 = vunpack.c.h.b16 %v1455
        %v2170 = vunpack.c.l.b16 %v1456
        %v2171 = vunpack.c.h.b16 %v1456
        %v2172 = vunpack.c.l.b16 %v1457
        %v2173 = vunpack.c.h.b16 %v1457
        %v2174 = vunpack.c.l.b16 %v1458
        %v2175 = vunpack.c.h.b16 %v1458
        %v2176 = vunpack.c.l.b16 %v1459
        %v2177 = vunpack.c.h.b16 %v1459
        %v2178 = vunpack.c.l.b16 %v1460
        %v2179 = vunpack.c.h.b16 %v1460
        %v2180 = vunpack.c.l.b16 %v1461
        %v2181 = vunpack.c.h.b16 %v1461
        %v2182 = vunpack.c.l.b16 %v1462
        %v2183 = vunpack.c.h.b16 %v1462
        %v2184 = vunpack.c.l.b16 %v1463
        %v2185 = vunpack.c.h.b16 %v1463
        %v2186 = vunpack.c.l.b16 %v1464
        %v2187 = vunpack.c.h.b16 %v1464
        %v2188 = vunpack.c.l.b16 %v1465
        %v2189 = vunpack.c.h.b16 %v1465
        %v2190 = vunpack.c.l.b16 %v1466
        %v2191 = vunpack.c.h.b16 %v1466
        %v2192 = vunpack.c.l.b16 %v1467
        %v2193 = vunpack.c.h.b16 %v1467
        %v2194 = vunpack.c.l.b16 %v1468
        %v2195 = vunpack.c.h.b16 %v1468
        %v2196 = vunpack.c.l.b16 %v1469
        %v2197 = vunpack.c.h.b16 %v1469
        %v2198 = vunpack.c.l.b16 %v1470
        %v2199 = vunpack.c.h.b16 %v1470
        %v2200 = vunpack.c.l.b16 %v1471
        %v2201 = vunpack.c.h.b16 %v1471
        %v2202 = vunpack.c.l.b16 %v1472
        %v2203 = vunpack.c.h.b16 %v1472
        %v2204 = vunpack.c.l.b16 %v1473
        %v2205 = vunpack.c.h.b16 %v1473
        %v2206 = vunpack.c.l.b16 %v1474
        %v2207 = vunpack.c.h.b16 %v1474
        %v2208 = vunpack.c.l.b16 %v1475
        %v2209 = vunpack.c.h.b16 %v1475
        %v2210 = vunpack.c.l.b16 %v1476
        %v2211 = vunpack.c.h.b16 %v1476
        %v2212 = vunpack.c.l.b16 %v1477
        %v2213 = vunpack.c.h.b16 %v1477
        %v2214 = vunpack.c.l.b16 %v1478
        %v2215 = vunpack.c.h.b16 %v1478
        %v2216 = vunpack.c.l.b16 %v1479
        %v2217 = vunpack.c.h.b16 %v1479
        %v2218 = vunpack.c.l.b16 %v1480
        %v2219 = vunpack.c.h.b16 %v1480
        %v2220 = vunpack.c.l.b16 %v1481
        %v2221 = vunpack.c.h.b16 %v1481
        %v2222 = vunpack.c.l.b16 %v1482
        %v2223 = vunpack.c.h.b16 %v1482
        %v2224 = vunpack.c.l.b16 %v1483
        %v2225 = vunpack.c.h.b16 %v1483
        %v2226 = vunpack.c.l.b16 %v1484
        %v2227 = vunpack.c.h.b16 %v1484
        %v2228 = vunpack.c.l.b16 %v1485
        %v2229 = vunpack.c.h.b16 %v1485
        %v2230 = vunpack.c.l.b16 %v1486
        %v2231 = vunpack.c.h.b16 %v1486
        %v2232 = vunpack.c.l.b16 %v1487
        %v2233 = vunpack.c.h.b16 %v1487
        %v2234 = vunpack.c.l.b16 %v1488
        %v2235 = vunpack.c.h.b16 %v1488
        %v2236 = vunpack.c.l.b16 %v1489
        %v2237 = vunpack.c.h.b16 %v1489
        %v2238 = vunpack.c.l.b16 %v1490
        %v2239 = vunpack.c.h.b16 %v1490
        %v2240 = vunpack.c.l.b16 %v1491
        %v2241 = vunpack.c.h.b16 %v1491
        %v2242 = vunpack.c.l.b16 %v1492
        %v2243 = vunpack.c.h.b16 %v1492
        %v2244 = vunpack.c.l.b16 %v1493
        %v2245 = vunpack.c.h.b16 %v1493
        %v2246 = vunpack.c.l.b16 %v1494
        %v2247 = vunpack.c.h.b16 %v1494
        %v2248 = vunpack.c.l.b16 %v1495
        %v2249 = vunpack.c.h.b16 %v1495
        %v2250 = vunpack.c.l.b16 %v1496
        %v2251 = vunpack.c.h.b16 %v1496
        %v2252 = vunpack.c.l.b16 %v1497
        %v2253 = vunpack.c.h.b16 %v1497
        %v2254 = vunpack.c.l.b16 %v1498
        %v2255 = vunpack.c.h.b16 %v1498
        %v2256 = vunpack.c.l.b16 %v1499
        %v2257 = vunpack.c.h.b16 %v1499
        %v2258 = vunpack.c.l.b16 %v1500
        %v2259 = vunpack.c.h.b16 %v1500
        %v2260 = vunpack.c.l.b16 %v1501
        %v2261 = vunpack.c.h.b16 %v1501
        %v2262 = vunpack.c.l.b16 %v1502
        %v2263 = vunpack.c.h.b16 %v1502
        %v2264 = vunpack.c.l.b16 %v1503
        %v2265 = vunpack.c.h.b16 %v1503
        %v2266 = vunpack.c.l.b16 %v1504
        %v2267 = vunpack.c.h.b16 %v1504
        %v2268 = vunpack.c.l.b16 %v1505
        %v2269 = vunpack.c.h.b16 %v1505
        %v2270 = vunpack.c.l.b16 %v1506
        %v2271 = vunpack.c.h.b16 %v1506
        %v2272 = vunpack.c.l.b16 %v1507
        %v2273 = vunpack.c.h.b16 %v1507
        %v2274 = vunpack.c.l.b16 %v1508
        %v2275 = vunpack.c.h.b16 %v1508
        %v2276 = vunpack.c.l.b16 %v1509
        %v2277 = vunpack.c.h.b16 %v1509
        %v2278 = vunpack.c.l.b16 %v1510
        %v2279 = vunpack.c.h.b16 %v1510
        %v2280 = vunpack.c.l.b16 %v1511
        %v2281 = vunpack.c.h.b16 %v1511
        %v2282 = vunpack.c.l.b16 %v1512
        %v2283 = vunpack.c.h.b16 %v1512
        %v2284 = vunpack.c.l.b16 %v1513
        %v2285 = vunpack.c.h.b16 %v1513
        %v2286 = vunpack.c.l.b16 %v1514
        %v2287 = vunpack.c.h.b16 %v1514
        %v2288 = vunpack.c.l.b16 %v1515
        %v2289 = vunpack.c.h.b16 %v1515
        %v2290 = vunpack.c.l.b16 %v1516
        %v2291 = vunpack.c.h.b16 %v1516
        %v2292 = vunpack.c.l.b16 %v1517
        %v2293 = vunpack.c.h.b16 %v1517
        %v2294 = vunpack.c.l.b16 %v1518
        %v2295 = vunpack.c.h.b16 %v1518
        %v2296 = vunpack.c.l.b16 %v1519
        %v2297 = vunpack.c.h.b16 %v1519
        %v2298 = vunpack.c.l.b16 %v1520
        %v2299 = vunpack.c.h.b16 %v1520
        %v2300 = vunpack.c.l.b16 %v1521
        %v2301 = vunpack.c.h.b16 %v1521
        %v2302 = vunpack.c.l.b16 %v1522
        %v2303 = vunpack.c.h.b16 %v1522
        %v2304 = vunpack.c.l.b16 %v1523
        %v2305 = vunpack.c.h.b16 %v1523
        %v2306 = vunpack.c.l.b16 %v1524
        %v2307 = vunpack.c.h.b16 %v1524
        %v2308 = vunpack.c.l.b16 %v1525
        %v2309 = vunpack.c.h.b16 %v1525
        %v2310 = vunpack.c.l.b16 %v1526
        %v2311 = vunpack.c.h.b16 %v1526
        %v2312 = vunpack.c.l.b16 %v1527
        %v2313 = vunpack.c.h.b16 %v1527
        %v2314 = vunpack.c.l.b16 %v1528
        %v2315 = vunpack.c.h.b16 %v1528
        %v2316 = vunpack.c.l.b16 %v1529
        %v2317 = vunpack.c.h.b16 %v1529
        %v2318 = vunpack.c.l.b16 %v1530
        %v2319 = vunpack.c.h.b16 %v1530
        %v2320 = vunpack.c.l.b16 %v1531
        %v2321 = vunpack.c.h.b16 %v1531
        %v2322 = vunpack.c.l.b16 %v1532
        %v2323 = vunpack.c.h.b16 %v1532
        %v2324 = vunpack.c.l.b16 %v1533
        %v2325 = vunpack.c.h.b16 %v1533
        %v2326 = vunpack.c.l.b16 %v1534
        %v2327 = vunpack.c.h.b16 %v1534
        %v2328 = vunpack.c.l.b16 %v1535
        %v2329 = vunpack.c.h.b16 %v1535
        %v2330 = vunpack.c.l.b16 %v1536
        %v2331 = vunpack.c.h.b16 %v1536
        %v2332 = vunpack.c.l.b16 %v1537
        %v2333 = vunpack.c.h.b16 %v1537
        %v2334 = vunpack.c.l.b16 %v1538
        %v2335 = vunpack.c.h.b16 %v1538
        %v2336 = vunpack.c.l.b16 %v1539
        %v2337 = vunpack.c.h.b16 %v1539
        %v2338 = vunpack.c.l.b16 %v1540
        %v2339 = vunpack.c.h.b16 %v1540
        %v2340 = vunpack.c.l.b16 %v1541
        %v2341 = vunpack.c.h.b16 %v1541
        %v2342 = vunpack.c.l.b16 %v1542
        %v2343 = vunpack.c.h.b16 %v1542
        %v2344 = vunpack.c.l.b16 %v1543
        %v2345 = vunpack.c.h.b16 %v1543
        %v2346 = vunpack.c.l.b16 %v1544
        %v2347 = vunpack.c.h.b16 %v1544
        %v2348 = vunpack.c.l.b16 %v1545
        %v2349 = vunpack.c.h.b16 %v1545
        %v2350 = vunpack.c.l.b16 %v1546
        %v2351 = vunpack.c.h.b16 %v1546
        %v2352 = vunpack.c.l.b16 %v1547
        %v2353 = vunpack.c.h.b16 %v1547
        %v2354 = vunpack.c.l.b16 %v1548
        %v2355 = vunpack.c.h.b16 %v1548
        %v2356 = vunpack.c.l.b16 %v1549
        %v2357 = vunpack.c.h.b16 %v1549
        %v2358 = vunpack.c.l.b16 %v1550
        %v2359 = vunpack.c.h.b16 %v1550
        %v2360 = vunpack.c.l.b16 %v1551
        %v2361 = vunpack.c.h.b16 %v1551
        %v2362 = vunpack.c.l.b16 %v1552
        %v2363 = vunpack.c.h.b16 %v1552
        %v2364 = vunpack.c.l.b16 %v1553
        %v2365 = vunpack.c.h.b16 %v1553
        %v2366 = vunpack.c.l.b16 %v1554
        %v2367 = vunpack.c.h.b16 %v1554
        %v2368 = vunpack.c.l.b16 %v1555
        %v2369 = vunpack.c.h.b16 %v1555
        %v2370 = vunpack.c.l.b16 %v1556
        %v2371 = vunpack.c.h.b16 %v1556
        %v2372 = vunpack.c.l.b16 %v1557
        %v2373 = vunpack.c.h.b16 %v1557
        %v2374 = vpack.c.b16 %v2104, %v2086
        %v2375 = vpack.c.b16 %v2105, %v2087
        %v2376 = vpack.c.b16 %v2106, %v2088
        %v2377 = vpack.c.b16 %v2107, %v2089
        %v2378 = vpack.c.b16 %v2108, %v2090
        %v2379 = vpack.c.b16 %v2109, %v2091
        %v2380 = vpack.c.b16 %v2110, %v2092
        %v2381 = vpack.c.b16 %v2111, %v2093
        %v2382 = vpack.c.b16 %v2112, %v2094
        %v2383 = vpack.c.b16 %v2113, %v2095
        %v2384 = vpack.c.b16 %v2114, %v2096
        %v2385 = vpack.c.b16 %v2115, %v2097
        %v2386 = vpack.c.b16 %v2116, %v2098
        %v2387 = vpack.c.b16 %v2117, %v2099
        %v2388 = vpack.c.b16 %v2118, %v2100
        %v2389 = vpack.c.b16 %v2119, %v2101
        %v2390 = vpack.c.b16 %v2120, %v2102
        %v2391 = vpack.c.b16 %v2121, %v2103
        %v2392 = vpack.c.b16 %v2140, %v2122
        %v2393 = vpack.c.b16 %v2141, %v2123
        %v2394 = vpack.c.b16 %v2142, %v2124
        %v2395 = vpack.c.b16 %v2143, %v2125
        %v2396 = vpack.c.b16 %v2144, %v2126
        %v2397 = vpack.c.b16 %v2145, %v2127
        %v2398 = vpack.c.b16 %v2146, %v2128
        %v2399 = vpack.c.b16 %v2147, %v2129
        %v2400 = vpack.c.b16 %v2148, %v2130
        %v2401 = vpack.c.b16 %v2149, %v2131
        %v2402 = vpack.c.b16 %v2150, %v2132
        %v2403 = vpack.c.b16 %v2151, %v2133
        %v2404 = vpack.c.b16 %v2152, %v2134
        %v2405 = vpack.c.b16 %v2153, %v2135
        %v2406 = vpack.c.b16 %v2154, %v2136
        %v2407 = vpack.c.b16 %v2155, %v2137
        %v2408 = vpack.c.b16 %v2156, %v2138
        %v2409 = vpack.c.b16 %v2157, %v2139
        %v2410 = vpack.c.b16 %v2176, %v2158
        %v2411 = vpack.c.b16 %v2177, %v2159
        %v2412 = vpack.c.b16 %v2178, %v2160
        %v2413 = vpack.c.b16 %v2179, %v2161
        %v2414 = vpack.c.b16 %v2180, %v2162
        %v2415 = vpack.c.b16 %v2181, %v2163
        %v2416 = vpack.c.b16 %v2182, %v2164
        %v2417 = vpack.c.b16 %v2183, %v2165
        %v2418 = vpack.c.b16 %v2184, %v2166
        %v2419 = vpack.c.b16 %v2185, %v2167
        %v2420 = vpack.c.b16 %v2186, %v2168
        %v2421 = vpack.c.b16 %v2187, %v2169
        %v2422 = vpack.c.b16 %v2188, %v2170
        %v2423 = vpack.c.b16 %v2189, %v2171
        %v2424 = vpack.c.b16 %v2190, %v2172
        %v2425 = vpack.c.b16 %v2191, %v2173
        %v2426 = vpack.c.b16 %v2192, %v2174
        %v2427 = vpack.c.b16 %v2193, %v2175
        %v2428 = vpack.c.b16 %v2212, %v2194
        %v2429 = vpack.c.b16 %v2213, %v2195
        %v2430 = vpack.c.b16 %v2214, %v2196
        %v2431 = vpack.c.b16 %v2215, %v2197
        %v2432 = vpack.c.b16 %v2216, %v2198
        %v2433 = vpack.c.b16 %v2217, %v2199
        %v2434 = vpack.c.b16 %v2218, %v2200
        %v2435 = vpack.c.b16 %v2219, %v2201
        %v2436 = vpack.c.b16 %v2220, %v2202
        %v2437 = vpack.c.b16 %v2221, %v2203
        %v2438 = vpack.c.b16 %v2222, %v2204
        %v2439 = vpack.c.b16 %v2223, %v2205
        %v2440 = vpack.c.b16 %v2224, %v2206
        %v2441 = vpack.c.b16 %v2225, %v2207
        %v2442 = vpack.c.b16 %v2226, %v2208
        %v2443 = vpack.c.b16 %v2227, %v2209
        %v2444 = vpack.c.b16 %v2228, %v2210
        %v2445 = vpack.c.b16 %v2229, %v2211
        %v2446 = vpack.c.b16 %v2248, %v2230
        %v2447 = vpack.c.b16 %v2249, %v2231
        %v2448 = vpack.c.b16 %v2250, %v2232
        %v2449 = vpack.c.b16 %v2251, %v2233
        %v2450 = vpack.c.b16 %v2252, %v2234
        %v2451 = vpack.c.b16 %v2253, %v2235
        %v2452 = vpack.c.b16 %v2254, %v2236
        %v2453 = vpack.c.b16 %v2255, %v2237
        %v2454 = vpack.c.b16 %v2256, %v2238
        %v2455 = vpack.c.b16 %v2257, %v2239
        %v2456 = vpack.c.b16 %v2258, %v2240
        %v2457 = vpack.c.b16 %v2259, %v2241
        %v2458 = vpack.c.b16 %v2260, %v2242
        %v2459 = vpack.c.b16 %v2261, %v2243
        %v2460 = vpack.c.b16 %v2262, %v2244
        %v2461 = vpack.c.b16 %v2263, %v2245
        %v2462 = vpack.c.b16 %v2264, %v2246
        %v2463 = vpack.c.b16 %v2265, %v2247
        %v2464 = vpack.c.b16 %v2284, %v2266
        %v2465 = vpack.c.b16 %v2285, %v2267
        %v2466 = vpack.c.b16 %v2286, %v2268
        %v2467 = vpack.c.b16 %v2287, %v2269
        %v2468 = vpack.c.b16 %v2288, %v2270
        %v2469 = vpack.c.b16 %v2289, %v2271
        %v2470 = vpack.c.b16 %v2290, %v2272
        %v2471 = vpack.c.b16 %v2291, %v2273
        %v2472 = vpack.c.b16 %v2292, %v2274
        %v2473 = vpack.c.b16 %v2293, %v2275
        %v2474 = vpack.c.b16 %v2294, %v2276
        %v2475 = vpack.c.b16 %v2295, %v2277
        %v2476 = vpack.c.b16 %v2296, %v2278
        %v2477 = vpack.c.b16 %v2297, %v2279
        %v2478 = vpack.c.b16 %v2298, %v2280
        %v2479 = vpack.c.b16 %v2299, %v2281
        %v2480 = vpack.c.b16 %v2300, %v2282
        %v2481 = vpack.c.b16 %v2301, %v2283
        %v2482 = vpack.c.b16 %v2320, %v2302
        %v2483 = vpack.c.b16 %v2321, %v2303
        %v2484 = vpack.c.b16 %v2322, %v2304
        %v2485 = vpack.c.b16 %v2323, %v2305
        %v2486 = vpack.c.b16 %v2324, %v2306
        %v2487 = vpack.c.b16 %v2325, %v2307
        %v2488 = vpack.c.b16 %v2326, %v2308
        %v2489 = vpack.c.b16 %v2327, %v2309
        %v2490 = vpack.c.b16 %v2328, %v2310
        %v2491 = vpack.c.b16 %v2329, %v2311
        %v2492 = vpack.c.b16 %v2330, %v2312
        %v2493 = vpack.c.b16 %v2331, %v2313
        %v2494 = vpack.c.b16 %v2332, %v2314
        %v2495 = vpack.c.b16 %v2333, %v2315
        %v2496 = vpack.c.b16 %v2334, %v2316
        %v2497 = vpack.c.b16 %v2335, %v2317
        %v2498 = vpack.c.b16 %v2336, %v2318
        %v2499 = vpack.c.b16 %v2337, %v2319
        %v2500 = vpack.c.b16 %v2356, %v2338
        %v2501 = vpack.c.b16 %v2357, %v2339
        %v2502 = vpack.c.b16 %v2358, %v2340
        %v2503 = vpack.c.b16 %v2359, %v2341
        %v2504 = vpack.c.b16 %v2360, %v2342
        %v2505 = vpack.c.b16 %v2361, %v2343
        %v2506 = vpack.c.b16 %v2362, %v2344
        %v2507 = vpack.c.b16 %v2363, %v2345
        %v2508 = vpack.c.b16 %v2364, %v2346
        %v2509 = vpack.c.b16 %v2365, %v2347
        %v2510 = vpack.c.b16 %v2366, %v2348
        %v2511 = vpack.c.b16 %v2367, %v2349
        %v2512 = vpack.c.b16 %v2368, %v2350
        %v2513 = vpack.c.b16 %v2369, %v2351
        %v2514 = vpack.c.b16 %v2370, %v2352
        %v2515 = vpack.c.b16 %v2371, %v2353
        %v2516 = vpack.c.b16 %v2372, %v2354
        %v2517 = vpack.c.b16 %v2373, %v2355
        %v2950 = vunpack.c.l.b16 %v1558
        %v2951 = vunpack.c.l.b16 %v1559
        %v2952 = vunpack.c.l.b16 %v1560
        %v2953 = vunpack.c.l.b16 %v1561
        %v2954 = vunpack.c.l.b16 %v1562
        %v2955 = vunpack.c.l.b16 %v1563
        %v2956 = vunpack.c.l.b16 %v1564
        %v2957 = vunpack.c.l.b16 %v1565
        %v2958 = vunpack.c.l.b16 %v1566
        %v2959 = vunpack.c.l.b16 %v1567
        %v2960 = vunpack.c.l.b16 %v1568
        %v2961 = vunpack.c.l.b16 %v1569
        %v2962 = vunpack.c.l.b16 %v1570
        %v2963 = vunpack.c.l.b16 %v1571
        %v2964 = vunpack.c.l.b16 %v1572
        %v2965 = vunpack.c.l.b16 %v1573
        %v2966 = vunpack.c.l.b16 %v1574
        %v2967 = vunpack.c.l.b16 %v1575
        %v2968 = vunpack.c.l.b16 %v1576
        %v2969 = vunpack.c.l.b16 %v1577
        %v2970 = vunpack.c.l.b16 %v1578
        %v2971 = vunpack.c.l.b16 %v1579
        %v2972 = vunpack.c.l.b16 %v1580
        %v2973 = vunpack.c.l.b16 %v1581
        %v2974 = vunpack.c.l.b16 %v1582
        %v2975 = vunpack.c.l.b16 %v1583
        %v2976 = vunpack.c.l.b16 %v1584
        %v2977 = vunpack.c.l.b16 %v1585
        %v2978 = vunpack.c.l.b16 %v1586
        %v2979 = vunpack.c.l.b16 %v1587
        %v2980 = vunpack.c.l.b16 %v1588
        %v2981 = vunpack.c.l.b16 %v1589
        %v2982 = vunpack.c.l.b16 %v1590
        %v2983 = vunpack.c.l.b16 %v1591
        %v2984 = vunpack.c.l.b16 %v1592
        %v2985 = vunpack.c.l.b16 %v1593
        %v2986 = vunpack.c.l.b16 %v1594
        %v2987 = vunpack.c.l.b16 %v1595
        %v2988 = vunpack.c.l.b16 %v1596
        %v2989 = vunpack.c.l.b16 %v1597
        %v2990 = vunpack.c.l.b16 %v1598
        %v2991 = vunpack.c.l.b16 %v1599
        %v2992 = vunpack.c.l.b16 %v1600
        %v2993 = vunpack.c.l.b16 %v1601
        %v2994 = vunpack.c.l.b16 %v1602
        %v2995 = vunpack.c.l.b16 %v1603
        %v2996 = vunpack.c.l.b16 %v1604
        %v2997 = vunpack.c.l.b16 %v1605
        %v2998 = vunpack.c.l.b16 %v1606
        %v2999 = vunpack.c.l.b16 %v1607
        %v3000 = vunpack.c.l.b16 %v1608
        %v3001 = vunpack.c.l.b16 %v1609
        %v3002 = vunpack.c.l.b16 %v1610
        %v3003 = vunpack.c.l.b16 %v1611
        %v3004 = vunpack.c.l.b16 %v1612
        %v3005 = vunpack.c.l.b16 %v1613
        %v3006 = vunpack.c.l.b16 %v1614
        %v3007 = vunpack.c.l.b16 %v1615
        %v3008 = vunpack.c.l.b16 %v1616
        %v3009 = vunpack.c.l.b16 %v1617
        %v3010 = vunpack.c.l.b16 %v1618
        %v3011 = vunpack.c.l.b16 %v1619
        %v3012 = vunpack.c.l.b16 %v1620
        %v3013 = vunpack.c.l.b16 %v1621
        %v3014 = vunpack.c.l.b16 %v1622
        %v3015 = vunpack.c.l.b16 %v1623
        %v3016 = vunpack.c.l.b16 %v1624
        %v3017 = vunpack.c.l.b16 %v1625
        %v3018 = vunpack.c.l.b16 %v1626
        %v3019 = vunpack.c.l.b16 %v1627
        %v3020 = vunpack.c.l.b16 %v1628
        %v3021 = vunpack.c.l.b16 %v1629
        %v3022 = vunpack.c.l.b16 %v1630
        %v3023 = vunpack.c.l.b16 %v1631
        %v3024 = vunpack.c.l.b16 %v1632
        %v3025 = vunpack.c.l.b16 %v1633
        %v3026 = vunpack.c.l.b16 %v1634
        %v3027 = vunpack.c.l.b16 %v1635
        %v3028 = vunpack.c.l.b16 %v1636
        %v3029 = vunpack.c.l.b16 %v1637
        %v3030 = vunpack.c.l.b16 %v1638
        %v3031 = vunpack.c.l.b16 %v1639
        %v3032 = vunpack.c.l.b16 %v1640
        %v3033 = vunpack.c.l.b16 %v1641
        %v3034 = vunpack.c.l.b16 %v1642
        %v3035 = vunpack.c.l.b16 %v1643
        %v3036 = vunpack.c.l.b16 %v1644
        %v3037 = vunpack.c.l.b16 %v1645
        %v3038 = vunpack.c.l.b16 %v1646
        %v3039 = vunpack.c.l.b16 %v1647
        %v3040 = vunpack.c.l.b16 %v1648
        %v3041 = vunpack.c.l.b16 %v1649
        %v3042 = vunpack.c.l.b16 %v1650
        %v3043 = vunpack.c.l.b16 %v1651
        %v3044 = vunpack.c.l.b16 %v1652
        %v3045 = vunpack.c.l.b16 %v1653
        %v3046 = vunpack.c.l.b16 %v1654
        %v3047 = vunpack.c.l.b16 %v1655
        %v3048 = vunpack.c.l.b16 %v1656
        %v3049 = vunpack.c.l.b16 %v1657
        %v3050 = vunpack.c.l.b16 %v1658
        %v3051 = vunpack.c.l.b16 %v1659
        %v3052 = vunpack.c.l.b16 %v1660
        %v3053 = vunpack.c.l.b16 %v1661
        %v3054 = vunpack.c.l.b16 %v1662
        %v3055 = vunpack.c.l.b16 %v1663
        %v3056 = vunpack.c.l.b16 %v1664
        %v3057 = vunpack.c.l.b16 %v1665
        %v3058 = vunpack.c.l.b16 %v1666
        %v3059 = vunpack.c.l.b16 %v1667
        %v3060 = vunpack.c.l.b16 %v1668
        %v3061 = vunpack.c.l.b16 %v1669
        %v3062 = vunpack.c.l.b16 %v1670
        %v3063 = vunpack.c.l.b16 %v1671
        %v3064 = vunpack.c.l.b16 %v1672
        %v3065 = vunpack.c.l.b16 %v1673
        %v3066 = vunpack.c.l.b16 %v1674
        %v3067 = vunpack.c.l.b16 %v1675
        %v3068 = vunpack.c.l.b16 %v1676
        %v3069 = vunpack.c.l.b16 %v1677
        %v3070 = vunpack.c.l.b16 %v1678
        %v3071 = vunpack.c.l.b16 %v1679
        %v3072 = vunpack.c.l.b16 %v1680
        %v3073 = vunpack.c.l.b16 %v1681
        %v3074 = vunpack.c.l.b16 %v1682
        %v3075 = vunpack.c.l.b16 %v1683
        %v3076 = vunpack.c.l.b16 %v1684
        %v3077 = vunpack.c.l.b16 %v1685
        %v3078 = vunpack.c.l.b16 %v1686
        %v3079 = vunpack.c.l.b16 %v1687
        %v3080 = vunpack.c.l.b16 %v1688
        %v3081 = vunpack.c.l.b16 %v1689
        %v3082 = vunpack.c.l.b16 %v1690
        %v3083 = vunpack.c.l.b16 %v1691
        %v3084 = vunpack.c.l.b16 %v1692
        %v3085 = vunpack.c.l.b16 %v1693
        %v3086 = vunpack.c.l.b16 %v1694
        %v3087 = vunpack.c.l.b16 %v1695
        %v3088 = vunpack.c.l.b16 %v1696
        %v3089 = vunpack.c.l.b16 %v1697
        %v3090 = vunpack.c.l.b16 %v1698
        %v3091 = vunpack.c.l.b16 %v1699
        %v3092 = vunpack.c.l.b16 %v1700
        %v3093 = vunpack.c.l.b16 %v1701
        %v3094 = vunpack.c.l.b16 %v1702
        %v3095 = vunpack.c.l.b16 %v1703
        %v3096 = vunpack.c.l.b16 %v1704
        %v3097 = vunpack.c.l.b16 %v1705
        %v3098 = vunpack.c.l.b16 %v1706
        %v3099 = vunpack.c.l.b16 %v1707
        %v3100 = vunpack.c.l.b16 %v1708
        %v3101 = vunpack.c.l.b16 %v1709
        %v3102 = vunpack.c.l.b16 %v1710
        %v3103 = vunpack.c.l.b16 %v1711
        %v3104 = vunpack.c.l.b16 %v1712
        %v3105 = vunpack.c.l.b16 %v1713
        %v3106 = vunpack.c.l.b16 %v1714
        %v3107 = vunpack.c.l.b16 %v1715
        %v3108 = vunpack.c.l.b16 %v1716
        %v3109 = vunpack.c.l.b16 %v1717
        %v3110 = vunpack.c.l.b16 %v1718
        %v3111 = vunpack.c.l.b16 %v1719
        %v3112 = vunpack.c.l.b16 %v1720
        %v3113 = vunpack.c.l.b16 %v1721
        %v3114 = vunpack.c.l.b16 %v1722
        %v3115 = vunpack.c.l.b16 %v1723
        %v3116 = vunpack.c.l.b16 %v1724
        %v3117 = vunpack.c.l.b16 %v1725
        %v3118 = vunpack.c.l.b16 %v1726
        %v3119 = vunpack.c.l.b16 %v1727
        %v3120 = vunpack.c.l.b16 %v1728
        %v3121 = vunpack.c.l.b16 %v1729
        %v3122 = vunpack.c.l.b16 %v1730
        %v3123 = vunpack.c.l.b16 %v1731
        %v3124 = vunpack.c.l.b16 %v1732
        %v3125 = vunpack.c.l.b16 %v1733
        %v3126 = vunpack.c.l.b16 %v1734
        %v3127 = vunpack.c.l.b16 %v1735
        %v3128 = vunpack.c.l.b16 %v1736
        %v3129 = vunpack.c.l.b16 %v1737
        %v3130 = vunpack.c.l.b16 %v1738
        %v3131 = vunpack.c.l.b16 %v1739
        %v3132 = vunpack.c.l.b16 %v1740
        %v3133 = vunpack.c.l.b16 %v1741
        %v3134 = vunpack.c.l.b16 %v1742
        %v3135 = vunpack.c.l.b16 %v1743
        %v3136 = vunpack.c.l.b16 %v1744
        %v3137 = vunpack.c.l.b16 %v1745
        %v3138 = vunpack.c.l.b16 %v1746
        %v3139 = vunpack.c.l.b16 %v1747
        %v3140 = vunpack.c.l.b16 %v1748
        %v3141 = vunpack.c.l.b16 %v1749
        %v3142 = vunpack.c.l.b16 %v1750
        %v3143 = vunpack.c.l.b16 %v1751
        %v3144 = vunpack.c.l.b16 %v1752
        %v3145 = vunpack.c.l.b16 %v1753
        %v3146 = vunpack.c.l.b16 %v1754
        %v3147 = vunpack.c.l.b16 %v1755
        %v3148 = vunpack.c.l.b16 %v1756
        %v3149 = vunpack.c.l.b16 %v1757
        %v3150 = vunpack.c.l.b16 %v1758
        %v3151 = vunpack.c.l.b16 %v1759
        %v3152 = vunpack.c.l.b16 %v1760
        %v3153 = vunpack.c.l.b16 %v1761
        %v3154 = vunpack.c.l.b16 %v1762
        %v3155 = vunpack.c.l.b16 %v1763
        %v3156 = vunpack.c.l.b16 %v1764
        %v3157 = vunpack.c.l.b16 %v1765
        %v3158 = vunpack.c.l.b16 %v1766
        %v3159 = vunpack.c.l.b16 %v1767
        %v3160 = vunpack.c.l.b16 %v1768
        %v3161 = vunpack.c.l.b16 %v1769
        %v3162 = vunpack.c.l.b16 %v1770
        %v3163 = vunpack.c.l.b16 %v1771
        %v3164 = vunpack.c.l.b16 %v1772
        %v3165 = vunpack.c.l.b16 %v1773
        %v3166 = vunpack.c.l.b16 %v1774
        %v3167 = vunpack.c.l.b16 %v1775
        %v3168 = vunpack.c.l.b16 %v1776
        %v3169 = vunpack.c.l.b16 %v1777
        %v3170 = vunpack.c.l.b16 %v1778
        %v3171 = vunpack.c.l.b16 %v1779
        %v3172 = vunpack.c.l.b16 %v1780
        %v3173 = vunpack.c.l.b16 %v1781
        %v3174 = vunpack.c.l.b16 %v1782
        %v3175 = vunpack.c.l.b16 %v1783
        %v3176 = vunpack.c.l.b16 %v1784
        %v3177 = vunpack.c.l.b16 %v1785
        %v3178 = vunpack.c.l.b16 %v1786
        %v3179 = vunpack.c.l.b16 %v1787
        %v3180 = vunpack.c.l.b16 %v1788
        %v3181 = vunpack.c.l.b16 %v1789
        %v3182 = vunpack.c.l.b16 %v1790
        %v3183 = vunpack.c.l.b16 %v1791
        %v3184 = vunpack.c.l.b16 %v1792
        %v3185 = vunpack.c.l.b16 %v1793
        %v3186 = vunpack.c.l.b16 %v1794
        %v3187 = vunpack.c.l.b16 %v1795
        %v3188 = vunpack.c.l.b16 %v1796
        %v3189 = vunpack.c.l.b16 %v1797
        %v3190 = vunpack.c.l.b16 %v1798
        %v3191 = vunpack.c.l.b16 %v1799
        %v3192 = vunpack.c.l.b16 %v1800
        %v3193 = vunpack.c.l.b16 %v1801
        %v3194 = vunpack.c.l.b16 %v1802
        %v3195 = vunpack.c.l.b16 %v1803
        %v3196 = vunpack.c.l.b16 %v1804
        %v3197 = vunpack.c.l.b16 %v1805
        %v3198 = vunpack.c.l.b16 %v1806
        %v3199 = vunpack.c.l.b16 %v1807
        %v3200 = vunpack.c.l.b16 %v1808
        %v3201 = vunpack.c.l.b16 %v1809
        %v3202 = vunpack.c.l.b16 %v1810
        %v3203 = vunpack.c.l.b16 %v1811
        %v3204 = vunpack.c.l.b16 %v1812
        %v3205 = vunpack.c.l.b16 %v1813
        %v3206 = vunpack.c.l.b16 %v1814
        %v3207 = vunpack.c.l.b16 %v1815
        %v3208 = vunpack.c.l.b16 %v1816
        %v3209 = vunpack.c.l.b16 %v1817
        %v3210 = vunpack.c.l.b16 %v1818
        %v3211 = vunpack.c.l.b16 %v1819
        %v3212 = vunpack.c.l.b16 %v1820
        %v3213 = vunpack.c.l.b16 %v1821
        %v3214 = vunpack.c.l.b16 %v1822
        %v3215 = vunpack.c.l.b16 %v1823
        %v3216 = vunpack.c.l.b16 %v1824
        %v3217 = vunpack.c.l.b16 %v1825
        %v3218 = vunpack.c.l.b16 %v1826
        %v3219 = vunpack.c.l.b16 %v1827
        %v3220 = vunpack.c.l.b16 %v1828
        %v3221 = vunpack.c.l.b16 %v1829
        %v3222 = vunpack.c.l.b16 %v1830
        %v3223 = vunpack.c.l.b16 %v1831
        %v3224 = vunpack.c.l.b16 %v1832
        %v3225 = vunpack.c.l.b16 %v1833
        %v3226 = vunpack.c.l.b16 %v1834
        %v3227 = vunpack.c.l.b16 %v1835
        %v3228 = vunpack.c.l.b16 %v1836
        %v3229 = vunpack.c.l.b16 %v1837
        %v3230 = vunpack.c.l.b16 %v1838
        %v3231 = vunpack.c.l.b16 %v1839
        %v3232 = vunpack.c.l.b16 %v1840
        %v3233 = vunpack.c.l.b16 %v1841
        %v3234 = vunpack.c.l.b16 %v1842
        %v3235 = vunpack.c.l.b16 %v1843
        %v3236 = vunpack.c.l.b16 %v1844
        %v3237 = vunpack.c.l.b16 %v1845
        %v3238 = vpack.c.b16 %v2951, %v2950
        %v3239 = vpack.c.b16 %v2953, %v2952
        %v3240 = vpack.c.b16 %v2955, %v2954
        %v3241 = vpack.c.b16 %v2957, %v2956
        %v3242 = vpack.c.b16 %v2959, %v2958
        %v3243 = vpack.c.b16 %v2961, %v2960
        %v3244 = vpack.c.b16 %v2963, %v2962
        %v3245 = vpack.c.b16 %v2965, %v2964
        %v3246 = vpack.c.b16 %v2967, %v2966
        %v3247 = vpack.c.b16 %v2969, %v2968
        %v3248 = vpack.c.b16 %v2971, %v2970
        %v3249 = vpack.c.b16 %v2973, %v2972
        %v3250 = vpack.c.b16 %v2975, %v2974
        %v3251 = vpack.c.b16 %v2977, %v2976
        %v3252 = vpack.c.b16 %v2979, %v2978
        %v3253 = vpack.c.b16 %v2981, %v2980
        %v3254 = vpack.c.b16 %v2983, %v2982
        %v3255 = vpack.c.b16 %v2985, %v2984
        %v3256 = vpack.c.b16 %v2987, %v2986
        %v3257 = vpack.c.b16 %v2989, %v2988
        %v3258 = vpack.c.b16 %v2991, %v2990
        %v3259 = vpack.c.b16 %v2993, %v2992
        %v3260 = vpack.c.b16 %v2995, %v2994
        %v3261 = vpack.c.b16 %v2997, %v2996
        %v3262 = vpack.c.b16 %v2999, %v2998
        %v3263 = vpack.c.b16 %v3001, %v3000
        %v3264 = vpack.c.b16 %v3003, %v3002
        %v3265 = vpack.c.b16 %v3005, %v3004
        %v3266 = vpack.c.b16 %v3007, %v3006
        %v3267 = vpack.c.b16 %v3009, %v3008
        %v3268 = vpack.c.b16 %v3011, %v3010
        %v3269 = vpack.c.b16 %v3013, %v3012
        %v3270 = vpack.c.b16 %v3015, %v3014
        %v3271 = vpack.c.b16 %v3017, %v3016
        %v3272 = vpack.c.b16 %v3019, %v3018
        %v3273 = vpack.c.b16 %v3021, %v3020
        %v3274 = vpack.c.b16 %v3023, %v3022
        %v3275 = vpack.c.b16 %v3025, %v3024
        %v3276 = vpack.c.b16 %v3027, %v3026
        %v3277 = vpack.c.b16 %v3029, %v3028
        %v3278 = vpack.c.b16 %v3031, %v3030
        %v3279 = vpack.c.b16 %v3033, %v3032
        %v3280 = vpack.c.b16 %v3035, %v3034
        %v3281 = vpack.c.b16 %v3037, %v3036
        %v3282 = vpack.c.b16 %v3039, %v3038
        %v3283 = vpack.c.b16 %v3041, %v3040
        %v3284 = vpack.c.b16 %v3043, %v3042
        %v3285 = vpack.c.b16 %v3045, %v3044
        %v3286 = vpack.c.b16 %v3047, %v3046
        %v3287 = vpack.c.b16 %v3049, %v3048
        %v3288 = vpack.c.b16 %v3051, %v3050
        %v3289 = vpack.c.b16 %v3053, %v3052
        %v3290 = vpack.c.b16 %v3055, %v3054
        %v3291 = vpack.c.b16 %v3057, %v3056
        %v3292 = vpack.c.b16 %v3059, %v3058
        %v3293 = vpack.c.b16 %v3061, %v3060
        %v3294 = vpack.c.b16 %v3063, %v3062
        %v3295 = vpack.c.b16 %v3065, %v3064
        %v3296 = vpack.c.b16 %v3067, %v3066
        %v3297 = vpack.c.b16 %v3069, %v3068
        %v3298 = vpack.c.b16 %v3071, %v3070
        %v3299 = vpack.c.b16 %v3073, %v3072
        %v3300 = vpack.c.b16 %v3075, %v3074
        %v3301 = vpack.c.b16 %v3077, %v3076
        %v3302 = vpack.c.b16 %v3079, %v3078
        %v3303 = vpack.c.b16 %v3081, %v3080
        %v3304 = vpack.c.b16 %v3083, %v3082
        %v3305 = vpack.c.b16 %v3085, %v3084
        %v3306 = vpack.c.b16 %v3087, %v3086
        %v3307 = vpack.c.b16 %v3089, %v3088
        %v3308 = vpack.c.b16 %v3091, %v3090
        %v3309 = vpack.c.b16 %v3093, %v3092
        %v3310 = vpack.c.b16 %v3095, %v3094
        %v3311 = vpack.c.b16 %v3097, %v3096
        %v3312 = vpack.c.b16 %v3099, %v3098
        %v3313 = vpack.c.b16 %v3101, %v3100
        %v3314 = vpack.c.b16 %v3103, %v3102
        %v3315 = vpack.c.b16 %v3105, %v3104
        %v3316 = vpack.c.b16 %v3107, %v3106
        %v3317 = vpack.c.b16 %v3109, %v3108
        %v3318 = vpack.c.b16 %v3111, %v3110
        %v3319 = vpack.c.b16 %v3113, %v3112
        %v3320 = vpack.c.b16 %v3115, %v3114
        %v3321 = vpack.c.b16 %v3117, %v3116
        %v3322 = vpack.c.b16 %v3119, %v3118
        %v3323 = vpack.c.b16 %v3121, %v3120
        %v3324 = vpack.c.b16 %v3123, %v3122
        %v3325 = vpack.c.b16 %v3125, %v3124
        %v3326 = vpack.c.b16 %v3127, %v3126
        %v3327 = vpack.c.b16 %v3129, %v3128
        %v3328 = vpack.c.b16 %v3131, %v3130
        %v3329 = vpack.c.b16 %v3133, %v3132
        %v3330 = vpack.c.b16 %v3135, %v3134
        %v3331 = vpack.c.b16 %v3137, %v3136
        %v3332 = vpack.c.b16 %v3139, %v3138
        %v3333 = vpack.c.b16 %v3141, %v3140
        %v3334 = vpack.c.b16 %v3143, %v3142
        %v3335 = vpack.c.b16 %v3145, %v3144
        %v3336 = vpack.c.b16 %v3147, %v3146
        %v3337 = vpack.c.b16 %v3149, %v3148
        %v3338 = vpack.c.b16 %v3151, %v3150
        %v3339 = vpack.c.b16 %v3153, %v3152
        %v3340 = vpack.c.b16 %v3155, %v3154
        %v3341 = vpack.c.b16 %v3157, %v3156
        %v3342 = vpack.c.b16 %v3159, %v3158
        %v3343 = vpack.c.b16 %v3161, %v3160
        %v3344 = vpack.c.b16 %v3163, %v3162
        %v3345 = vpack.c.b16 %v3165, %v3164
        %v3346 = vpack.c.b16 %v3167, %v3166
        %v3347 = vpack.c.b16 %v3169, %v3168
        %v3348 = vpack.c.b16 %v3171, %v3170
        %v3349 = vpack.c.b16 %v3173, %v3172
        %v3350 = vpack.c.b16 %v3175, %v3174
        %v3351 = vpack.c.b16 %v3177, %v3176
        %v3352 = vpack.c.b16 %v3179, %v3178
        %v3353 = vpack.c.b16 %v3181, %v3180
        %v3354 = vpack.c.b16 %v3183, %v3182
        %v3355 = vpack.c.b16 %v3185, %v3184
        %v3356 = vpack.c.b16 %v3187, %v3186
        %v3357 = vpack.c.b16 %v3189, %v3188
        %v3358 = vpack.c.b16 %v3191, %v3190
        %v3359 = vpack.c.b16 %v3193, %v3192
        %v3360 = vpack.c.b16 %v3195, %v3194
        %v3361 = vpack.c.b16 %v3197, %v3196
        %v3362 = vpack.c.b16 %v3199, %v3198
        %v3363 = vpack.c.b16 %v3201, %v3200
        %v3364 = vpack.c.b16 %v3203, %v3202
        %v3365 = vpack.c.b16 %v3205, %v3204
        %v3366 = vpack.c.b16 %v3207, %v3206
        %v3367 = vpack.c.b16 %v3209, %v3208
        %v3368 = vpack.c.b16 %v3211, %v3210
        %v3369 = vpack.c.b16 %v3213, %v3212
        %v3370 = vpack.c.b16 %v3215, %v3214
        %v3371 = vpack.c.b16 %v3217, %v3216
        %v3372 = vpack.c.b16 %v3219, %v3218
        %v3373 = vpack.c.b16 %v3221, %v3220
        %v3374 = vpack.c.b16 %v3223, %v3222
        %v3375 = vpack.c.b16 %v3225, %v3224
        %v3376 = vpack.c.b16 %v3227, %v3226
        %v3377 = vpack.c.b16 %v3229, %v3228
        %v3378 = vpack.c.b16 %v3231, %v3230
        %v3379 = vpack.c.b16 %v3233, %v3232
        %v3380 = vpack.c.b16 %v3235, %v3234
        %v3381 = vpack.c.b16 %v3237, %v3236
        %3526 = vmatprep.subr.bf16.mxu0 0
        %3527 = vmatpush1.bf16.msra.mxu0 %v3245
        %3528 = vmatprep.subr.bf16.mxu0 0
        %3529 = vmatpush1.bf16.msra.mxu0 %v3244
        %3530 = vmatprep.subr.bf16.mxu0 0
        %3531 = vmatpush1.bf16.msra.mxu0 %v3243
        %3532 = vmatprep.subr.bf16.mxu0 0
        %3533 = vmatpush1.bf16.msra.mxu0 %v3242
        %3534 = vmatprep.subr.bf16.mxu0 0
        %3535 = vmatpush1.bf16.msra.mxu0 %v3241
        %3536 = vmatprep.subr.bf16.mxu0 0
        %3537 = vmatpush1.bf16.msra.mxu0 %v3240
        %3538 = vmatprep.subr.bf16.mxu0 0
        %3539 = vmatpush1.bf16.msra.mxu0 %v3239
        %3540 = vmatprep.subr.bf16.mxu0 0
        %3541 = vmatpush1.bf16.msra.mxu0 %v3238
        %3542 = vmatprep.subr.bf16.mxu0 0
        %3543 = vmatpush2.bf16.msra.mxu0 %v3253
        %3544 = vmatprep.subr.bf16.mxu0 0
        %3545 = vmatpush2.bf16.msra.mxu0 %v3252
        %3546 = vmatprep.subr.bf16.mxu0 0
        %3547 = vmatpush2.bf16.msra.mxu0 %v3251
        %3548 = vmatprep.subr.bf16.mxu0 0
        %3549 = vmatpush2.bf16.msra.mxu0 %v3250
        %3550 = vmatprep.subr.bf16.mxu0 0
        %3551 = vmatpush2.bf16.msra.mxu0 %v3249
        %3552 = vmatprep.subr.bf16.mxu0 0
        %3553 = vmatpush2.bf16.msra.mxu0 %v3248
        %3554 = vmatprep.subr.bf16.mxu0 0
        %3555 = vmatpush2.bf16.msra.mxu0 %v3247
        %3556 = vmatprep.subr.bf16.mxu0 0
        %3557 = vmatpush2.bf16.msra.mxu0 %v3246
        %3558 = vmatprep.mubr.bf16.mxu0 %v2375
        %3559 = vmatmul.mubr.bf16.gmra.mxu0 %v2374
        %v3560 = vpop.f32.mrf.mxu0
        %v3561 = vadd.f32 %v1865, %v3560
        %v3562 = vpop.f32.mrf.mxu0
        %v3563 = vpop.f32.mrf.mxu0
        %v3564 = vadd.f32 %v1870, %v3563
        %v3565 = vpop.f32.mrf.mxu0
        %3566 = vmatprep.mubr.bf16.mxu0 %v2393
        %3567 = vmatmul.mubr.bf16.gmra.mxu0 %v2392
        %v3568 = vpop.f32.mrf.mxu0
        %v3569 = vadd.f32 %v1875, %v3568
        %v3570 = vpop.f32.mrf.mxu0
        %v3571 = vpop.f32.mrf.mxu0
        %v3572 = vadd.f32 %v1880, %v3571
        %v3573 = vpop.f32.mrf.mxu0
        %3574 = vmatprep.mubr.bf16.mxu0 %v2411
        %3575 = vmatmul.mubr.bf16.gmra.mxu0 %v2410
        %v3576 = vpop.f32.mrf.mxu0
        %v3577 = vadd.f32 %v1885, %v3576
        %v3578 = vpop.f32.mrf.mxu0
        %v3579 = vpop.f32.mrf.mxu0
        %v3580 = vadd.f32 %v1890, %v3579
        %v3581 = vpop.f32.mrf.mxu0
        %3582 = vmatprep.mubr.bf16.mxu0 %v2429
        %3583 = vmatmul.mubr.bf16.gmra.mxu0 %v2428
        %v3584 = vpop.f32.mrf.mxu0
        %v3585 = vadd.f32 %v1895, %v3584
        %v3586 = vpop.f32.mrf.mxu0
        %v3587 = vpop.f32.mrf.mxu0
        %v3588 = vadd.f32 %v1900, %v3587
        %v3589 = vpop.f32.mrf.mxu0
        %3590 = vmatprep.mubr.bf16.mxu0 %v2447
        %3591 = vmatmul.mubr.bf16.gmra.mxu0 %v2446
        %v3592 = vpop.f32.mrf.mxu0
        %v3593 = vadd.f32 %v1905, %v3592
        %v3594 = vpop.f32.mrf.mxu0
        %v3595 = vpop.f32.mrf.mxu0
        %v3596 = vadd.f32 %v1910, %v3595
        %v3597 = vpop.f32.mrf.mxu0
        %3598 = vmatprep.mubr.bf16.mxu0 %v2465
        %3599 = vmatmul.mubr.bf16.gmra.mxu0 %v2464
        %v3600 = vpop.f32.mrf.mxu0
        %v3601 = vadd.f32 %v1915, %v3600
        %v3602 = vpop.f32.mrf.mxu0
        %v3603 = vpop.f32.mrf.mxu0
        %v3604 = vadd.f32 %v1920, %v3603
        %v3605 = vpop.f32.mrf.mxu0
        %3606 = vmatprep.mubr.bf16.mxu0 %v2483
        %3607 = vmatmul.mubr.bf16.gmra.mxu0 %v2482
        %v3608 = vpop.f32.mrf.mxu0
        %v3609 = vadd.f32 %v1925, %v3608
        %v3610 = vpop.f32.mrf.mxu0
        %v3611 = vpop.f32.mrf.mxu0
        %v3612 = vadd.f32 %v1930, %v3611
        %v3613 = vpop.f32.mrf.mxu0
        %3614 = vmatprep.mubr.bf16.mxu0 %v2501
        %3615 = vmatmul.mubr.bf16.gmra.mxu0 %v2500
        %v3616 = vpop.f32.mrf.mxu0
        %v3617 = vadd.f32 %v1935, %v3616
        %v3618 = vpop.f32.mrf.mxu0
        %v3619 = vpop.f32.mrf.mxu0
        %v3620 = vadd.f32 %v1940, %v3619
        %v3621 = vpop.f32.mrf.mxu0
        %3622 = vdwg.mxu0
        %3623 = vmatprep.subr.bf16.mxu0 0
        %3624 = vmatpush1.bf16.msra.mxu0 %v3261
        %3625 = vmatprep.subr.bf16.mxu0 0
        %3626 = vmatpush1.bf16.msra.mxu0 %v3260
        %3627 = vmatprep.subr.bf16.mxu0 0
        %3628 = vmatpush1.bf16.msra.mxu0 %v3259
        %3629 = vmatprep.subr.bf16.mxu0 0
        %3630 = vmatpush1.bf16.msra.mxu0 %v3258
        %3631 = vmatprep.subr.bf16.mxu0 0
        %3632 = vmatpush1.bf16.msra.mxu0 %v3257
        %3633 = vmatprep.subr.bf16.mxu0 0
        %3634 = vmatpush1.bf16.msra.mxu0 %v3256
        %3635 = vmatprep.subr.bf16.mxu0 0
        %3636 = vmatpush1.bf16.msra.mxu0 %v3255
        %3637 = vmatprep.subr.bf16.mxu0 0
        %3638 = vmatpush1.bf16.msra.mxu0 %v3254
        %3639 = vmatprep.subr.bf16.mxu0 0
        %3640 = vmatpush2.bf16.msra.mxu0 %v3269
        %3641 = vmatprep.subr.bf16.mxu0 0
        %3642 = vmatpush2.bf16.msra.mxu0 %v3268
        %3643 = vmatprep.subr.bf16.mxu0 0
        %3644 = vmatpush2.bf16.msra.mxu0 %v3267
        %3645 = vmatprep.subr.bf16.mxu0 0
        %3646 = vmatpush2.bf16.msra.mxu0 %v3266
        %3647 = vmatprep.subr.bf16.mxu0 0
        %3648 = vmatpush2.bf16.msra.mxu0 %v3265
        %3649 = vmatprep.subr.bf16.mxu0 0
        %3650 = vmatpush2.bf16.msra.mxu0 %v3264
        %3651 = vmatprep.subr.bf16.mxu0 0
        %3652 = vmatpush2.bf16.msra.mxu0 %v3263
        %3653 = vmatprep.subr.bf16.mxu0 0
        %3654 = vmatpush2.bf16.msra.mxu0 %v3262
        %3655 = vmatprep.mubr.bf16.mxu0 %v2377
        %3656 = vmatmul.mubr.bf16.gmra.mxu0 %v2376
        %v3657 = vpop.f32.mrf.mxu0
        %v3658 = vadd.f32 %v3561, %v3657
        %v3659 = vpop.f32.mrf.mxu0
        %v3660 = vpop.f32.mrf.mxu0
        %v3661 = vadd.f32 %v3564, %v3660
        %v3662 = vpop.f32.mrf.mxu0
        %3663 = vmatprep.mubr.bf16.mxu0 %v2395
        %3664 = vmatmul.mubr.bf16.gmra.mxu0 %v2394
        %v3665 = vpop.f32.mrf.mxu0
        %v3666 = vadd.f32 %v3569, %v3665
        %v3667 = vpop.f32.mrf.mxu0
        %v3668 = vpop.f32.mrf.mxu0
        %v3669 = vadd.f32 %v3572, %v3668
        %v3670 = vpop.f32.mrf.mxu0
        %3671 = vmatprep.mubr.bf16.mxu0 %v2413
        %3672 = vmatmul.mubr.bf16.gmra.mxu0 %v2412
        %v3673 = vpop.f32.mrf.mxu0
        %v3674 = vadd.f32 %v3577, %v3673
        %v3675 = vpop.f32.mrf.mxu0
        %v3676 = vpop.f32.mrf.mxu0
        %v3677 = vadd.f32 %v3580, %v3676
        %v3678 = vpop.f32.mrf.mxu0
        %3679 = vmatprep.mubr.bf16.mxu0 %v2431
        %3680 = vmatmul.mubr.bf16.gmra.mxu0 %v2430
        %v3681 = vpop.f32.mrf.mxu0
        %v3682 = vadd.f32 %v3585, %v3681
        %v3683 = vpop.f32.mrf.mxu0
        %v3684 = vpop.f32.mrf.mxu0
        %v3685 = vadd.f32 %v3588, %v3684
        %v3686 = vpop.f32.mrf.mxu0
        %3687 = vmatprep.mubr.bf16.mxu0 %v2449
        %3688 = vmatmul.mubr.bf16.gmra.mxu0 %v2448
        %v3689 = vpop.f32.mrf.mxu0
        %v3690 = vadd.f32 %v3593, %v3689
        %v3691 = vpop.f32.mrf.mxu0
        %v3692 = vpop.f32.mrf.mxu0
        %v3693 = vadd.f32 %v3596, %v3692
        %v3694 = vpop.f32.mrf.mxu0
        %3695 = vmatprep.mubr.bf16.mxu0 %v2467
        %3696 = vmatmul.mubr.bf16.gmra.mxu0 %v2466
        %v3697 = vpop.f32.mrf.mxu0
        %v3698 = vadd.f32 %v3601, %v3697
        %v3699 = vpop.f32.mrf.mxu0
        %v3700 = vpop.f32.mrf.mxu0
        %v3701 = vadd.f32 %v3604, %v3700
        %v3702 = vpop.f32.mrf.mxu0
        %3703 = vmatprep.mubr.bf16.mxu0 %v2485
        %3704 = vmatmul.mubr.bf16.gmra.mxu0 %v2484
        %v3705 = vpop.f32.mrf.mxu0
        %v3706 = vadd.f32 %v3609, %v3705
        %v3707 = vpop.f32.mrf.mxu0
        %v3708 = vpop.f32.mrf.mxu0
        %v3709 = vadd.f32 %v3612, %v3708
        %v3710 = vpop.f32.mrf.mxu0
        %3711 = vmatprep.mubr.bf16.mxu0 %v2503
        %3712 = vmatmul.mubr.bf16.gmra.mxu0 %v2502
        %v3713 = vpop.f32.mrf.mxu0
        %v3714 = vadd.f32 %v3617, %v3713
        %v3715 = vpop.f32.mrf.mxu0
        %v3716 = vpop.f32.mrf.mxu0
        %v3717 = vadd.f32 %v3620, %v3716
        %v3718 = vpop.f32.mrf.mxu0
        %3719 = vdwg.mxu0
        %3720 = vmatprep.subr.bf16.mxu0 0
        %3721 = vmatpush1.bf16.msra.mxu0 %v3277
        %3722 = vmatprep.subr.bf16.mxu0 0
        %3723 = vmatpush1.bf16.msra.mxu0 %v3276
        %3724 = vmatprep.subr.bf16.mxu0 0
        %3725 = vmatpush1.bf16.msra.mxu0 %v3275
        %3726 = vmatprep.subr.bf16.mxu0 0
        %3727 = vmatpush1.bf16.msra.mxu0 %v3274
        %3728 = vmatprep.subr.bf16.mxu0 0
        %3729 = vmatpush1.bf16.msra.mxu0 %v3273
        %3730 = vmatprep.subr.bf16.mxu0 0
        %3731 = vmatpush1.bf16.msra.mxu0 %v3272
        %3732 = vmatprep.subr.bf16.mxu0 0
        %3733 = vmatpush1.bf16.msra.mxu0 %v3271
        %3734 = vmatprep.subr.bf16.mxu0 0
        %3735 = vmatpush1.bf16.msra.mxu0 %v3270
        %3736 = vmatprep.subr.bf16.mxu0 0
        %3737 = vmatpush2.bf16.msra.mxu0 %v3285
        %3738 = vmatprep.subr.bf16.mxu0 0
        %3739 = vmatpush2.bf16.msra.mxu0 %v3284
        %3740 = vmatprep.subr.bf16.mxu0 0
        %3741 = vmatpush2.bf16.msra.mxu0 %v3283
        %3742 = vmatprep.subr.bf16.mxu0 0
        %3743 = vmatpush2.bf16.msra.mxu0 %v3282
        %3744 = vmatprep.subr.bf16.mxu0 0
        %3745 = vmatpush2.bf16.msra.mxu0 %v3281
        %3746 = vmatprep.subr.bf16.mxu0 0
        %3747 = vmatpush2.bf16.msra.mxu0 %v3280
        %3748 = vmatprep.subr.bf16.mxu0 0
        %3749 = vmatpush2.bf16.msra.mxu0 %v3279
        %3750 = vmatprep.subr.bf16.mxu0 0
        %3751 = vmatpush2.bf16.msra.mxu0 %v3278
        %3752 = vmatprep.mubr.bf16.mxu0 %v2379
        %3753 = vmatmul.mubr.bf16.gmra.mxu0 %v2378
        %v3754 = vpop.f32.mrf.mxu0
        %v3755 = vadd.f32 %v3658, %v3754
        %v3756 = vpop.f32.mrf.mxu0
        %v3757 = vpop.f32.mrf.mxu0
        %v3758 = vadd.f32 %v3661, %v3757
        %v3759 = vpop.f32.mrf.mxu0
        %3760 = vmatprep.mubr.bf16.mxu0 %v2397
        %3761 = vmatmul.mubr.bf16.gmra.mxu0 %v2396
        %v3762 = vpop.f32.mrf.mxu0
        %v3763 = vadd.f32 %v3666, %v3762
        %v3764 = vpop.f32.mrf.mxu0
        %v3765 = vpop.f32.mrf.mxu0
        %v3766 = vadd.f32 %v3669, %v3765
        %v3767 = vpop.f32.mrf.mxu0
        %3768 = vmatprep.mubr.bf16.mxu0 %v2415
        %3769 = vmatmul.mubr.bf16.gmra.mxu0 %v2414
        %v3770 = vpop.f32.mrf.mxu0
        %v3771 = vadd.f32 %v3674, %v3770
        %v3772 = vpop.f32.mrf.mxu0
        %v3773 = vpop.f32.mrf.mxu0
        %v3774 = vadd.f32 %v3677, %v3773
        %v3775 = vpop.f32.mrf.mxu0
        %3776 = vmatprep.mubr.bf16.mxu0 %v2433
        %3777 = vmatmul.mubr.bf16.gmra.mxu0 %v2432
        %v3778 = vpop.f32.mrf.mxu0
        %v3779 = vadd.f32 %v3682, %v3778
        %v3780 = vpop.f32.mrf.mxu0
        %v3781 = vpop.f32.mrf.mxu0
        %v3782 = vadd.f32 %v3685, %v3781
        %v3783 = vpop.f32.mrf.mxu0
        %3784 = vmatprep.mubr.bf16.mxu0 %v2451
        %3785 = vmatmul.mubr.bf16.gmra.mxu0 %v2450
        %v3786 = vpop.f32.mrf.mxu0
        %v3787 = vadd.f32 %v3690, %v3786
        %v3788 = vpop.f32.mrf.mxu0
        %v3789 = vpop.f32.mrf.mxu0
        %v3790 = vadd.f32 %v3693, %v3789
        %v3791 = vpop.f32.mrf.mxu0
        %3792 = vmatprep.mubr.bf16.mxu0 %v2469
        %3793 = vmatmul.mubr.bf16.gmra.mxu0 %v2468
        %v3794 = vpop.f32.mrf.mxu0
        %v3795 = vadd.f32 %v3698, %v3794
        %v3796 = vpop.f32.mrf.mxu0
        %v3797 = vpop.f32.mrf.mxu0
        %v3798 = vadd.f32 %v3701, %v3797
        %v3799 = vpop.f32.mrf.mxu0
        %3800 = vmatprep.mubr.bf16.mxu0 %v2487
        %3801 = vmatmul.mubr.bf16.gmra.mxu0 %v2486
        %v3802 = vpop.f32.mrf.mxu0
        %v3803 = vadd.f32 %v3706, %v3802
        %v3804 = vpop.f32.mrf.mxu0
        %v3805 = vpop.f32.mrf.mxu0
        %v3806 = vadd.f32 %v3709, %v3805
        %v3807 = vpop.f32.mrf.mxu0
        %3808 = vmatprep.mubr.bf16.mxu0 %v2505
        %3809 = vmatmul.mubr.bf16.gmra.mxu0 %v2504
        %v3810 = vpop.f32.mrf.mxu0
        %v3811 = vadd.f32 %v3714, %v3810
        %v3812 = vpop.f32.mrf.mxu0
        %v3813 = vpop.f32.mrf.mxu0
        %v3814 = vadd.f32 %v3717, %v3813
        %v3815 = vpop.f32.mrf.mxu0
        %3816 = vdwg.mxu0
        %3817 = vmatprep.subr.bf16.mxu0 0
        %3818 = vmatpush1.bf16.msra.mxu0 %v3293
        %3819 = vmatprep.subr.bf16.mxu0 0
        %3820 = vmatpush1.bf16.msra.mxu0 %v3292
        %3821 = vmatprep.subr.bf16.mxu0 0
        %3822 = vmatpush1.bf16.msra.mxu0 %v3291
        %3823 = vmatprep.subr.bf16.mxu0 0
        %3824 = vmatpush1.bf16.msra.mxu0 %v3290
        %3825 = vmatprep.subr.bf16.mxu0 0
        %3826 = vmatpush1.bf16.msra.mxu0 %v3289
        %3827 = vmatprep.subr.bf16.mxu0 0
        %3828 = vmatpush1.bf16.msra.mxu0 %v3288
        %3829 = vmatprep.subr.bf16.mxu0 0
        %3830 = vmatpush1.bf16.msra.mxu0 %v3287
        %3831 = vmatprep.subr.bf16.mxu0 0
        %3832 = vmatpush1.bf16.msra.mxu0 %v3286
        %3833 = vmatprep.subr.bf16.mxu0 0
        %3834 = vmatpush2.bf16.msra.mxu0 %v3301
        %3835 = vmatprep.subr.bf16.mxu0 0
        %3836 = vmatpush2.bf16.msra.mxu0 %v3300
        %3837 = vmatprep.subr.bf16.mxu0 0
        %3838 = vmatpush2.bf16.msra.mxu0 %v3299
        %3839 = vmatprep.subr.bf16.mxu0 0
        %3840 = vmatpush2.bf16.msra.mxu0 %v3298
        %3841 = vmatprep.subr.bf16.mxu0 0
        %3842 = vmatpush2.bf16.msra.mxu0 %v3297
        %3843 = vmatprep.subr.bf16.mxu0 0
        %3844 = vmatpush2.bf16.msra.mxu0 %v3296
        %3845 = vmatprep.subr.bf16.mxu0 0
        %3846 = vmatpush2.bf16.msra.mxu0 %v3295
        %3847 = vmatprep.subr.bf16.mxu0 0
        %3848 = vmatpush2.bf16.msra.mxu0 %v3294
        %3849 = vmatprep.mubr.bf16.mxu0 %v2381
        %3850 = vmatmul.mubr.bf16.gmra.mxu0 %v2380
        %v3851 = vpop.f32.mrf.mxu0
        %v3852 = vadd.f32 %v3755, %v3851
        %v3853 = vpop.f32.mrf.mxu0
        %v3854 = vpop.f32.mrf.mxu0
        %v3855 = vadd.f32 %v3758, %v3854
        %v3856 = vpop.f32.mrf.mxu0
        %3857 = vmatprep.mubr.bf16.mxu0 %v2399
        %3858 = vmatmul.mubr.bf16.gmra.mxu0 %v2398
        %v3859 = vpop.f32.mrf.mxu0
        %v3860 = vadd.f32 %v3763, %v3859
        %v3861 = vpop.f32.mrf.mxu0
        %v3862 = vpop.f32.mrf.mxu0
        %v3863 = vadd.f32 %v3766, %v3862
        %v3864 = vpop.f32.mrf.mxu0
        %3865 = vmatprep.mubr.bf16.mxu0 %v2417
        %3866 = vmatmul.mubr.bf16.gmra.mxu0 %v2416
        %v3867 = vpop.f32.mrf.mxu0
        %v3868 = vadd.f32 %v3771, %v3867
        %v3869 = vpop.f32.mrf.mxu0
        %v3870 = vpop.f32.mrf.mxu0
        %v3871 = vadd.f32 %v3774, %v3870
        %v3872 = vpop.f32.mrf.mxu0
        %3873 = vmatprep.mubr.bf16.mxu0 %v2435
        %3874 = vmatmul.mubr.bf16.gmra.mxu0 %v2434
        %v3875 = vpop.f32.mrf.mxu0
        %v3876 = vadd.f32 %v3779, %v3875
        %v3877 = vpop.f32.mrf.mxu0
        %v3878 = vpop.f32.mrf.mxu0
        %v3879 = vadd.f32 %v3782, %v3878
        %v3880 = vpop.f32.mrf.mxu0
        %3881 = vmatprep.mubr.bf16.mxu0 %v2453
        %3882 = vmatmul.mubr.bf16.gmra.mxu0 %v2452
        %v3883 = vpop.f32.mrf.mxu0
        %v3884 = vadd.f32 %v3787, %v3883
        %v3885 = vpop.f32.mrf.mxu0
        %v3886 = vpop.f32.mrf.mxu0
        %v3887 = vadd.f32 %v3790, %v3886
        %v3888 = vpop.f32.mrf.mxu0
        %3889 = vmatprep.mubr.bf16.mxu0 %v2471
        %3890 = vmatmul.mubr.bf16.gmra.mxu0 %v2470
        %v3891 = vpop.f32.mrf.mxu0
        %v3892 = vadd.f32 %v3795, %v3891
        %v3893 = vpop.f32.mrf.mxu0
        %v3894 = vpop.f32.mrf.mxu0
        %v3895 = vadd.f32 %v3798, %v3894
        %v3896 = vpop.f32.mrf.mxu0
        %3897 = vmatprep.mubr.bf16.mxu0 %v2489
        %3898 = vmatmul.mubr.bf16.gmra.mxu0 %v2488
        %v3899 = vpop.f32.mrf.mxu0
        %v3900 = vadd.f32 %v3803, %v3899
        %v3901 = vpop.f32.mrf.mxu0
        %v3902 = vpop.f32.mrf.mxu0
        %v3903 = vadd.f32 %v3806, %v3902
        %v3904 = vpop.f32.mrf.mxu0
        %3905 = vmatprep.mubr.bf16.mxu0 %v2507
        %3906 = vmatmul.mubr.bf16.gmra.mxu0 %v2506
        %v3907 = vpop.f32.mrf.mxu0
        %v3908 = vadd.f32 %v3811, %v3907
        %v3909 = vpop.f32.mrf.mxu0
        %v3910 = vpop.f32.mrf.mxu0
        %v3911 = vadd.f32 %v3814, %v3910
        %v3912 = vpop.f32.mrf.mxu0
        %3913 = vdwg.mxu0
        %3914 = vmatprep.subr.bf16.mxu0 0
        %3915 = vmatpush1.bf16.msra.mxu0 %v3309
        %3916 = vmatprep.subr.bf16.mxu0 0
        %3917 = vmatpush1.bf16.msra.mxu0 %v3308
        %3918 = vmatprep.subr.bf16.mxu0 0
        %3919 = vmatpush1.bf16.msra.mxu0 %v3307
        %3920 = vmatprep.subr.bf16.mxu0 0
        %3921 = vmatpush1.bf16.msra.mxu0 %v3306
        %3922 = vmatprep.subr.bf16.mxu0 0
        %3923 = vmatpush1.bf16.msra.mxu0 %v3305
        %3924 = vmatprep.subr.bf16.mxu0 0
        %3925 = vmatpush1.bf16.msra.mxu0 %v3304
        %3926 = vmatprep.subr.bf16.mxu0 0
        %3927 = vmatpush1.bf16.msra.mxu0 %v3303
        %3928 = vmatprep.subr.bf16.mxu0 0
        %3929 = vmatpush1.bf16.msra.mxu0 %v3302
        %3930 = vmatprep.subr.bf16.mxu0 0
        %3931 = vmatpush2.bf16.msra.mxu0 %v3317
        %3932 = vmatprep.subr.bf16.mxu0 0
        %3933 = vmatpush2.bf16.msra.mxu0 %v3316
        %3934 = vmatprep.subr.bf16.mxu0 0
        %3935 = vmatpush2.bf16.msra.mxu0 %v3315
        %3936 = vmatprep.subr.bf16.mxu0 0
        %3937 = vmatpush2.bf16.msra.mxu0 %v3314
        %3938 = vmatprep.subr.bf16.mxu0 0
        %3939 = vmatpush2.bf16.msra.mxu0 %v3313
        %3940 = vmatprep.subr.bf16.mxu0 0
        %3941 = vmatpush2.bf16.msra.mxu0 %v3312
        %3942 = vmatprep.subr.bf16.mxu0 0
        %3943 = vmatpush2.bf16.msra.mxu0 %v3311
        %3944 = vmatprep.subr.bf16.mxu0 0
        %3945 = vmatpush2.bf16.msra.mxu0 %v3310
        %3946 = vmatprep.mubr.bf16.mxu0 %v2383
        %3947 = vmatmul.mubr.bf16.gmra.mxu0 %v2382
        %v3948 = vpop.f32.mrf.mxu0
        %v3949 = vadd.f32 %v3852, %v3948
        %v3950 = vpop.f32.mrf.mxu0
        %v3951 = vpop.f32.mrf.mxu0
        %v3952 = vadd.f32 %v3855, %v3951
        %v3953 = vpop.f32.mrf.mxu0
        %3954 = vmatprep.mubr.bf16.mxu0 %v2401
        %3955 = vmatmul.mubr.bf16.gmra.mxu0 %v2400
        %v3956 = vpop.f32.mrf.mxu0
        %v3957 = vadd.f32 %v3860, %v3956
        %v3958 = vpop.f32.mrf.mxu0
        %v3959 = vpop.f32.mrf.mxu0
        %v3960 = vadd.f32 %v3863, %v3959
        %v3961 = vpop.f32.mrf.mxu0
        %3962 = vmatprep.mubr.bf16.mxu0 %v2419
        %3963 = vmatmul.mubr.bf16.gmra.mxu0 %v2418
        %v3964 = vpop.f32.mrf.mxu0
        %v3965 = vadd.f32 %v3868, %v3964
        %v3966 = vpop.f32.mrf.mxu0
        %v3967 = vpop.f32.mrf.mxu0
        %v3968 = vadd.f32 %v3871, %v3967
        %v3969 = vpop.f32.mrf.mxu0
        %3970 = vmatprep.mubr.bf16.mxu0 %v2437
        %3971 = vmatmul.mubr.bf16.gmra.mxu0 %v2436
        %v3972 = vpop.f32.mrf.mxu0
        %v3973 = vadd.f32 %v3876, %v3972
        %v3974 = vpop.f32.mrf.mxu0
        %v3975 = vpop.f32.mrf.mxu0
        %v3976 = vadd.f32 %v3879, %v3975
        %v3977 = vpop.f32.mrf.mxu0
        %3978 = vmatprep.mubr.bf16.mxu0 %v2455
        %3979 = vmatmul.mubr.bf16.gmra.mxu0 %v2454
        %v3980 = vpop.f32.mrf.mxu0
        %v3981 = vadd.f32 %v3884, %v3980
        %v3982 = vpop.f32.mrf.mxu0
        %v3983 = vpop.f32.mrf.mxu0
        %v3984 = vadd.f32 %v3887, %v3983
        %v3985 = vpop.f32.mrf.mxu0
        %3986 = vmatprep.mubr.bf16.mxu0 %v2473
        %3987 = vmatmul.mubr.bf16.gmra.mxu0 %v2472
        %v3988 = vpop.f32.mrf.mxu0
        %v3989 = vadd.f32 %v3892, %v3988
        %v3990 = vpop.f32.mrf.mxu0
        %v3991 = vpop.f32.mrf.mxu0
        %v3992 = vadd.f32 %v3895, %v3991
        %v3993 = vpop.f32.mrf.mxu0
        %3994 = vmatprep.mubr.bf16.mxu0 %v2491
        %3995 = vmatmul.mubr.bf16.gmra.mxu0 %v2490
        %v3996 = vpop.f32.mrf.mxu0
        %v3997 = vadd.f32 %v3900, %v3996
        %v3998 = vpop.f32.mrf.mxu0
        %v3999 = vpop.f32.mrf.mxu0
        %v4000 = vadd.f32 %v3903, %v3999
        %v4001 = vpop.f32.mrf.mxu0
        %4002 = vmatprep.mubr.bf16.mxu0 %v2509
        %4003 = vmatmul.mubr.bf16.gmra.mxu0 %v2508
        %v4004 = vpop.f32.mrf.mxu0
        %v4005 = vadd.f32 %v3908, %v4004
        %v4006 = vpop.f32.mrf.mxu0
        %v4007 = vpop.f32.mrf.mxu0
        %v4008 = vadd.f32 %v3911, %v4007
        %v4009 = vpop.f32.mrf.mxu0
        %4010 = vdwg.mxu0
        %4011 = vmatprep.subr.bf16.mxu0 0
        %4012 = vmatpush1.bf16.msra.mxu0 %v3325
        %4013 = vmatprep.subr.bf16.mxu0 0
        %4014 = vmatpush1.bf16.msra.mxu0 %v3324
        %4015 = vmatprep.subr.bf16.mxu0 0
        %4016 = vmatpush1.bf16.msra.mxu0 %v3323
        %4017 = vmatprep.subr.bf16.mxu0 0
        %4018 = vmatpush1.bf16.msra.mxu0 %v3322
        %4019 = vmatprep.subr.bf16.mxu0 0
        %4020 = vmatpush1.bf16.msra.mxu0 %v3321
        %4021 = vmatprep.subr.bf16.mxu0 0
        %4022 = vmatpush1.bf16.msra.mxu0 %v3320
        %4023 = vmatprep.subr.bf16.mxu0 0
        %4024 = vmatpush1.bf16.msra.mxu0 %v3319
        %4025 = vmatprep.subr.bf16.mxu0 0
        %4026 = vmatpush1.bf16.msra.mxu0 %v3318
        %4027 = vmatprep.subr.bf16.mxu0 0
        %4028 = vmatpush2.bf16.msra.mxu0 %v3333
        %4029 = vmatprep.subr.bf16.mxu0 0
        %4030 = vmatpush2.bf16.msra.mxu0 %v3332
        %4031 = vmatprep.subr.bf16.mxu0 0
        %4032 = vmatpush2.bf16.msra.mxu0 %v3331
        %4033 = vmatprep.subr.bf16.mxu0 0
        %4034 = vmatpush2.bf16.msra.mxu0 %v3330
        %4035 = vmatprep.subr.bf16.mxu0 0
        %4036 = vmatpush2.bf16.msra.mxu0 %v3329
        %4037 = vmatprep.subr.bf16.mxu0 0
        %4038 = vmatpush2.bf16.msra.mxu0 %v3328
        %4039 = vmatprep.subr.bf16.mxu0 0
        %4040 = vmatpush2.bf16.msra.mxu0 %v3327
        %4041 = vmatprep.subr.bf16.mxu0 0
        %4042 = vmatpush2.bf16.msra.mxu0 %v3326
        %4043 = vmatprep.mubr.bf16.mxu0 %v2385
        %4044 = vmatmul.mubr.bf16.gmra.mxu0 %v2384
        %v4045 = vpop.f32.mrf.mxu0
        %v4046 = vadd.f32 %v3949, %v4045
        %v4047 = vpop.f32.mrf.mxu0
        %v4048 = vpop.f32.mrf.mxu0
        %v4049 = vadd.f32 %v3952, %v4048
        %v4050 = vpop.f32.mrf.mxu0
        %4051 = vmatprep.mubr.bf16.mxu0 %v2403
        %4052 = vmatmul.mubr.bf16.gmra.mxu0 %v2402
        %v4053 = vpop.f32.mrf.mxu0
        %v4054 = vadd.f32 %v3957, %v4053
        %v4055 = vpop.f32.mrf.mxu0
        %v4056 = vpop.f32.mrf.mxu0
        %v4057 = vadd.f32 %v3960, %v4056
        %v4058 = vpop.f32.mrf.mxu0
        %4059 = vmatprep.mubr.bf16.mxu0 %v2421
        %4060 = vmatmul.mubr.bf16.gmra.mxu0 %v2420
        %v4061 = vpop.f32.mrf.mxu0
        %v4062 = vadd.f32 %v3965, %v4061
        %v4063 = vpop.f32.mrf.mxu0
        %v4064 = vpop.f32.mrf.mxu0
        %v4065 = vadd.f32 %v3968, %v4064
        %v4066 = vpop.f32.mrf.mxu0
        %4067 = vmatprep.mubr.bf16.mxu0 %v2439
        %4068 = vmatmul.mubr.bf16.gmra.mxu0 %v2438
        %v4069 = vpop.f32.mrf.mxu0
        %v4070 = vadd.f32 %v3973, %v4069
        %v4071 = vpop.f32.mrf.mxu0
        %v4072 = vpop.f32.mrf.mxu0
        %v4073 = vadd.f32 %v3976, %v4072
        %v4074 = vpop.f32.mrf.mxu0
        %4075 = vmatprep.mubr.bf16.mxu0 %v2457
        %4076 = vmatmul.mubr.bf16.gmra.mxu0 %v2456
        %v4077 = vpop.f32.mrf.mxu0
        %v4078 = vadd.f32 %v3981, %v4077
        %v4079 = vpop.f32.mrf.mxu0
        %v4080 = vpop.f32.mrf.mxu0
        %v4081 = vadd.f32 %v3984, %v4080
        %v4082 = vpop.f32.mrf.mxu0
        %4083 = vmatprep.mubr.bf16.mxu0 %v2475
        %4084 = vmatmul.mubr.bf16.gmra.mxu0 %v2474
        %v4085 = vpop.f32.mrf.mxu0
        %v4086 = vadd.f32 %v3989, %v4085
        %v4087 = vpop.f32.mrf.mxu0
        %v4088 = vpop.f32.mrf.mxu0
        %v4089 = vadd.f32 %v3992, %v4088
        %v4090 = vpop.f32.mrf.mxu0
        %4091 = vmatprep.mubr.bf16.mxu0 %v2493
        %4092 = vmatmul.mubr.bf16.gmra.mxu0 %v2492
        %v4093 = vpop.f32.mrf.mxu0
        %v4094 = vadd.f32 %v3997, %v4093
        %v4095 = vpop.f32.mrf.mxu0
        %v4096 = vpop.f32.mrf.mxu0
        %v4097 = vadd.f32 %v4000, %v4096
        %v4098 = vpop.f32.mrf.mxu0
        %4099 = vmatprep.mubr.bf16.mxu0 %v2511
        %4100 = vmatmul.mubr.bf16.gmra.mxu0 %v2510
        %v4101 = vpop.f32.mrf.mxu0
        %v4102 = vadd.f32 %v4005, %v4101
        %v4103 = vpop.f32.mrf.mxu0
        %v4104 = vpop.f32.mrf.mxu0
        %v4105 = vadd.f32 %v4008, %v4104
        %v4106 = vpop.f32.mrf.mxu0
        %4107 = vdwg.mxu0
        %4108 = vmatprep.subr.bf16.mxu0 0
        %4109 = vmatpush1.bf16.msra.mxu0 %v3341
        %4110 = vmatprep.subr.bf16.mxu0 0
        %4111 = vmatpush1.bf16.msra.mxu0 %v3340
        %4112 = vmatprep.subr.bf16.mxu0 0
        %4113 = vmatpush1.bf16.msra.mxu0 %v3339
        %4114 = vmatprep.subr.bf16.mxu0 0
        %4115 = vmatpush1.bf16.msra.mxu0 %v3338
        %4116 = vmatprep.subr.bf16.mxu0 0
        %4117 = vmatpush1.bf16.msra.mxu0 %v3337
        %4118 = vmatprep.subr.bf16.mxu0 0
        %4119 = vmatpush1.bf16.msra.mxu0 %v3336
        %4120 = vmatprep.subr.bf16.mxu0 0
        %4121 = vmatpush1.bf16.msra.mxu0 %v3335
        %4122 = vmatprep.subr.bf16.mxu0 0
        %4123 = vmatpush1.bf16.msra.mxu0 %v3334
        %4124 = vmatprep.subr.bf16.mxu0 0
        %4125 = vmatpush2.bf16.msra.mxu0 %v3349
        %4126 = vmatprep.subr.bf16.mxu0 0
        %4127 = vmatpush2.bf16.msra.mxu0 %v3348
        %4128 = vmatprep.subr.bf16.mxu0 0
        %4129 = vmatpush2.bf16.msra.mxu0 %v3347
        %4130 = vmatprep.subr.bf16.mxu0 0
        %4131 = vmatpush2.bf16.msra.mxu0 %v3346
        %4132 = vmatprep.subr.bf16.mxu0 0
        %4133 = vmatpush2.bf16.msra.mxu0 %v3345
        %4134 = vmatprep.subr.bf16.mxu0 0
        %4135 = vmatpush2.bf16.msra.mxu0 %v3344
        %4136 = vmatprep.subr.bf16.mxu0 0
        %4137 = vmatpush2.bf16.msra.mxu0 %v3343
        %4138 = vmatprep.subr.bf16.mxu0 0
        %4139 = vmatpush2.bf16.msra.mxu0 %v3342
        %4140 = vmatprep.mubr.bf16.mxu0 %v2387
        %4141 = vmatmul.mubr.bf16.gmra.mxu0 %v2386
        %v4142 = vpop.f32.mrf.mxu0
        %v4143 = vadd.f32 %v4046, %v4142
        %v4144 = vpop.f32.mrf.mxu0
        %v4145 = vpop.f32.mrf.mxu0
        %v4146 = vadd.f32 %v4049, %v4145
        %v4147 = vpop.f32.mrf.mxu0
        %4148 = vmatprep.mubr.bf16.mxu0 %v2405
        %4149 = vmatmul.mubr.bf16.gmra.mxu0 %v2404
        %v4150 = vpop.f32.mrf.mxu0
        %v4151 = vadd.f32 %v4054, %v4150
        %v4152 = vpop.f32.mrf.mxu0
        %v4153 = vpop.f32.mrf.mxu0
        %v4154 = vadd.f32 %v4057, %v4153
        %v4155 = vpop.f32.mrf.mxu0
        %4156 = vmatprep.mubr.bf16.mxu0 %v2423
        %4157 = vmatmul.mubr.bf16.gmra.mxu0 %v2422
        %v4158 = vpop.f32.mrf.mxu0
        %v4159 = vadd.f32 %v4062, %v4158
        %v4160 = vpop.f32.mrf.mxu0
        %v4161 = vpop.f32.mrf.mxu0
        %v4162 = vadd.f32 %v4065, %v4161
        %v4163 = vpop.f32.mrf.mxu0
        %4164 = vmatprep.mubr.bf16.mxu0 %v2441
        %4165 = vmatmul.mubr.bf16.gmra.mxu0 %v2440
        %v4166 = vpop.f32.mrf.mxu0
        %v4167 = vadd.f32 %v4070, %v4166
        %v4168 = vpop.f32.mrf.mxu0
        %v4169 = vpop.f32.mrf.mxu0
        %v4170 = vadd.f32 %v4073, %v4169
        %v4171 = vpop.f32.mrf.mxu0
        %4172 = vmatprep.mubr.bf16.mxu0 %v2459
        %4173 = vmatmul.mubr.bf16.gmra.mxu0 %v2458
        %v4174 = vpop.f32.mrf.mxu0
        %v4175 = vadd.f32 %v4078, %v4174
        %v4176 = vpop.f32.mrf.mxu0
        %v4177 = vpop.f32.mrf.mxu0
        %v4178 = vadd.f32 %v4081, %v4177
        %v4179 = vpop.f32.mrf.mxu0
        %4180 = vmatprep.mubr.bf16.mxu0 %v2477
        %4181 = vmatmul.mubr.bf16.gmra.mxu0 %v2476
        %v4182 = vpop.f32.mrf.mxu0
        %v4183 = vadd.f32 %v4086, %v4182
        %v4184 = vpop.f32.mrf.mxu0
        %v4185 = vpop.f32.mrf.mxu0
        %v4186 = vadd.f32 %v4089, %v4185
        %v4187 = vpop.f32.mrf.mxu0
        %4188 = vmatprep.mubr.bf16.mxu0 %v2495
        %4189 = vmatmul.mubr.bf16.gmra.mxu0 %v2494
        %v4190 = vpop.f32.mrf.mxu0
        %v4191 = vadd.f32 %v4094, %v4190
        %v4192 = vpop.f32.mrf.mxu0
        %v4193 = vpop.f32.mrf.mxu0
        %v4194 = vadd.f32 %v4097, %v4193
        %v4195 = vpop.f32.mrf.mxu0
        %4196 = vmatprep.mubr.bf16.mxu0 %v2513
        %4197 = vmatmul.mubr.bf16.gmra.mxu0 %v2512
        %v4198 = vpop.f32.mrf.mxu0
        %v4199 = vadd.f32 %v4102, %v4198
        %v4200 = vpop.f32.mrf.mxu0
        %v4201 = vpop.f32.mrf.mxu0
        %v4202 = vadd.f32 %v4105, %v4201
        %v4203 = vpop.f32.mrf.mxu0
        %4204 = vdwg.mxu0
        %4205 = vmatprep.subr.bf16.mxu0 0
        %4206 = vmatpush1.bf16.msra.mxu0 %v3357
        %4207 = vmatprep.subr.bf16.mxu0 0
        %4208 = vmatpush1.bf16.msra.mxu0 %v3356
        %4209 = vmatprep.subr.bf16.mxu0 0
        %4210 = vmatpush1.bf16.msra.mxu0 %v3355
        %4211 = vmatprep.subr.bf16.mxu0 0
        %4212 = vmatpush1.bf16.msra.mxu0 %v3354
        %4213 = vmatprep.subr.bf16.mxu0 0
        %4214 = vmatpush1.bf16.msra.mxu0 %v3353
        %4215 = vmatprep.subr.bf16.mxu0 0
        %4216 = vmatpush1.bf16.msra.mxu0 %v3352
        %4217 = vmatprep.subr.bf16.mxu0 0
        %4218 = vmatpush1.bf16.msra.mxu0 %v3351
        %4219 = vmatprep.subr.bf16.mxu0 0
        %4220 = vmatpush1.bf16.msra.mxu0 %v3350
        %4221 = vmatprep.subr.bf16.mxu0 0
        %4222 = vmatpush2.bf16.msra.mxu0 %v3365
        %4223 = vmatprep.subr.bf16.mxu0 0
        %4224 = vmatpush2.bf16.msra.mxu0 %v3364
        %4225 = vmatprep.subr.bf16.mxu0 0
        %4226 = vmatpush2.bf16.msra.mxu0 %v3363
        %4227 = vmatprep.subr.bf16.mxu0 0
        %4228 = vmatpush2.bf16.msra.mxu0 %v3362
        %4229 = vmatprep.subr.bf16.mxu0 0
        %4230 = vmatpush2.bf16.msra.mxu0 %v3361
        %4231 = vmatprep.subr.bf16.mxu0 0
        %4232 = vmatpush2.bf16.msra.mxu0 %v3360
        %4233 = vmatprep.subr.bf16.mxu0 0
        %4234 = vmatpush2.bf16.msra.mxu0 %v3359
        %4235 = vmatprep.subr.bf16.mxu0 0
        %4236 = vmatpush2.bf16.msra.mxu0 %v3358
        %4237 = vmatprep.mubr.bf16.mxu0 %v2389
        %4238 = vmatmul.mubr.bf16.gmra.mxu0 %v2388
        %v4239 = vpop.f32.mrf.mxu0
        %v4240 = vadd.f32 %v4143, %v4239
        %v4241 = vpop.f32.mrf.mxu0
        %v4242 = vpop.f32.mrf.mxu0
        %v4243 = vadd.f32 %v4146, %v4242
        %v4244 = vpop.f32.mrf.mxu0
        %4245 = vmatprep.mubr.bf16.mxu0 %v2407
        %4246 = vmatmul.mubr.bf16.gmra.mxu0 %v2406
        %v4247 = vpop.f32.mrf.mxu0
        %v4248 = vadd.f32 %v4151, %v4247
        %v4249 = vpop.f32.mrf.mxu0
        %v4250 = vpop.f32.mrf.mxu0
        %v4251 = vadd.f32 %v4154, %v4250
        %v4252 = vpop.f32.mrf.mxu0
        %4253 = vmatprep.mubr.bf16.mxu0 %v2425
        %4254 = vmatmul.mubr.bf16.gmra.mxu0 %v2424
        %v4255 = vpop.f32.mrf.mxu0
        %v4256 = vadd.f32 %v4159, %v4255
        %v4257 = vpop.f32.mrf.mxu0
        %v4258 = vpop.f32.mrf.mxu0
        %v4259 = vadd.f32 %v4162, %v4258
        %v4260 = vpop.f32.mrf.mxu0
        %4261 = vmatprep.mubr.bf16.mxu0 %v2443
        %4262 = vmatmul.mubr.bf16.gmra.mxu0 %v2442
        %v4263 = vpop.f32.mrf.mxu0
        %v4264 = vadd.f32 %v4167, %v4263
        %v4265 = vpop.f32.mrf.mxu0
        %v4266 = vpop.f32.mrf.mxu0
        %v4267 = vadd.f32 %v4170, %v4266
        %v4268 = vpop.f32.mrf.mxu0
        %4269 = vmatprep.mubr.bf16.mxu0 %v2461
        %4270 = vmatmul.mubr.bf16.gmra.mxu0 %v2460
        %v4271 = vpop.f32.mrf.mxu0
        %v4272 = vadd.f32 %v4175, %v4271
        %v4273 = vpop.f32.mrf.mxu0
        %v4274 = vpop.f32.mrf.mxu0
        %v4275 = vadd.f32 %v4178, %v4274
        %v4276 = vpop.f32.mrf.mxu0
        %4277 = vmatprep.mubr.bf16.mxu0 %v2479
        %4278 = vmatmul.mubr.bf16.gmra.mxu0 %v2478
        %v4279 = vpop.f32.mrf.mxu0
        %v4280 = vadd.f32 %v4183, %v4279
        %v4281 = vpop.f32.mrf.mxu0
        %v4282 = vpop.f32.mrf.mxu0
        %v4283 = vadd.f32 %v4186, %v4282
        %v4284 = vpop.f32.mrf.mxu0
        %4285 = vmatprep.mubr.bf16.mxu0 %v2497
        %4286 = vmatmul.mubr.bf16.gmra.mxu0 %v2496
        %v4287 = vpop.f32.mrf.mxu0
        %v4288 = vadd.f32 %v4191, %v4287
        %v4289 = vpop.f32.mrf.mxu0
        %v4290 = vpop.f32.mrf.mxu0
        %v4291 = vadd.f32 %v4194, %v4290
        %v4292 = vpop.f32.mrf.mxu0
        %4293 = vmatprep.mubr.bf16.mxu0 %v2515
        %4294 = vmatmul.mubr.bf16.gmra.mxu0 %v2514
        %v4295 = vpop.f32.mrf.mxu0
        %v4296 = vadd.f32 %v4199, %v4295
        %v4297 = vpop.f32.mrf.mxu0
        %v4298 = vpop.f32.mrf.mxu0
        %v4299 = vadd.f32 %v4202, %v4298
        %v4300 = vpop.f32.mrf.mxu0
        %4301 = vdwg.mxu0
        %4302 = vmatprep.subr.bf16.mxu0 0
        %4303 = vmatpush1.bf16.msra.mxu0 %v3373
        %4304 = vmatprep.subr.bf16.mxu0 0
        %4305 = vmatpush1.bf16.msra.mxu0 %v3372
        %4306 = vmatprep.subr.bf16.mxu0 0
        %4307 = vmatpush1.bf16.msra.mxu0 %v3371
        %4308 = vmatprep.subr.bf16.mxu0 0
        %4309 = vmatpush1.bf16.msra.mxu0 %v3370
        %4310 = vmatprep.subr.bf16.mxu0 0
        %4311 = vmatpush1.bf16.msra.mxu0 %v3369
        %4312 = vmatprep.subr.bf16.mxu0 0
        %4313 = vmatpush1.bf16.msra.mxu0 %v3368
        %4314 = vmatprep.subr.bf16.mxu0 0
        %4315 = vmatpush1.bf16.msra.mxu0 %v3367
        %4316 = vmatprep.subr.bf16.mxu0 0
        %4317 = vmatpush1.bf16.msra.mxu0 %v3366
        %4318 = vmatprep.subr.bf16.mxu0 0
        %4319 = vmatpush2.bf16.msra.mxu0 %v3381
        %4320 = vmatprep.subr.bf16.mxu0 0
        %4321 = vmatpush2.bf16.msra.mxu0 %v3380
        %4322 = vmatprep.subr.bf16.mxu0 0
        %4323 = vmatpush2.bf16.msra.mxu0 %v3379
        %4324 = vmatprep.subr.bf16.mxu0 0
        %4325 = vmatpush2.bf16.msra.mxu0 %v3378
        %4326 = vmatprep.subr.bf16.mxu0 0
        %4327 = vmatpush2.bf16.msra.mxu0 %v3377
        %4328 = vmatprep.subr.bf16.mxu0 0
        %4329 = vmatpush2.bf16.msra.mxu0 %v3376
        %4330 = vmatprep.subr.bf16.mxu0 0
        %4331 = vmatpush2.bf16.msra.mxu0 %v3375
        %4332 = vmatprep.subr.bf16.mxu0 0
        %4333 = vmatpush2.bf16.msra.mxu0 %v3374
        %4334 = vmatprep.mubr.bf16.mxu0 %v2391
        %4335 = vmatmul.mubr.bf16.gmra.mxu0 %v2390
        %v4336 = vpop.f32.mrf.mxu0
        %v4337 = vadd.f32 %v4240, %v4336
        %v4338 = vpop.f32.mrf.mxu0
        %v4339 = vpop.f32.mrf.mxu0
        %v4340 = vadd.f32 %v4243, %v4339
        %v4341 = vpop.f32.mrf.mxu0
        %4342 = vmatprep.mubr.bf16.mxu0 %v2409
        %4343 = vmatmul.mubr.bf16.gmra.mxu0 %v2408
        %v4344 = vpop.f32.mrf.mxu0
        %v4345 = vadd.f32 %v4248, %v4344
        %v4346 = vpop.f32.mrf.mxu0
        %v4347 = vpop.f32.mrf.mxu0
        %v4348 = vadd.f32 %v4251, %v4347
        %v4349 = vpop.f32.mrf.mxu0
        %4350 = vmatprep.mubr.bf16.mxu0 %v2427
        %4351 = vmatmul.mubr.bf16.gmra.mxu0 %v2426
        %v4352 = vpop.f32.mrf.mxu0
        %v4353 = vadd.f32 %v4256, %v4352
        %v4354 = vpop.f32.mrf.mxu0
        %v4355 = vpop.f32.mrf.mxu0
        %v4356 = vadd.f32 %v4259, %v4355
        %v4357 = vpop.f32.mrf.mxu0
        %4358 = vmatprep.mubr.bf16.mxu0 %v2445
        %4359 = vmatmul.mubr.bf16.gmra.mxu0 %v2444
        %v4360 = vpop.f32.mrf.mxu0
        %v4361 = vadd.f32 %v4264, %v4360
        %v4362 = vpop.f32.mrf.mxu0
        %v4363 = vpop.f32.mrf.mxu0
        %v4364 = vadd.f32 %v4267, %v4363
        %v4365 = vpop.f32.mrf.mxu0
        %4366 = vmatprep.mubr.bf16.mxu0 %v2463
        %4367 = vmatmul.mubr.bf16.gmra.mxu0 %v2462
        %v4368 = vpop.f32.mrf.mxu0
        %v4369 = vadd.f32 %v4272, %v4368
        %v4370 = vpop.f32.mrf.mxu0
        %v4371 = vpop.f32.mrf.mxu0
        %v4372 = vadd.f32 %v4275, %v4371
        %v4373 = vpop.f32.mrf.mxu0
        %4374 = vmatprep.mubr.bf16.mxu0 %v2481
        %4375 = vmatmul.mubr.bf16.gmra.mxu0 %v2480
        %v4376 = vpop.f32.mrf.mxu0
        %v4377 = vadd.f32 %v4280, %v4376
        %v4378 = vpop.f32.mrf.mxu0
        %v4379 = vpop.f32.mrf.mxu0
        %v4380 = vadd.f32 %v4283, %v4379
        %v4381 = vpop.f32.mrf.mxu0
        %4382 = vmatprep.mubr.bf16.mxu0 %v2499
        %4383 = vmatmul.mubr.bf16.gmra.mxu0 %v2498
        %v4384 = vpop.f32.mrf.mxu0
        %v4385 = vadd.f32 %v4288, %v4384
        %v4386 = vpop.f32.mrf.mxu0
        %v4387 = vpop.f32.mrf.mxu0
        %v4388 = vadd.f32 %v4291, %v4387
        %v4389 = vpop.f32.mrf.mxu0
        %4390 = vmatprep.mubr.bf16.mxu0 %v2517
        %4391 = vmatmul.mubr.bf16.gmra.mxu0 %v2516
        %v4392 = vpop.f32.mrf.mxu0
        %v4393 = vadd.f32 %v4296, %v4392
        %v4394 = vpop.f32.mrf.mxu0
        %v4395 = vpop.f32.mrf.mxu0
        %v4396 = vadd.f32 %v4299, %v4395
        %v4397 = vpop.f32.mrf.mxu0
        %4398 = vdwg.mxu0
        %v4399 = vmax.f32 %v4337, 0.0
        %v4400 = vmax.f32 %v4340, 0.0
        %v4401 = vmax.f32 %v4345, 0.0
        %v4402 = vmax.f32 %v4348, 0.0
        %v4403 = vmax.f32 %v4353, 0.0
        %v4404 = vmax.f32 %v4356, 0.0
        %v4405 = vmax.f32 %v4361, 0.0
        %v4406 = vmax.f32 %v4364, 0.0
        %v4407 = vmax.f32 %v4369, 0.0
        %v4408 = vmax.f32 %v4372, 0.0
        %v4409 = vmax.f32 %v4377, 0.0
        %v4410 = vmax.f32 %v4380, 0.0
        %v4411 = vmax.f32 %v4385, 0.0
        %v4412 = vmax.f32 %v4388, 0.0
        %v4413 = vmax.f32 %v4393, 0.0
        %v4414 = vmax.f32 %v4396, 0.0
        %v4415 = vld [vmem:[%s3] sm:$0xff]
        %v4416 = vld [vmem:[%s3 + $0x8] sm:$0xff]
        %v4417 = vld [vmem:[%s3 + $0x10] sm:$0xff]
        %v4418 = vld [vmem:[%s3 + $0x18] sm:$0xff]
        %v4419 = vld [vmem:[%s3 + $0x20] sm:$0xff]
        %v4420 = vld [vmem:[%s3 + $0x28] sm:$0xff]
        %v4421 = vld [vmem:[%s3 + $0x30] sm:$0xff]
        %v4422 = vld [vmem:[%s3 + $0x38] sm:$0xff]
        %v4423 = vld [vmem:[%s3 + $0x40] sm:$0xff]
        %v4424 = vld [vmem:[%s3 + $0x48] sm:$0xff]
        %v4425 = vld [vmem:[%s3 + $0x50] sm:$0xff]
        %v4426 = vld [vmem:[%s3 + $0x58] sm:$0xff]
        %v4427 = vld [vmem:[%s3 + $0x60] sm:$0xff]
        %v4428 = vld [vmem:[%s3 + $0x68] sm:$0xff]
        %v4429 = vld [vmem:[%s3 + $0x70] sm:$0xff]
        %v4430 = vld [vmem:[%s3 + $0x78] sm:$0xff]
        %4432 = vset.pattern.permute.xlu0 0
        %4433 = vperm.xlu0 %4432, %v4415
        %v4434 = vpop.permute.xlu0 %4433
        %4437 = vset.pattern.permute.xlu0 0
        %4438 = vperm.xlu0 %4437, %v4416
        %v4439 = vpop.permute.xlu0 %4438
        %4442 = vset.pattern.permute.xlu0 0
        %4443 = vperm.xlu0 %4442, %v4417
        %v4444 = vpop.permute.xlu0 %4443
        %4447 = vset.pattern.permute.xlu0 0
        %4448 = vperm.xlu0 %4447, %v4418
        %v4449 = vpop.permute.xlu0 %4448
        %4452 = vset.pattern.permute.xlu0 0
        %4453 = vperm.xlu0 %4452, %v4419
        %v4454 = vpop.permute.xlu0 %4453
        %4457 = vset.pattern.permute.xlu0 0
        %4458 = vperm.xlu0 %4457, %v4420
        %v4459 = vpop.permute.xlu0 %4458
        %4462 = vset.pattern.permute.xlu0 0
        %4463 = vperm.xlu0 %4462, %v4421
        %v4464 = vpop.permute.xlu0 %4463
        %4467 = vset.pattern.permute.xlu0 0
        %4468 = vperm.xlu0 %4467, %v4422
        %v4469 = vpop.permute.xlu0 %4468
        %4472 = vset.pattern.permute.xlu0 0
        %4473 = vperm.xlu0 %4472, %v4423
        %v4474 = vpop.permute.xlu0 %4473
        %4477 = vset.pattern.permute.xlu0 0
        %4478 = vperm.xlu0 %4477, %v4424
        %v4479 = vpop.permute.xlu0 %4478
        %4482 = vset.pattern.permute.xlu0 0
        %4483 = vperm.xlu0 %4482, %v4425
        %v4484 = vpop.permute.xlu0 %4483
        %4487 = vset.pattern.permute.xlu0 0
        %4488 = vperm.xlu0 %4487, %v4426
        %v4489 = vpop.permute.xlu0 %4488
        %4492 = vset.pattern.permute.xlu0 0
        %4493 = vperm.xlu0 %4492, %v4427
        %v4494 = vpop.permute.xlu0 %4493
        %4497 = vset.pattern.permute.xlu0 0
        %4498 = vperm.xlu0 %4497, %v4428
        %v4499 = vpop.permute.xlu0 %4498
        %4502 = vset.pattern.permute.xlu0 0
        %4503 = vperm.xlu0 %4502, %v4429
        %v4504 = vpop.permute.xlu0 %4503
        %4507 = vset.pattern.permute.xlu0 0
        %4508 = vperm.xlu0 %4507, %v4430
        %v4509 = vpop.permute.xlu0 %4508
        %v4511 = vmul.f32 %v4399, %v4434
        %v4512 = vmul.f32 %v4400, %v4439
        %v4513 = vmul.f32 %v4401, %v4444
        %v4514 = vmul.f32 %v4402, %v4449
        %v4515 = vmul.f32 %v4403, %v4454
        %v4516 = vmul.f32 %v4404, %v4459
        %v4517 = vmul.f32 %v4405, %v4464
        %v4518 = vmul.f32 %v4406, %v4469
        %v4519 = vmul.f32 %v4407, %v4474
        %v4520 = vmul.f32 %v4408, %v4479
        %v4521 = vmul.f32 %v4409, %v4484
        %v4522 = vmul.f32 %v4410, %v4489
        %v4523 = vmul.f32 %v4411, %v4494
        %v4524 = vmul.f32 %v4412, %v4499
        %v4525 = vmul.f32 %v4413, %v4504
        %v4526 = vmul.f32 %v4414, %v4509
        %v4527 = vadd.f32 %v4511, %v4512
        %v4528 = vadd.f32 %v4527, %v4513
        %v4529 = vadd.f32 %v4528, %v4514
        %v4530 = vadd.f32 %v4529, %v4515
        %v4531 = vadd.f32 %v4530, %v4516
        %v4532 = vadd.f32 %v4531, %v4517
        %v4533 = vadd.f32 %v4532, %v4518
        %v4534 = vadd.f32 %v4533, %v4519
        %v4535 = vadd.f32 %v4534, %v4520
        %v4536 = vadd.f32 %v4535, %v4521
        %v4537 = vadd.f32 %v4536, %v4522
        %v4538 = vadd.f32 %v4537, %v4523
        %v4539 = vadd.f32 %v4538, %v4524
        %v4540 = vadd.f32 %v4539, %v4525
        %v4541 = vadd.f32 %v4540, %v4526
        %v4542 = vrot.slane %v4541, 4
        %v4543 = vadd.f32 %v4541, %v4542
        %v4544 = vrot.slane %v4543, 2
        %v4545 = vadd.f32 %v4543, %v4544
        %v4546 = vrot.slane %v4545, 1
        %v4547 = vadd.f32 %v4545, %v4546
        %s4548 = sld [smem:[#allocation2]]
        %v4549 = vstv %s4548
        %v4550 = vadd.f32 %v4547, %v4549
        %4551 = vst [vmem:[%s1412] sm:$0x1] %v4550
        %p4552 = scmp.lt.s32.totalorder %s17, 3
        %s4553 = scalar_select %p4552, %s17, 3
        %s4554 = scalar_lea.vmem %s5, %s4553
        // Predicated region
        $region82: #{edge_decoder_pallas.1} parent=76 // pred_check
          %p4555 = pneg %p145
        $region83: #{edge_decoder_pallas.1} parent=76 // pred_check_branch
          %4557 = sbr.rel (%p4555) target = $region85
        $region84: #{edge_decoder_pallas.1} parent=76 // pred_region
          _
        $region85: #{edge_decoder_pallas.1} parent=76 // pred_fallthru
          _
      $region77: #{edge_decoder_pallas.1} parent=5 // pred_fallthru
        _
      %p4558 = scmp.le.s32.totalorder 2, %s12
      // Predicated region
      $region86: #{edge_decoder_pallas.1} parent=5 // pred_check
        %p4559 = pneg %p4558
      $region87: #{edge_decoder_pallas.1} parent=5 // pred_check_branch
        %4561 = sbr.rel (%p4559) target = $region89
      $region88: #{edge_decoder_pallas.1} parent=5 // pred_region
        %s4562 = ssub.s32 %s12, 2
        // Predicated region
        $region90: #{edge_decoder_pallas.1} parent=88 // pred_check
          %p4563 = pneg %p151
        $region91: #{edge_decoder_pallas.1} parent=88 // pred_check_branch
          %4565 = sbr.rel (%p4563) target = $region93
        $region92: #{edge_decoder_pallas.1} parent=88 // pred_region
          %p4566 = scmp.lt.s32.totalorder %s18, 3
          %s4567 = scalar_select %p4566, %s18, 3
          %s4568 = scalar_lea.vmem %s5, %s4567
        $region93: #{edge_decoder_pallas.1} parent=88 // pred_fallthru
          _
      $region89: #{edge_decoder_pallas.1} parent=5 // pred_fallthru
        _
    $region6: #{edge_decoder_pallas.1} parent=1 // loop_footer
      %s16 = sadd.s32 1, %s12
    $region7: #{edge_decoder_pallas.1} parent=1 // loop_footer_branch
      %11 = sbr.rel target = $region3
    $region8: #{edge_decoder_pallas.1} parent=1 // loop_exit
      _

</llo_original>
